<compile_context>
chip_gen: v6e
topology: v6e:2x2x1
jax: 0.10.0
libtpu: 0.0.40
codegen_flags: <defaults>
</compile_context>

<pallas_src>
import functools

import jax
import jax.numpy as jnp
from jax import lax
from jax.experimental import pallas as pl
from jax.experimental.pallas import tpu as pltpu
import numpy as np


# ----------------------------------------------------------------------------
# Conv + ReLU + MaxPool(2) kernel: one fused im2col matmul per layer
# ----------------------------------------------------------------------------
def conv_pool_kernel(p_ref, w_ref, b_ref, o_ref):
    # p_ref: (4*M, Kp)  rows ordered pool-window-position major, M = B*P
    # w_ref: (Kp, Cout) (zero-padded rows beyond the true K contribute 0)
    # b_ref: (1, Cout)
    # o_ref: (M, Cout)
    y = jnp.dot(p_ref[...], w_ref[...], preferred_element_type=jnp.float32)
    m = o_ref.shape[0]
    # 2x2 max-pool = elementwise max over the 4 pool-position row blocks.
    pooled = jnp.maximum(jnp.maximum(y[0:m], y[m:2 * m]),
                         jnp.maximum(y[2 * m:3 * m], y[3 * m:4 * m]))
    # max-pool commutes with the per-channel bias add and the monotone ReLU.
    o_ref[...] = jnp.maximum(pooled + b_ref[...], 0.0)


def _pool_patches(x_nhwc, k_pad):
    """(B, H, W, Cin) -> (4*B*(H//2)*(W//2), Kp), pool-window-position major."""
    B, H, W, Cin = x_nhwc.shape
    K = 9 * Cin
    xp = jnp.pad(x_nhwc, ((0, 0), (1, 1), (1, 1), (0, 0)))
    shifts = [xp[:, kh:kh + H, kw:kw + W, :] for kh in range(3) for kw in range(3)]
    patches = jnp.concatenate(shifts, axis=-1)            # (B, H, W, 9*Cin)
    p = patches.reshape(B, H // 2, 2, W // 2, 2, K)
    p = p.transpose(2, 4, 0, 1, 3, 5)                      # (2,2,B,H//2,W//2,K)
    p = p.reshape(4 * B * (H // 2) * (W // 2), K)
    if k_pad > K:                                          # lane-dense contraction
        p = jnp.pad(p, ((0, 0), (0, k_pad - K)))
    return p


def conv_relu_pool(x_nhwc, w_hwio, b):
    B, H, W, Cin = x_nhwc.shape
    Cout = w_hwio.shape[-1]
    K = 9 * Cin
    Kp = ((K + 127) // 128) * 128
    P = (H // 2) * (W // 2)
    M = B * P                                              # batch folded into M
    patches = _pool_patches(x_nhwc, Kp)                    # (4*M, Kp)
    w2 = jnp.pad(w_hwio.reshape(K, Cout), ((0, Kp - K), (0, 0)))
    b2 = b.reshape(1, Cout)
    out = pl.pallas_call(
        conv_pool_kernel,
        out_shape=jax.ShapeDtypeStruct((M, Cout), jnp.float32),
        grid=(1,),
        in_specs=[
            pl.BlockSpec((4 * M, Kp), lambda i: (0, 0)),
            pl.BlockSpec((Kp, Cout), lambda i: (0, 0)),
            pl.BlockSpec((1, Cout), lambda i: (0, 0)),
        ],
        out_specs=pl.BlockSpec((M, Cout), lambda i: (0, 0)),
        compiler_params=pltpu.CompilerParams(dimension_semantics=("arbitrary",)),
    )(patches, w2, b2)
    return out.reshape(B, H // 2, W // 2, Cout)


# ----------------------------------------------------------------------------
# Fused 2-layer LSTM + (global avg pool + fc + ReLU) head kernel
# ----------------------------------------------------------------------------
def lstm_head_kernel(xc0_ref, whh0_ref, wih1_ref, whh1_ref, b1_ref,
                     cf_ref, wc_ref, wl_ref, bfc_ref, o_ref):
    # xc0_ref: (T, B, 4H)  precomputed x*W_ih0 + b0 (layer-0 input contribution)
    # whh0/wih1/whh1: (H, 4H) gate-stacked (i, f, g, o along lanes)
    # b1_ref: (1, 4H); cf_ref: (B, S, C) last conv features
    # wc_ref: (C, 7); wl_ref: (H, 7); bfc_ref: (1, 7); o_ref: (B, 7)
    T, B, G = xc0_ref.shape
    Hn = G // 4
    whh0 = whh0_ref[...]
    wih1 = wih1_ref[...]
    whh1 = whh1_ref[...]
    b1 = b1_ref[...]

    def gates(pre):
        s = jax.nn.sigmoid(pre)                 # one lane-dense (B, 4H) EUP pass
        i = s[:, 0:Hn]
        f = s[:, Hn:2 * Hn]
        o = s[:, 3 * Hn:4 * Hn]
        g = jnp.tanh(pre[:, 2 * Hn:3 * Hn])
        return i, f, g, o

    def step(t, carry):
        h1, c1, h2, c2 = carry
        # layer 0: input contribution (incl. bias) was hoisted out of the loop
        pre0 = xc0_ref[t] + jnp.dot(h1, whh0, preferred_element_type=jnp.float32)
        i, f, g, o = gates(pre0)
        c1 = f * c1 + i * g
        h1 = o * jnp.tanh(c1)
        # layer 1
        pre1 = (jnp.dot(h1, wih1, preferred_element_type=jnp.float32)
                + jnp.dot(h2, whh1, preferred_element_type=jnp.float32) + b1)
        i, f, g, o = gates(pre1)
        c2 = f * c2 + i * g
        h2 = o * jnp.tanh(c2)
        return h1, c1, h2, c2

    z = jnp.zeros((B, Hn), jnp.float32)
    _, _, h2, _ = lax.fori_loop(0, T, step, (z, z, z, z), unroll=True)

    # head: AdaptiveAvgPool2d(1) + Linear(64 + H -> 7) + ReLU
    feat = jnp.mean(cf_ref[...], axis=1)                  # (B, C)
    y = jnp.dot(feat, wc_ref[...], preferred_element_type=jnp.float32)
    y = y + jnp.dot(h2, wl_ref[...], preferred_element_type=jnp.float32)
    o_ref[...] = jnp.maximum(y + bfc_ref[...], 0.0)


def lstm_head(sales_seq, conv_feat_bsc, lstm_params, fc_wc, fc_wl, fc_b, hidden):
    B, T = sales_seq.shape
    S, C = conv_feat_bsc.shape[1], conv_feat_bsc.shape[2]
    wih0, whh0, b0, wih1, whh1, b1 = lstm_params
    G = 4 * hidden
    # layer-0 input contribution hoisted out of the serial recurrence
    wih0_flat = wih0.reshape(G)                           # (4,1,H) -> (4H,)
    b0_flat = b0.reshape(G)
    x_tb = sales_seq.astype(jnp.float32).T                # (T, B)
    xc0_all = x_tb[:, :, None] * wih0_flat[None, None, :] + b0_flat[None, None, :]
    # stack gate weights along the lane axis: (4,H,H) -> (H, 4H)
    whh0s = whh0.transpose(1, 0, 2).reshape(hidden, G)
    wih1s = wih1.transpose(1, 0, 2).reshape(hidden, G)
    whh1s = whh1.transpose(1, 0, 2).reshape(hidden, G)
    b1s = b1.reshape(1, G)
    return pl.pallas_call(
        lstm_head_kernel,
        out_shape=jax.ShapeDtypeStruct((B, 7), jnp.float32),
        grid=(1,),
        in_specs=[
            pl.BlockSpec((T, B, G), lambda i: (0, 0, 0)),
            pl.BlockSpec((hidden, G), lambda i: (0, 0)),
            pl.BlockSpec((hidden, G), lambda i: (0, 0)),
            pl.BlockSpec((hidden, G), lambda i: (0, 0)),
            pl.BlockSpec((1, G), lambda i: (0, 0)),
            pl.BlockSpec((B, S, C), lambda i: (0, 0, 0)),
            pl.BlockSpec((C, 7), lambda i: (0, 0)),
            pl.BlockSpec((hidden, 7), lambda i: (0, 0)),
            pl.BlockSpec((1, 7), lambda i: (0, 0)),
        ],
        out_specs=pl.BlockSpec((B, 7), lambda i: (0, 0)),
        compiler_params=pltpu.CompilerParams(dimension_semantics=("arbitrary",)),
    )(xc0_all, whh0s, wih1s, whh1s, b1s, conv_feat_bsc, fc_wc, fc_wl,
      fc_b.reshape(1, 7))


# ----------------------------------------------------------------------------
# Full forward (4 pallas_calls: 3 conv layers + fused LSTM/head)
# ----------------------------------------------------------------------------
def cnn_lstm_forward(heatmap_nchw, sales_seq, params, hidden):
    x = jnp.transpose(heatmap_nchw, (0, 2, 3, 1)).astype(jnp.float32)  # NHWC
    x = conv_relu_pool(x, params["w1"], params["b1"])
    # dropout (p=0.5): identity in eval mode
    x = conv_relu_pool(x, params["w2"], params["b2"])
    x = conv_relu_pool(x, params["w3"], params["b3"])
    B, Hs, Ws, Cc = x.shape
    conv_feat = x.reshape(B, Hs * Ws, Cc)                 # (B, S, 64)
    return lstm_head(sales_seq, conv_feat, params["lstm"],
                     params["fc_wc"], params["fc_wl"], params["fc_b"], hidden)


# ----------------------------------------------------------------------------
# Pure-JAX reference (for correctness check)
# ----------------------------------------------------------------------------
def reference_forward(heatmap_nchw, sales_seq, params, hidden):
    x = jnp.transpose(heatmap_nchw, (0, 2, 3, 1)).astype(jnp.float32)
    for w, b in ((params["w1"], params["b1"]), (params["w2"], params["b2"]),
                 (params["w3"], params["b3"])):
        y = lax.conv_general_dilated(
            x, w, window_strides=(1, 1), padding="SAME",
            dimension_numbers=("NHWC", "HWIO", "NHWC"))
        y = jnp.maximum(y + b, 0.0)
        B, H, W, C = y.shape
        x = y.reshape(B, H // 2, 2, W // 2, 2, C).max(axis=(2, 4))
    feat = x.mean(axis=(1, 2))                            # (B, 64)

    wih0, whh0, b0, wih1, whh1, b1 = params["lstm"]
    B, T = sales_seq.shape
    h1 = c1 = h2 = c2 = jnp.zeros((B, hidden), jnp.float32)
    sig, tnh = jax.nn.sigmoid, jnp.tanh
    for t in range(T):
        x_t = sales_seq[:, t:t + 1].astype(jnp.float32)
        p0 = [x_t * wih0[g] + h1 @ whh0[g] + b0[g] for g in range(4)]
        i, f, g_, o = sig(p0[0]), sig(p0[1]), tnh(p0[2]), sig(p0[3])
        c1 = f * c1 + i * g_
        h1 = o * tnh(c1)
        p1 = [h1 @ wih1[g] + h2 @ whh1[g] + b1[g] for g in range(4)]
        i, f, g_, o = sig(p1[0]), sig(p1[1]), tnh(p1[2]), sig(p1[3])
        c2 = f * c2 + i * g_
        h2 = o * tnh(c2)

    combined = jnp.concatenate([feat, h2], axis=1)
    w_fc = jnp.concatenate([params["fc_wc"], params["fc_wl"]], axis=0)
    return jnp.maximum(combined @ w_fc + params["fc_b"], 0.0)


# ----------------------------------------------------------------------------
# Deterministic parameter construction
# ----------------------------------------------------------------------------
def make_params(key, num_channels, hidden):
    ks = list(jax.random.split(key, 16))
    n = lambda k, s, sc: jax.random.normal(k, s, jnp.float32) * sc
    p = {
        "w1": n(ks[0], (3, 3, num_channels, 16), 0.10),
        "b1": n(ks[1], (16,), 0.01),
        "w2": n(ks[2], (3, 3, 16, 32), 0.08),
        "b2": n(ks[3], (32,), 0.01),
        "w3": n(ks[4], (3, 3, 32, 64), 0.06),
        "b3": n(ks[5], (64,), 0.01),
        "fc_wc": n(ks[6], (64, 7), 0.10),
        "fc_wl": n(ks[7], (hidden, 7), 0.10),
        "fc_b": n(ks[8], (7,), 0.01),
        "lstm": (
            n(ks[9], (4, 1, hidden), 0.20),        # w_ih layer0 (input_size=1)
            n(ks[10], (4, hidden, hidden), 0.15),  # w_hh layer0
            n(ks[11], (4, 1, hidden), 0.02),       # b_ih+b_hh layer0 (combined)
            n(ks[12], (4, hidden, hidden), 0.15),  # w_ih layer1
            n(ks[13], (4, hidden, hidden), 0.15),  # w_hh layer1
            n(ks[14], (4, 1, hidden), 0.02),       # b_ih+b_hh layer1 (combined)
        ),
    }
    return p


if __name__ == "__main__":
    B, C, HW, T, HIDDEN = 2, 3, 16, 8, 32
    key = jax.random.PRNGKey(0)
    k_hm, k_seq, k_par = jax.random.split(key, 3)

    heatmap = jax.random.normal(k_hm, (B, C, HW, HW), jnp.float32)   # NCHW
    sales_seq = jax.random.normal(k_seq, (B, T), jnp.float32)
    params = make_params(k_par, C, HIDDEN)

    fwd = jax.jit(functools.partial(cnn_lstm_forward, hidden=HIDDEN))
    out = fwd(heatmap, sales_seq, params)
    out = jax.block_until_ready(out)

    ref = reference_forward(heatmap, sales_seq, params, HIDDEN)
    assert out.shape == (B, 7)
    assert np.allclose(np.asarray(out), np.asarray(ref), atol=2e-2, rtol=2e-2)

    print("KERNEL_OK")
</pallas_src>

<mosaic_0001>
module attributes {stable_mosaic.version = 11 : i64} {
  func.func @conv_pool_kernel(%arg0: i32, %arg1: memref<512x128xf32, #tpu.memory_space<vmem>>, %arg2: memref<128x16xf32, #tpu.memory_space<vmem>>, %arg3: memref<1x16xf32, #tpu.memory_space<vmem>>, %arg4: memref<128x16xf32, #tpu.memory_space<vmem>>) attributes {dimension_semantics = [#tpu.dimension_semantics<arbitrary>], iteration_bounds = array<i64: 1>, scalar_prefetch = 0 : i64, scratch_operands = 0 : i64, tpu.core_type = #tpu.core_type<tc>, window_params = [{pipeline_mode = #tpu.pipeline_mode<synchronous>, transform_indices = @transform_0, window_bounds = array<i64: 512, 128>}, {pipeline_mode = #tpu.pipeline_mode<synchronous>, transform_indices = @transform_1, window_bounds = array<i64: 128, 16>}, {pipeline_mode = #tpu.pipeline_mode<synchronous>, transform_indices = @transform_2, window_bounds = array<i64: 1, 16>}, {pipeline_mode = #tpu.pipeline_mode<synchronous>, transform_indices = @transform_3, window_bounds = array<i64: 128, 16>}]} {
    %c0 = arith.constant 0 : index
    %c0_0 = arith.constant 0 : index
    %0 = vector.load %arg1[%c0, %c0_0] : memref<512x128xf32, #tpu.memory_space<vmem>>, vector<512x128xf32>
    %c0_1 = arith.constant 0 : index
    %c0_2 = arith.constant 0 : index
    %1 = vector.load %arg2[%c0_1, %c0_2] : memref<128x16xf32, #tpu.memory_space<vmem>>, vector<128x16xf32>
    %cst = arith.constant dense<0.000000e+00> : vector<512x16xf32>
    %2 = tpu.matmul %0, %1, %cst {dimension_numbers = #tpu.dot_dimension_numbers<[1], [0], [0], [1], [0, 0, 1, 1], [], []>} : vector<512x128xf32>, vector<128x16xf32>, vector<512x16xf32> -> vector<512x16xf32>
    %3 = vector.extract_strided_slice %2 {offsets = [0, 0], sizes = [128, 16], strides = [1, 1]} : vector<512x16xf32> to vector<128x16xf32>
    %4 = vector.extract_strided_slice %2 {offsets = [128, 0], sizes = [128, 16], strides = [1, 1]} : vector<512x16xf32> to vector<128x16xf32>
    %5 = arith.maximumf %3, %4 : vector<128x16xf32>
    %6 = vector.extract_strided_slice %2 {offsets = [256, 0], sizes = [128, 16], strides = [1, 1]} : vector<512x16xf32> to vector<128x16xf32>
    %7 = vector.extract_strided_slice %2 {offsets = [384, 0], sizes = [128, 16], strides = [1, 1]} : vector<512x16xf32> to vector<128x16xf32>
    %8 = arith.maximumf %6, %7 : vector<128x16xf32>
    %9 = arith.maximumf %5, %8 : vector<128x16xf32>
    %c0_3 = arith.constant 0 : index
    %c0_4 = arith.constant 0 : index
    %10 = vector.load %arg3[%c0_3, %c0_4] : memref<1x16xf32, #tpu.memory_space<vmem>>, vector<1x16xf32>
    %11 = vector.broadcast %10 : vector<1x16xf32> to vector<128x16xf32>
    %12 = arith.addf %9, %11 : vector<128x16xf32>
    %cst_5 = arith.constant 0.000000e+00 : f32
    %13 = vector.broadcast %cst_5 : f32 to vector<128x16xf32>
    %14 = arith.maximumf %12, %13 : vector<128x16xf32>
    %c0_6 = arith.constant 0 : index
    %c0_7 = arith.constant 0 : index
    %15 = vector.load %arg4[%c0_6, %c0_7] : memref<128x16xf32, #tpu.memory_space<vmem>>, vector<128x16xf32>
    tpu.vector_store %arg4[%c0_6, %c0_7], %14 {strides = array<i32>} : memref<128x16xf32, #tpu.memory_space<vmem>>, vector<128x16xf32>,
    return
  }
  func.func @transform_0(%arg0: i32) -> (i32, i32) {
    %c0_i32 = arith.constant 0 : i32
    %c0_i32_0 = arith.constant 0 : i32
    %c0_i32_1 = arith.constant 0 : i32
    return %c0_i32, %c0_i32_0 : i32, i32
  }
  func.func @transform_1(%arg0: i32) -> (i32, i32) {
    %c0_i32 = arith.constant 0 : i32
    %c0_i32_0 = arith.constant 0 : i32
    %c0_i32_1 = arith.constant 0 : i32
    return %c0_i32, %c0_i32_0 : i32, i32
  }
  func.func @transform_2(%arg0: i32) -> (i32, i32) {
    %c0_i32 = arith.constant 0 : i32
    %c0_i32_0 = arith.constant 0 : i32
    %c0_i32_1 = arith.constant 0 : i32
    return %c0_i32, %c0_i32_0 : i32, i32
  }
  func.func @transform_3(%arg0: i32) -> (i32, i32) {
    %c0_i32 = arith.constant 0 : i32
    %c0_i32_0 = arith.constant 0 : i32
    %c0_i32_1 = arith.constant 0 : i32
    return %c0_i32, %c0_i32_0 : i32, i32
  }
}

module attributes {stable_mosaic.version = 11 : i64} {
  func.func @conv_pool_kernel(%arg0: i32, %arg1: memref<128x256xf32, #tpu.memory_space<vmem>>, %arg2: memref<256x32xf32, #tpu.memory_space<vmem>>, %arg3: memref<1x32xf32, #tpu.memory_space<vmem>>, %arg4: memref<32x32xf32, #tpu.memory_space<vmem>>) attributes {dimension_semantics = [#tpu.dimension_semantics<arbitrary>], iteration_bounds = array<i64: 1>, scalar_prefetch = 0 : i64, scratch_operands = 0 : i64, tpu.core_type = #tpu.core_type<tc>, window_params = [{pipeline_mode = #tpu.pipeline_mode<synchronous>, transform_indices = @transform_0, window_bounds = array<i64: 128, 256>}, {pipeline_mode = #tpu.pipeline_mode<synchronous>, transform_indices = @transform_1, window_bounds = array<i64: 256, 32>}, {pipeline_mode = #tpu.pipeline_mode<synchronous>, transform_indices = @transform_2, window_bounds = array<i64: 1, 32>}, {pipeline_mode = #tpu.pipeline_mode<synchronous>, transform_indices = @transform_3, window_bounds = array<i64: 32, 32>}]} {
    %c0 = arith.constant 0 : index
    %c0_0 = arith.constant 0 : index
    %0 = vector.load %arg1[%c0, %c0_0] : memref<128x256xf32, #tpu.memory_space<vmem>>, vector<128x256xf32>
    %c0_1 = arith.constant 0 : index
    %c0_2 = arith.constant 0 : index
    %1 = vector.load %arg2[%c0_1, %c0_2] : memref<256x32xf32, #tpu.memory_space<vmem>>, vector<256x32xf32>
    %cst = arith.constant dense<0.000000e+00> : vector<128x32xf32>
    %2 = tpu.matmul %0, %1, %cst {dimension_numbers = #tpu.dot_dimension_numbers<[1], [0], [0], [1], [0, 0, 1, 1], [], []>} : vector<128x256xf32>, vector<256x32xf32>, vector<128x32xf32> -> vector<128x32xf32>
    %3 = vector.extract_strided_slice %2 {offsets = [0, 0], sizes = [32, 32], strides = [1, 1]} : vector<128x32xf32> to vector<32x32xf32>
    %4 = vector.extract_strided_slice %2 {offsets = [32, 0], sizes = [32, 32], strides = [1, 1]} : vector<128x32xf32> to vector<32x32xf32>
    %5 = arith.maximumf %3, %4 : vector<32x32xf32>
    %6 = vector.extract_strided_slice %2 {offsets = [64, 0], sizes = [32, 32], strides = [1, 1]} : vector<128x32xf32> to vector<32x32xf32>
    %7 = vector.extract_strided_slice %2 {offsets = [96, 0], sizes = [32, 32], strides = [1, 1]} : vector<128x32xf32> to vector<32x32xf32>
    %8 = arith.maximumf %6, %7 : vector<32x32xf32>
    %9 = arith.maximumf %5, %8 : vector<32x32xf32>
    %c0_3 = arith.constant 0 : index
    %c0_4 = arith.constant 0 : index
    %10 = vector.load %arg3[%c0_3, %c0_4] : memref<1x32xf32, #tpu.memory_space<vmem>>, vector<1x32xf32>
    %11 = vector.broadcast %10 : vector<1x32xf32> to vector<32x32xf32>
    %12 = arith.addf %9, %11 : vector<32x32xf32>
    %cst_5 = arith.constant 0.000000e+00 : f32
    %13 = vector.broadcast %cst_5 : f32 to vector<32x32xf32>
    %14 = arith.maximumf %12, %13 : vector<32x32xf32>
    %c0_6 = arith.constant 0 : index
    %c0_7 = arith.constant 0 : index
    %15 = vector.load %arg4[%c0_6, %c0_7] : memref<32x32xf32, #tpu.memory_space<vmem>>, vector<32x32xf32>
    tpu.vector_store %arg4[%c0_6, %c0_7], %14 {strides = array<i32>} : memref<32x32xf32, #tpu.memory_space<vmem>>, vector<32x32xf32>,
    return
  }
  func.func @transform_0(%arg0: i32) -> (i32, i32) {
    %c0_i32 = arith.constant 0 : i32
    %c0_i32_0 = arith.constant 0 : i32
    %c0_i32_1 = arith.constant 0 : i32
    return %c0_i32, %c0_i32_0 : i32, i32
  }
  func.func @transform_1(%arg0: i32) -> (i32, i32) {
    %c0_i32 = arith.constant 0 : i32
    %c0_i32_0 = arith.constant 0 : i32
    %c0_i32_1 = arith.constant 0 : i32
    return %c0_i32, %c0_i32_0 : i32, i32
  }
  func.func @transform_2(%arg0: i32) -> (i32, i32) {
    %c0_i32 = arith.constant 0 : i32
    %c0_i32_0 = arith.constant 0 : i32
    %c0_i32_1 = arith.constant 0 : i32
    return %c0_i32, %c0_i32_0 : i32, i32
  }
  func.func @transform_3(%arg0: i32) -> (i32, i32) {
    %c0_i32 = arith.constant 0 : i32
    %c0_i32_0 = arith.constant 0 : i32
    %c0_i32_1 = arith.constant 0 : i32
    return %c0_i32, %c0_i32_0 : i32, i32
  }
}

module attributes {stable_mosaic.version = 11 : i64} {
  func.func @conv_pool_kernel(%arg0: i32, %arg1: memref<32x384xf32, #tpu.memory_space<vmem>>, %arg2: memref<384x64xf32, #tpu.memory_space<vmem>>, %arg3: memref<1x64xf32, #tpu.memory_space<vmem>>, %arg4: memref<8x64xf32, #tpu.memory_space<vmem>>) attributes {dimension_semantics = [#tpu.dimension_semantics<arbitrary>], iteration_bounds = array<i64: 1>, scalar_prefetch = 0 : i64, scratch_operands = 0 : i64, tpu.core_type = #tpu.core_type<tc>, window_params = [{pipeline_mode = #tpu.pipeline_mode<synchronous>, transform_indices = @transform_0, window_bounds = array<i64: 32, 384>}, {pipeline_mode = #tpu.pipeline_mode<synchronous>, transform_indices = @transform_1, window_bounds = array<i64: 384, 64>}, {pipeline_mode = #tpu.pipeline_mode<synchronous>, transform_indices = @transform_2, window_bounds = array<i64: 1, 64>}, {pipeline_mode = #tpu.pipeline_mode<synchronous>, transform_indices = @transform_3, window_bounds = array<i64: 8, 64>}]} {
    %c0 = arith.constant 0 : index
    %c0_0 = arith.constant 0 : index
    %0 = vector.load %arg1[%c0, %c0_0] : memref<32x384xf32, #tpu.memory_space<vmem>>, vector<32x384xf32>
    %c0_1 = arith.constant 0 : index
    %c0_2 = arith.constant 0 : index
    %1 = vector.load %arg2[%c0_1, %c0_2] : memref<384x64xf32, #tpu.memory_space<vmem>>, vector<384x64xf32>
    %cst = arith.constant dense<0.000000e+00> : vector<32x64xf32>
    %2 = tpu.matmul %0, %1, %cst {dimension_numbers = #tpu.dot_dimension_numbers<[1], [0], [0], [1], [0, 0, 1, 1], [], []>} : vector<32x384xf32>, vector<384x64xf32>, vector<32x64xf32> -> vector<32x64xf32>
    %3 = vector.extract_strided_slice %2 {offsets = [0, 0], sizes = [8, 64], strides = [1, 1]} : vector<32x64xf32> to vector<8x64xf32>
    %4 = vector.extract_strided_slice %2 {offsets = [8, 0], sizes = [8, 64], strides = [1, 1]} : vector<32x64xf32> to vector<8x64xf32>
    %5 = arith.maximumf %3, %4 : vector<8x64xf32>
    %6 = vector.extract_strided_slice %2 {offsets = [16, 0], sizes = [8, 64], strides = [1, 1]} : vector<32x64xf32> to vector<8x64xf32>
    %7 = vector.extract_strided_slice %2 {offsets = [24, 0], sizes = [8, 64], strides = [1, 1]} : vector<32x64xf32> to vector<8x64xf32>
    %8 = arith.maximumf %6, %7 : vector<8x64xf32>
    %9 = arith.maximumf %5, %8 : vector<8x64xf32>
    %c0_3 = arith.constant 0 : index
    %c0_4 = arith.constant 0 : index
    %10 = vector.load %arg3[%c0_3, %c0_4] : memref<1x64xf32, #tpu.memory_space<vmem>>, vector<1x64xf32>
    %11 = vector.broadcast %10 : vector<1x64xf32> to vector<8x64xf32>
    %12 = arith.addf %9, %11 : vector<8x64xf32>
    %cst_5 = arith.constant 0.000000e+00 : f32
    %13 = vector.broadcast %cst_5 : f32 to vector<8x64xf32>
    %14 = arith.maximumf %12, %13 : vector<8x64xf32>
    %c0_6 = arith.constant 0 : index
    %c0_7 = arith.constant 0 : index
    %15 = vector.load %arg4[%c0_6, %c0_7] : memref<8x64xf32, #tpu.memory_space<vmem>>, vector<8x64xf32>
    tpu.vector_store %arg4[%c0_6, %c0_7], %14 {strides = array<i32>} : memref<8x64xf32, #tpu.memory_space<vmem>>, vector<8x64xf32>,
    return
  }
  func.func @transform_0(%arg0: i32) -> (i32, i32) {
    %c0_i32 = arith.constant 0 : i32
    %c0_i32_0 = arith.constant 0 : i32
    %c0_i32_1 = arith.constant 0 : i32
    return %c0_i32, %c0_i32_0 : i32, i32
  }
  func.func @transform_1(%arg0: i32) -> (i32, i32) {
    %c0_i32 = arith.constant 0 : i32
    %c0_i32_0 = arith.constant 0 : i32
    %c0_i32_1 = arith.constant 0 : i32
    return %c0_i32, %c0_i32_0 : i32, i32
  }
  func.func @transform_2(%arg0: i32) -> (i32, i32) {
    %c0_i32 = arith.constant 0 : i32
    %c0_i32_0 = arith.constant 0 : i32
    %c0_i32_1 = arith.constant 0 : i32
    return %c0_i32, %c0_i32_0 : i32, i32
  }
  func.func @transform_3(%arg0: i32) -> (i32, i32) {
    %c0_i32 = arith.constant 0 : i32
    %c0_i32_0 = arith.constant 0 : i32
    %c0_i32_1 = arith.constant 0 : i32
    return %c0_i32, %c0_i32_0 : i32, i32
  }
}

module attributes {stable_mosaic.version = 11 : i64} {
  func.func @lstm_head_kernel(%arg0: i32, %arg1: memref<8x2x128xf32, #tpu.memory_space<vmem>>, %arg2: memref<32x128xf32, #tpu.memory_space<vmem>>, %arg3: memref<32x128xf32, #tpu.memory_space<vmem>>, %arg4: memref<32x128xf32, #tpu.memory_space<vmem>>, %arg5: memref<1x128xf32, #tpu.memory_space<vmem>>, %arg6: memref<2x4x64xf32, #tpu.memory_space<vmem>>, %arg7: memref<64x7xf32, #tpu.memory_space<vmem>>, %arg8: memref<32x7xf32, #tpu.memory_space<vmem>>, %arg9: memref<1x7xf32, #tpu.memory_space<vmem>>, %arg10: memref<2x7xf32, #tpu.memory_space<vmem>>) attributes {dimension_semantics = [#tpu.dimension_semantics<arbitrary>], iteration_bounds = array<i64: 1>, scalar_prefetch = 0 : i64, scratch_operands = 0 : i64, tpu.core_type = #tpu.core_type<tc>, window_params = [{pipeline_mode = #tpu.pipeline_mode<synchronous>, transform_indices = @transform_0, window_bounds = array<i64: 8, 2, 128>}, {pipeline_mode = #tpu.pipeline_mode<synchronous>, transform_indices = @transform_1, window_bounds = array<i64: 32, 128>}, {pipeline_mode = #tpu.pipeline_mode<synchronous>, transform_indices = @transform_2, window_bounds = array<i64: 32, 128>}, {pipeline_mode = #tpu.pipeline_mode<synchronous>, transform_indices = @transform_3, window_bounds = array<i64: 32, 128>}, {pipeline_mode = #tpu.pipeline_mode<synchronous>, transform_indices = @transform_4, window_bounds = array<i64: 1, 128>}, {pipeline_mode = #tpu.pipeline_mode<synchronous>, transform_indices = @transform_5, window_bounds = array<i64: 2, 4, 64>}, {pipeline_mode = #tpu.pipeline_mode<synchronous>, transform_indices = @transform_6, window_bounds = array<i64: 64, 7>}, {pipeline_mode = #tpu.pipeline_mode<synchronous>, transform_indices = @transform_7, window_bounds = array<i64: 32, 7>}, {pipeline_mode = #tpu.pipeline_mode<synchronous>, transform_indices = @transform_8, window_bounds = array<i64: 1, 7>}, {pipeline_mode = #tpu.pipeline_mode<synchronous>, transform_indices = @transform_9, window_bounds = array<i64: 2, 7>}]} {
    %c0 = arith.constant 0 : index
    %c0_0 = arith.constant 0 : index
    %0 = vector.load %arg2[%c0, %c0_0] : memref<32x128xf32, #tpu.memory_space<vmem>>, vector<32x128xf32>
    %c0_1 = arith.constant 0 : index
    %c0_2 = arith.constant 0 : index
    %1 = vector.load %arg3[%c0_1, %c0_2] : memref<32x128xf32, #tpu.memory_space<vmem>>, vector<32x128xf32>
    %c0_3 = arith.constant 0 : index
    %c0_4 = arith.constant 0 : index
    %2 = vector.load %arg4[%c0_3, %c0_4] : memref<32x128xf32, #tpu.memory_space<vmem>>, vector<32x128xf32>
    %c0_5 = arith.constant 0 : index
    %c0_6 = arith.constant 0 : index
    %3 = vector.load %arg5[%c0_5, %c0_6] : memref<1x128xf32, #tpu.memory_space<vmem>>, vector<1x128xf32>
    %cst = arith.constant 0.000000e+00 : f32
    %4 = vector.broadcast %cst : f32 to vector<2x32xf32>
    %c0_i32 = arith.constant 0 : i32
    %5 = arith.index_cast %c0_i32 : i32 to index
    %c0_7 = arith.constant 0 : index
    %c0_8 = arith.constant 0 : index
    %6 = vector.load %arg1[%5, %c0_7, %c0_8] : memref<8x2x128xf32, #tpu.memory_space<vmem>>, vector<1x2x128xf32>
    %7 = vector.shape_cast %6 : vector<1x2x128xf32> to vector<2x128xf32>
    %cst_9 = arith.constant dense<0.000000e+00> : vector<2x128xf32>
    %8 = tpu.matmul %4, %0, %cst_9 {dimension_numbers = #tpu.dot_dimension_numbers<[1], [0], [0], [1], [0, 0, 1, 1], [], []>} : vector<2x32xf32>, vector<32x128xf32>, vector<2x128xf32> -> vector<2x128xf32>
    %9 = arith.addf %7, %8 : vector<2x128xf32>
    %10 = arith.negf %9 : vector<2x128xf32>
    %11 = math.exp %10 : vector<2x128xf32>
    %cst_10 = arith.constant 1.000000e+00 : f32
    %12 = vector.broadcast %cst_10 : f32 to vector<2x128xf32>
    %13 = arith.addf %12, %11 : vector<2x128xf32>
    %14 = arith.divf %12, %13 : vector<2x128xf32>
    %15 = vector.extract_strided_slice %14 {offsets = [0, 0], sizes = [2, 32], strides = [1, 1]} : vector<2x128xf32> to vector<2x32xf32>
    %16 = vector.extract_strided_slice %14 {offsets = [0, 32], sizes = [2, 32], strides = [1, 1]} : vector<2x128xf32> to vector<2x32xf32>
    %17 = vector.extract_strided_slice %14 {offsets = [0, 96], sizes = [2, 32], strides = [1, 1]} : vector<2x128xf32> to vector<2x32xf32>
    %18 = vector.extract_strided_slice %9 {offsets = [0, 64], sizes = [2, 32], strides = [1, 1]} : vector<2x128xf32> to vector<2x32xf32>
    %19 = math.tanh %18 : vector<2x32xf32>
    %20 = arith.mulf %16, %4 : vector<2x32xf32>
    %21 = arith.mulf %15, %19 : vector<2x32xf32>
    %22 = arith.addf %20, %21 : vector<2x32xf32>
    %23 = math.tanh %22 : vector<2x32xf32>
    %24 = arith.mulf %17, %23 : vector<2x32xf32>
    %cst_11 = arith.constant dense<0.000000e+00> : vector<2x128xf32>
    %25 = tpu.matmul %24, %1, %cst_11 {dimension_numbers = #tpu.dot_dimension_numbers<[1], [0], [0], [1], [0, 0, 1, 1], [], []>} : vector<2x32xf32>, vector<32x128xf32>, vector<2x128xf32> -> vector<2x128xf32>
    %cst_12 = arith.constant dense<0.000000e+00> : vector<2x128xf32>
    %26 = tpu.matmul %4, %2, %cst_12 {dimension_numbers = #tpu.dot_dimension_numbers<[1], [0], [0], [1], [0, 0, 1, 1], [], []>} : vector<2x32xf32>, vector<32x128xf32>, vector<2x128xf32> -> vector<2x128xf32>
    %27 = arith.addf %25, %26 : vector<2x128xf32>
    %28 = vector.broadcast %3 : vector<1x128xf32> to vector<2x128xf32>
    %29 = arith.addf %27, %28 : vector<2x128xf32>
    %30 = arith.negf %29 : vector<2x128xf32>
    %31 = math.exp %30 : vector<2x128xf32>
    %cst_13 = arith.constant 1.000000e+00 : f32
    %32 = vector.broadcast %cst_13 : f32 to vector<2x128xf32>
    %33 = arith.addf %32, %31 : vector<2x128xf32>
    %34 = arith.divf %32, %33 : vector<2x128xf32>
    %35 = vector.extract_strided_slice %34 {offsets = [0, 0], sizes = [2, 32], strides = [1, 1]} : vector<2x128xf32> to vector<2x32xf32>
    %36 = vector.extract_strided_slice %34 {offsets = [0, 32], sizes = [2, 32], strides = [1, 1]} : vector<2x128xf32> to vector<2x32xf32>
    %37 = vector.extract_strided_slice %34 {offsets = [0, 96], sizes = [2, 32], strides = [1, 1]} : vector<2x128xf32> to vector<2x32xf32>
    %38 = vector.extract_strided_slice %29 {offsets = [0, 64], sizes = [2, 32], strides = [1, 1]} : vector<2x128xf32> to vector<2x32xf32>
    %39 = math.tanh %38 : vector<2x32xf32>
    %40 = arith.mulf %36, %4 : vector<2x32xf32>
    %41 = arith.mulf %35, %39 : vector<2x32xf32>
    %42 = arith.addf %40, %41 : vector<2x32xf32>
    %43 = math.tanh %42 : vector<2x32xf32>
    %44 = arith.mulf %37, %43 : vector<2x32xf32>
    %c1_i32 = arith.constant 1 : i32
    %45 = arith.index_cast %c1_i32 : i32 to index
    %c0_14 = arith.constant 0 : index
    %c0_15 = arith.constant 0 : index
    %46 = vector.load %arg1[%45, %c0_14, %c0_15] : memref<8x2x128xf32, #tpu.memory_space<vmem>>, vector<1x2x128xf32>
    %47 = vector.shape_cast %46 : vector<1x2x128xf32> to vector<2x128xf32>
    %cst_16 = arith.constant dense<0.000000e+00> : vector<2x128xf32>
    %48 = tpu.matmul %24, %0, %cst_16 {dimension_numbers = #tpu.dot_dimension_numbers<[1], [0], [0], [1], [0, 0, 1, 1], [], []>} : vector<2x32xf32>, vector<32x128xf32>, vector<2x128xf32> -> vector<2x128xf32>
    %49 = arith.addf %47, %48 : vector<2x128xf32>
    %50 = arith.negf %49 : vector<2x128xf32>
    %51 = math.exp %50 : vector<2x128xf32>
    %cst_17 = arith.constant 1.000000e+00 : f32
    %52 = vector.broadcast %cst_17 : f32 to vector<2x128xf32>
    %53 = arith.addf %52, %51 : vector<2x128xf32>
    %54 = arith.divf %52, %53 : vector<2x128xf32>
    %55 = vector.extract_strided_slice %54 {offsets = [0, 0], sizes = [2, 32], strides = [1, 1]} : vector<2x128xf32> to vector<2x32xf32>
    %56 = vector.extract_strided_slice %54 {offsets = [0, 32], sizes = [2, 32], strides = [1, 1]} : vector<2x128xf32> to vector<2x32xf32>
    %57 = vector.extract_strided_slice %54 {offsets = [0, 96], sizes = [2, 32], strides = [1, 1]} : vector<2x128xf32> to vector<2x32xf32>
    %58 = vector.extract_strided_slice %49 {offsets = [0, 64], sizes = [2, 32], strides = [1, 1]} : vector<2x128xf32> to vector<2x32xf32>
    %59 = math.tanh %58 : vector<2x32xf32>
    %60 = arith.mulf %56, %22 : vector<2x32xf32>
    %61 = arith.mulf %55, %59 : vector<2x32xf32>
    %62 = arith.addf %60, %61 : vector<2x32xf32>
    %63 = math.tanh %62 : vector<2x32xf32>
    %64 = arith.mulf %57, %63 : vector<2x32xf32>
    %cst_18 = arith.constant dense<0.000000e+00> : vector<2x128xf32>
    %65 = tpu.matmul %64, %1, %cst_18 {dimension_numbers = #tpu.dot_dimension_numbers<[1], [0], [0], [1], [0, 0, 1, 1], [], []>} : vector<2x32xf32>, vector<32x128xf32>, vector<2x128xf32> -> vector<2x128xf32>
    %cst_19 = arith.constant dense<0.000000e+00> : vector<2x128xf32>
    %66 = tpu.matmul %44, %2, %cst_19 {dimension_numbers = #tpu.dot_dimension_numbers<[1], [0], [0], [1], [0, 0, 1, 1], [], []>} : vector<2x32xf32>, vector<32x128xf32>, vector<2x128xf32> -> vector<2x128xf32>
    %67 = arith.addf %65, %66 : vector<2x128xf32>
    %68 = vector.broadcast %3 : vector<1x128xf32> to vector<2x128xf32>
    %69 = arith.addf %67, %68 : vector<2x128xf32>
    %70 = arith.negf %69 : vector<2x128xf32>
    %71 = math.exp %70 : vector<2x128xf32>
    %cst_20 = arith.constant 1.000000e+00 : f32
    %72 = vector.broadcast %cst_20 : f32 to vector<2x128xf32>
    %73 = arith.addf %72, %71 : vector<2x128xf32>
    %74 = arith.divf %72, %73 : vector<2x128xf32>
    %75 = vector.extract_strided_slice %74 {offsets = [0, 0], sizes = [2, 32], strides = [1, 1]} : vector<2x128xf32> to vector<2x32xf32>
    %76 = vector.extract_strided_slice %74 {offsets = [0, 32], sizes = [2, 32], strides = [1, 1]} : vector<2x128xf32> to vector<2x32xf32>
    %77 = vector.extract_strided_slice %74 {offsets = [0, 96], sizes = [2, 32], strides = [1, 1]} : vector<2x128xf32> to vector<2x32xf32>
    %78 = vector.extract_strided_slice %69 {offsets = [0, 64], sizes = [2, 32], strides = [1, 1]} : vector<2x128xf32> to vector<2x32xf32>
    %79 = math.tanh %78 : vector<2x32xf32>
    %80 = arith.mulf %76, %42 : vector<2x32xf32>
    %81 = arith.mulf %75, %79 : vector<2x32xf32>
    %82 = arith.addf %80, %81 : vector<2x32xf32>
    %83 = math.tanh %82 : vector<2x32xf32>
    %84 = arith.mulf %77, %83 : vector<2x32xf32>
    %c2_i32 = arith.constant 2 : i32
    %85 = arith.index_cast %c2_i32 : i32 to index
    %c0_21 = arith.constant 0 : index
    %c0_22 = arith.constant 0 : index
    %86 = vector.load %arg1[%85, %c0_21, %c0_22] : memref<8x2x128xf32, #tpu.memory_space<vmem>>, vector<1x2x128xf32>
    %87 = vector.shape_cast %86 : vector<1x2x128xf32> to vector<2x128xf32>
    %cst_23 = arith.constant dense<0.000000e+00> : vector<2x128xf32>
    %88 = tpu.matmul %64, %0, %cst_23 {dimension_numbers = #tpu.dot_dimension_numbers<[1], [0], [0], [1], [0, 0, 1, 1], [], []>} : vector<2x32xf32>, vector<32x128xf32>, vector<2x128xf32> -> vector<2x128xf32>
    %89 = arith.addf %87, %88 : vector<2x128xf32>
    %90 = arith.negf %89 : vector<2x128xf32>
    %91 = math.exp %90 : vector<2x128xf32>
    %cst_24 = arith.constant 1.000000e+00 : f32
    %92 = vector.broadcast %cst_24 : f32 to vector<2x128xf32>
    %93 = arith.addf %92, %91 : vector<2x128xf32>
    %94 = arith.divf %92, %93 : vector<2x128xf32>
    %95 = vector.extract_strided_slice %94 {offsets = [0, 0], sizes = [2, 32], strides = [1, 1]} : vector<2x128xf32> to vector<2x32xf32>
    %96 = vector.extract_strided_slice %94 {offsets = [0, 32], sizes = [2, 32], strides = [1, 1]} : vector<2x128xf32> to vector<2x32xf32>
    %97 = vector.extract_strided_slice %94 {offsets = [0, 96], sizes = [2, 32], strides = [1, 1]} : vector<2x128xf32> to vector<2x32xf32>
    %98 = vector.extract_strided_slice %89 {offsets = [0, 64], sizes = [2, 32], strides = [1, 1]} : vector<2x128xf32> to vector<2x32xf32>
    %99 = math.tanh %98 : vector<2x32xf32>
    %100 = arith.mulf %96, %62 : vector<2x32xf32>
    %101 = arith.mulf %95, %99 : vector<2x32xf32>
    %102 = arith.addf %100, %101 : vector<2x32xf32>
    %103 = math.tanh %102 : vector<2x32xf32>
    %104 = arith.mulf %97, %103 : vector<2x32xf32>
    %cst_25 = arith.constant dense<0.000000e+00> : vector<2x128xf32>
    %105 = tpu.matmul %104, %1, %cst_25 {dimension_numbers = #tpu.dot_dimension_numbers<[1], [0], [0], [1], [0, 0, 1, 1], [], []>} : vector<2x32xf32>, vector<32x128xf32>, vector<2x128xf32> -> vector<2x128xf32>
    %cst_26 = arith.constant dense<0.000000e+00> : vector<2x128xf32>
    %106 = tpu.matmul %84, %2, %cst_26 {dimension_numbers = #tpu.dot_dimension_numbers<[1], [0], [0], [1], [0, 0, 1, 1], [], []>} : vector<2x32xf32>, vector<32x128xf32>, vector<2x128xf32> -> vector<2x128xf32>
    %107 = arith.addf %105, %106 : vector<2x128xf32>
    %108 = vector.broadcast %3 : vector<1x128xf32> to vector<2x128xf32>
    %109 = arith.addf %107, %108 : vector<2x128xf32>
    %110 = arith.negf %109 : vector<2x128xf32>
    %111 = math.exp %110 : vector<2x128xf32>
    %cst_27 = arith.constant 1.000000e+00 : f32
    %112 = vector.broadcast %cst_27 : f32 to vector<2x128xf32>
    %113 = arith.addf %112, %111 : vector<2x128xf32>
    %114 = arith.divf %112, %113 : vector<2x128xf32>
    %115 = vector.extract_strided_slice %114 {offsets = [0, 0], sizes = [2, 32], strides = [1, 1]} : vector<2x128xf32> to vector<2x32xf32>
    %116 = vector.extract_strided_slice %114 {offsets = [0, 32], sizes = [2, 32], strides = [1, 1]} : vector<2x128xf32> to vector<2x32xf32>
    %117 = vector.extract_strided_slice %114 {offsets = [0, 96], sizes = [2, 32], strides = [1, 1]} : vector<2x128xf32> to vector<2x32xf32>
    %118 = vector.extract_strided_slice %109 {offsets = [0, 64], sizes = [2, 32], strides = [1, 1]} : vector<2x128xf32> to vector<2x32xf32>
    %119 = math.tanh %118 : vector<2x32xf32>
    %120 = arith.mulf %116, %82 : vector<2x32xf32>
    %121 = arith.mulf %115, %119 : vector<2x32xf32>
    %122 = arith.addf %120, %121 : vector<2x32xf32>
    %123 = math.tanh %122 : vector<2x32xf32>
    %124 = arith.mulf %117, %123 : vector<2x32xf32>
    %c3_i32 = arith.constant 3 : i32
    %125 = arith.index_cast %c3_i32 : i32 to index
    %c0_28 = arith.constant 0 : index
    %c0_29 = arith.constant 0 : index
    %126 = vector.load %arg1[%125, %c0_28, %c0_29] : memref<8x2x128xf32, #tpu.memory_space<vmem>>, vector<1x2x128xf32>
    %127 = vector.shape_cast %126 : vector<1x2x128xf32> to vector<2x128xf32>
    %cst_30 = arith.constant dense<0.000000e+00> : vector<2x128xf32>
    %128 = tpu.matmul %104, %0, %cst_30 {dimension_numbers = #tpu.dot_dimension_numbers<[1], [0], [0], [1], [0, 0, 1, 1], [], []>} : vector<2x32xf32>, vector<32x128xf32>, vector<2x128xf32> -> vector<2x128xf32>
    %129 = arith.addf %127, %128 : vector<2x128xf32>
    %130 = arith.negf %129 : vector<2x128xf32>
    %131 = math.exp %130 : vector<2x128xf32>
    %cst_31 = arith.constant 1.000000e+00 : f32
    %132 = vector.broadcast %cst_31 : f32 to vector<2x128xf32>
    %133 = arith.addf %132, %131 : vector<2x128xf32>
    %134 = arith.divf %132, %133 : vector<2x128xf32>
    %135 = vector.extract_strided_slice %134 {offsets = [0, 0], sizes = [2, 32], strides = [1, 1]} : vector<2x128xf32> to vector<2x32xf32>
    %136 = vector.extract_strided_slice %134 {offsets = [0, 32], sizes = [2, 32], strides = [1, 1]} : vector<2x128xf32> to vector<2x32xf32>
    %137 = vector.extract_strided_slice %134 {offsets = [0, 96], sizes = [2, 32], strides = [1, 1]} : vector<2x128xf32> to vector<2x32xf32>
    %138 = vector.extract_strided_slice %129 {offsets = [0, 64], sizes = [2, 32], strides = [1, 1]} : vector<2x128xf32> to vector<2x32xf32>
    %139 = math.tanh %138 : vector<2x32xf32>
    %140 = arith.mulf %136, %102 : vector<2x32xf32>
    %141 = arith.mulf %135, %139 : vector<2x32xf32>
    %142 = arith.addf %140, %141 : vector<2x32xf32>
    %143 = math.tanh %142 : vector<2x32xf32>
    %144 = arith.mulf %137, %143 : vector<2x32xf32>
    %cst_32 = arith.constant dense<0.000000e+00> : vector<2x128xf32>
    %145 = tpu.matmul %144, %1, %cst_32 {dimension_numbers = #tpu.dot_dimension_numbers<[1], [0], [0], [1], [0, 0, 1, 1], [], []>} : vector<2x32xf32>, vector<32x128xf32>, vector<2x128xf32> -> vector<2x128xf32>
    %cst_33 = arith.constant dense<0.000000e+00> : vector<2x128xf32>
    %146 = tpu.matmul %124, %2, %cst_33 {dimension_numbers = #tpu.dot_dimension_numbers<[1], [0], [0], [1], [0, 0, 1, 1], [], []>} : vector<2x32xf32>, vector<32x128xf32>, vector<2x128xf32> -> vector<2x128xf32>
    %147 = arith.addf %145, %146 : vector<2x128xf32>
    %148 = vector.broadcast %3 : vector<1x128xf32> to vector<2x128xf32>
    %149 = arith.addf %147, %148 : vector<2x128xf32>
    %150 = arith.negf %149 : vector<2x128xf32>
    %151 = math.exp %150 : vector<2x128xf32>
    %cst_34 = arith.constant 1.000000e+00 : f32
    %152 = vector.broadcast %cst_34 : f32 to vector<2x128xf32>
    %153 = arith.addf %152, %151 : vector<2x128xf32>
    %154 = arith.divf %152, %153 : vector<2x128xf32>
    %155 = vector.extract_strided_slice %154 {offsets = [0, 0], sizes = [2, 32], strides = [1, 1]} : vector<2x128xf32> to vector<2x32xf32>
    %156 = vector.extract_strided_slice %154 {offsets = [0, 32], sizes = [2, 32], strides = [1, 1]} : vector<2x128xf32> to vector<2x32xf32>
    %157 = vector.extract_strided_slice %154 {offsets = [0, 96], sizes = [2, 32], strides = [1, 1]} : vector<2x128xf32> to vector<2x32xf32>
    %158 = vector.extract_strided_slice %149 {offsets = [0, 64], sizes = [2, 32], strides = [1, 1]} : vector<2x128xf32> to vector<2x32xf32>
    %159 = math.tanh %158 : vector<2x32xf32>
    %160 = arith.mulf %156, %122 : vector<2x32xf32>
    %161 = arith.mulf %155, %159 : vector<2x32xf32>
    %162 = arith.addf %160, %161 : vector<2x32xf32>
    %163 = math.tanh %162 : vector<2x32xf32>
    %164 = arith.mulf %157, %163 : vector<2x32xf32>
    %c4_i32 = arith.constant 4 : i32
    %165 = arith.index_cast %c4_i32 : i32 to index
    %c0_35 = arith.constant 0 : index
    %c0_36 = arith.constant 0 : index
    %166 = vector.load %arg1[%165, %c0_35, %c0_36] : memref<8x2x128xf32, #tpu.memory_space<vmem>>, vector<1x2x128xf32>
    %167 = vector.shape_cast %166 : vector<1x2x128xf32> to vector<2x128xf32>
    %cst_37 = arith.constant dense<0.000000e+00> : vector<2x128xf32>
    %168 = tpu.matmul %144, %0, %cst_37 {dimension_numbers = #tpu.dot_dimension_numbers<[1], [0], [0], [1], [0, 0, 1, 1], [], []>} : vector<2x32xf32>, vector<32x128xf32>, vector<2x128xf32> -> vector<2x128xf32>
    %169 = arith.addf %167, %168 : vector<2x128xf32>
    %170 = arith.negf %169 : vector<2x128xf32>
    %171 = math.exp %170 : vector<2x128xf32>
    %cst_38 = arith.constant 1.000000e+00 : f32
    %172 = vector.broadcast %cst_38 : f32 to vector<2x128xf32>
    %173 = arith.addf %172, %171 : vector<2x128xf32>
    %174 = arith.divf %172, %173 : vector<2x128xf32>
    %175 = vector.extract_strided_slice %174 {offsets = [0, 0], sizes = [2, 32], strides = [1, 1]} : vector<2x128xf32> to vector<2x32xf32>
    %176 = vector.extract_strided_slice %174 {offsets = [0, 32], sizes = [2, 32], strides = [1, 1]} : vector<2x128xf32> to vector<2x32xf32>
    %177 = vector.extract_strided_slice %174 {offsets = [0, 96], sizes = [2, 32], strides = [1, 1]} : vector<2x128xf32> to vector<2x32xf32>
    %178 = vector.extract_strided_slice %169 {offsets = [0, 64], sizes = [2, 32], strides = [1, 1]} : vector<2x128xf32> to vector<2x32xf32>
    %179 = math.tanh %178 : vector<2x32xf32>
    %180 = arith.mulf %176, %142 : vector<2x32xf32>
    %181 = arith.mulf %175, %179 : vector<2x32xf32>
    %182 = arith.addf %180, %181 : vector<2x32xf32>
    %183 = math.tanh %182 : vector<2x32xf32>
    %184 = arith.mulf %177, %183 : vector<2x32xf32>
    %cst_39 = arith.constant dense<0.000000e+00> : vector<2x128xf32>
    %185 = tpu.matmul %184, %1, %cst_39 {dimension_numbers = #tpu.dot_dimension_numbers<[1], [0], [0], [1], [0, 0, 1, 1], [], []>} : vector<2x32xf32>, vector<32x128xf32>, vector<2x128xf32> -> vector<2x128xf32>
    %cst_40 = arith.constant dense<0.000000e+00> : vector<2x128xf32>
    %186 = tpu.matmul %164, %2, %cst_40 {dimension_numbers = #tpu.dot_dimension_numbers<[1], [0], [0], [1], [0, 0, 1, 1], [], []>} : vector<2x32xf32>, vector<32x128xf32>, vector<2x128xf32> -> vector<2x128xf32>
    %187 = arith.addf %185, %186 : vector<2x128xf32>
    %188 = vector.broadcast %3 : vector<1x128xf32> to vector<2x128xf32>
    %189 = arith.addf %187, %188 : vector<2x128xf32>
    %190 = arith.negf %189 : vector<2x128xf32>
    %191 = math.exp %190 : vector<2x128xf32>
    %cst_41 = arith.constant 1.000000e+00 : f32
    %192 = vector.broadcast %cst_41 : f32 to vector<2x128xf32>
    %193 = arith.addf %192, %191 : vector<2x128xf32>
    %194 = arith.divf %192, %193 : vector<2x128xf32>
    %195 = vector.extract_strided_slice %194 {offsets = [0, 0], sizes = [2, 32], strides = [1, 1]} : vector<2x128xf32> to vector<2x32xf32>
    %196 = vector.extract_strided_slice %194 {offsets = [0, 32], sizes = [2, 32], strides = [1, 1]} : vector<2x128xf32> to vector<2x32xf32>
    %197 = vector.extract_strided_slice %194 {offsets = [0, 96], sizes = [2, 32], strides = [1, 1]} : vector<2x128xf32> to vector<2x32xf32>
    %198 = vector.extract_strided_slice %189 {offsets = [0, 64], sizes = [2, 32], strides = [1, 1]} : vector<2x128xf32> to vector<2x32xf32>
    %199 = math.tanh %198 : vector<2x32xf32>
    %200 = arith.mulf %196, %162 : vector<2x32xf32>
    %201 = arith.mulf %195, %199 : vector<2x32xf32>
    %202 = arith.addf %200, %201 : vector<2x32xf32>
    %203 = math.tanh %202 : vector<2x32xf32>
    %204 = arith.mulf %197, %203 : vector<2x32xf32>
    %c5_i32 = arith.constant 5 : i32
    %205 = arith.index_cast %c5_i32 : i32 to index
    %c0_42 = arith.constant 0 : index
    %c0_43 = arith.constant 0 : index
    %206 = vector.load %arg1[%205, %c0_42, %c0_43] : memref<8x2x128xf32, #tpu.memory_space<vmem>>, vector<1x2x128xf32>
    %207 = vector.shape_cast %206 : vector<1x2x128xf32> to vector<2x128xf32>
    %cst_44 = arith.constant dense<0.000000e+00> : vector<2x128xf32>
    %208 = tpu.matmul %184, %0, %cst_44 {dimension_numbers = #tpu.dot_dimension_numbers<[1], [0], [0], [1], [0, 0, 1, 1], [], []>} : vector<2x32xf32>, vector<32x128xf32>, vector<2x128xf32> -> vector<2x128xf32>
    %209 = arith.addf %207, %208 : vector<2x128xf32>
    %210 = arith.negf %209 : vector<2x128xf32>
    %211 = math.exp %210 : vector<2x128xf32>
    %cst_45 = arith.constant 1.000000e+00 : f32
    %212 = vector.broadcast %cst_45 : f32 to vector<2x128xf32>
    %213 = arith.addf %212, %211 : vector<2x128xf32>
    %214 = arith.divf %212, %213 : vector<2x128xf32>
    %215 = vector.extract_strided_slice %214 {offsets = [0, 0], sizes = [2, 32], strides = [1, 1]} : vector<2x128xf32> to vector<2x32xf32>
    %216 = vector.extract_strided_slice %214 {offsets = [0, 32], sizes = [2, 32], strides = [1, 1]} : vector<2x128xf32> to vector<2x32xf32>
    %217 = vector.extract_strided_slice %214 {offsets = [0, 96], sizes = [2, 32], strides = [1, 1]} : vector<2x128xf32> to vector<2x32xf32>
    %218 = vector.extract_strided_slice %209 {offsets = [0, 64], sizes = [2, 32], strides = [1, 1]} : vector<2x128xf32> to vector<2x32xf32>
    %219 = math.tanh %218 : vector<2x32xf32>
    %220 = arith.mulf %216, %182 : vector<2x32xf32>
    %221 = arith.mulf %215, %219 : vector<2x32xf32>
    %222 = arith.addf %220, %221 : vector<2x32xf32>
    %223 = math.tanh %222 : vector<2x32xf32>
    %224 = arith.mulf %217, %223 : vector<2x32xf32>
    %cst_46 = arith.constant dense<0.000000e+00> : vector<2x128xf32>
    %225 = tpu.matmul %224, %1, %cst_46 {dimension_numbers = #tpu.dot_dimension_numbers<[1], [0], [0], [1], [0, 0, 1, 1], [], []>} : vector<2x32xf32>, vector<32x128xf32>, vector<2x128xf32> -> vector<2x128xf32>
    %cst_47 = arith.constant dense<0.000000e+00> : vector<2x128xf32>
    %226 = tpu.matmul %204, %2, %cst_47 {dimension_numbers = #tpu.dot_dimension_numbers<[1], [0], [0], [1], [0, 0, 1, 1], [], []>} : vector<2x32xf32>, vector<32x128xf32>, vector<2x128xf32> -> vector<2x128xf32>
    %227 = arith.addf %225, %226 : vector<2x128xf32>
    %228 = vector.broadcast %3 : vector<1x128xf32> to vector<2x128xf32>
    %229 = arith.addf %227, %228 : vector<2x128xf32>
    %230 = arith.negf %229 : vector<2x128xf32>
    %231 = math.exp %230 : vector<2x128xf32>
    %cst_48 = arith.constant 1.000000e+00 : f32
    %232 = vector.broadcast %cst_48 : f32 to vector<2x128xf32>
    %233 = arith.addf %232, %231 : vector<2x128xf32>
    %234 = arith.divf %232, %233 : vector<2x128xf32>
    %235 = vector.extract_strided_slice %234 {offsets = [0, 0], sizes = [2, 32], strides = [1, 1]} : vector<2x128xf32> to vector<2x32xf32>
    %236 = vector.extract_strided_slice %234 {offsets = [0, 32], sizes = [2, 32], strides = [1, 1]} : vector<2x128xf32> to vector<2x32xf32>
    %237 = vector.extract_strided_slice %234 {offsets = [0, 96], sizes = [2, 32], strides = [1, 1]} : vector<2x128xf32> to vector<2x32xf32>
    %238 = vector.extract_strided_slice %229 {offsets = [0, 64], sizes = [2, 32], strides = [1, 1]} : vector<2x128xf32> to vector<2x32xf32>
    %239 = math.tanh %238 : vector<2x32xf32>
    %240 = arith.mulf %236, %202 : vector<2x32xf32>
    %241 = arith.mulf %235, %239 : vector<2x32xf32>
    %242 = arith.addf %240, %241 : vector<2x32xf32>
    %243 = math.tanh %242 : vector<2x32xf32>
    %244 = arith.mulf %237, %243 : vector<2x32xf32>
    %c6_i32 = arith.constant 6 : i32
    %245 = arith.index_cast %c6_i32 : i32 to index
    %c0_49 = arith.constant 0 : index
    %c0_50 = arith.constant 0 : index
    %246 = vector.load %arg1[%245, %c0_49, %c0_50] : memref<8x2x128xf32, #tpu.memory_space<vmem>>, vector<1x2x128xf32>
    %247 = vector.shape_cast %246 : vector<1x2x128xf32> to vector<2x128xf32>
    %cst_51 = arith.constant dense<0.000000e+00> : vector<2x128xf32>
    %248 = tpu.matmul %224, %0, %cst_51 {dimension_numbers = #tpu.dot_dimension_numbers<[1], [0], [0], [1], [0, 0, 1, 1], [], []>} : vector<2x32xf32>, vector<32x128xf32>, vector<2x128xf32> -> vector<2x128xf32>
    %249 = arith.addf %247, %248 : vector<2x128xf32>
    %250 = arith.negf %249 : vector<2x128xf32>
    %251 = math.exp %250 : vector<2x128xf32>
    %cst_52 = arith.constant 1.000000e+00 : f32
    %252 = vector.broadcast %cst_52 : f32 to vector<2x128xf32>
    %253 = arith.addf %252, %251 : vector<2x128xf32>
    %254 = arith.divf %252, %253 : vector<2x128xf32>
    %255 = vector.extract_strided_slice %254 {offsets = [0, 0], sizes = [2, 32], strides = [1, 1]} : vector<2x128xf32> to vector<2x32xf32>
    %256 = vector.extract_strided_slice %254 {offsets = [0, 32], sizes = [2, 32], strides = [1, 1]} : vector<2x128xf32> to vector<2x32xf32>
    %257 = vector.extract_strided_slice %254 {offsets = [0, 96], sizes = [2, 32], strides = [1, 1]} : vector<2x128xf32> to vector<2x32xf32>
    %258 = vector.extract_strided_slice %249 {offsets = [0, 64], sizes = [2, 32], strides = [1, 1]} : vector<2x128xf32> to vector<2x32xf32>
    %259 = math.tanh %258 : vector<2x32xf32>
    %260 = arith.mulf %256, %222 : vector<2x32xf32>
    %261 = arith.mulf %255, %259 : vector<2x32xf32>
    %262 = arith.addf %260, %261 : vector<2x32xf32>
    %263 = math.tanh %262 : vector<2x32xf32>
    %264 = arith.mulf %257, %263 : vector<2x32xf32>
    %cst_53 = arith.constant dense<0.000000e+00> : vector<2x128xf32>
    %265 = tpu.matmul %264, %1, %cst_53 {dimension_numbers = #tpu.dot_dimension_numbers<[1], [0], [0], [1], [0, 0, 1, 1], [], []>} : vector<2x32xf32>, vector<32x128xf32>, vector<2x128xf32> -> vector<2x128xf32>
    %cst_54 = arith.constant dense<0.000000e+00> : vector<2x128xf32>
    %266 = tpu.matmul %244, %2, %cst_54 {dimension_numbers = #tpu.dot_dimension_numbers<[1], [0], [0], [1], [0, 0, 1, 1], [], []>} : vector<2x32xf32>, vector<32x128xf32>, vector<2x128xf32> -> vector<2x128xf32>
    %267 = arith.addf %265, %266 : vector<2x128xf32>
    %268 = vector.broadcast %3 : vector<1x128xf32> to vector<2x128xf32>
    %269 = arith.addf %267, %268 : vector<2x128xf32>
    %270 = arith.negf %269 : vector<2x128xf32>
    %271 = math.exp %270 : vector<2x128xf32>
    %cst_55 = arith.constant 1.000000e+00 : f32
    %272 = vector.broadcast %cst_55 : f32 to vector<2x128xf32>
    %273 = arith.addf %272, %271 : vector<2x128xf32>
    %274 = arith.divf %272, %273 : vector<2x128xf32>
    %275 = vector.extract_strided_slice %274 {offsets = [0, 0], sizes = [2, 32], strides = [1, 1]} : vector<2x128xf32> to vector<2x32xf32>
    %276 = vector.extract_strided_slice %274 {offsets = [0, 32], sizes = [2, 32], strides = [1, 1]} : vector<2x128xf32> to vector<2x32xf32>
    %277 = vector.extract_strided_slice %274 {offsets = [0, 96], sizes = [2, 32], strides = [1, 1]} : vector<2x128xf32> to vector<2x32xf32>
    %278 = vector.extract_strided_slice %269 {offsets = [0, 64], sizes = [2, 32], strides = [1, 1]} : vector<2x128xf32> to vector<2x32xf32>
    %279 = math.tanh %278 : vector<2x32xf32>
    %280 = arith.mulf %276, %242 : vector<2x32xf32>
    %281 = arith.mulf %275, %279 : vector<2x32xf32>
    %282 = arith.addf %280, %281 : vector<2x32xf32>
    %283 = math.tanh %282 : vector<2x32xf32>
    %284 = arith.mulf %277, %283 : vector<2x32xf32>
    %c7_i32 = arith.constant 7 : i32
    %285 = arith.index_cast %c7_i32 : i32 to index
    %c0_56 = arith.constant 0 : index
    %c0_57 = arith.constant 0 : index
    %286 = vector.load %arg1[%285, %c0_56, %c0_57] : memref<8x2x128xf32, #tpu.memory_space<vmem>>, vector<1x2x128xf32>
    %287 = vector.shape_cast %286 : vector<1x2x128xf32> to vector<2x128xf32>
    %cst_58 = arith.constant dense<0.000000e+00> : vector<2x128xf32>
    %288 = tpu.matmul %264, %0, %cst_58 {dimension_numbers = #tpu.dot_dimension_numbers<[1], [0], [0], [1], [0, 0, 1, 1], [], []>} : vector<2x32xf32>, vector<32x128xf32>, vector<2x128xf32> -> vector<2x128xf32>
    %289 = arith.addf %287, %288 : vector<2x128xf32>
    %290 = arith.negf %289 : vector<2x128xf32>
    %291 = math.exp %290 : vector<2x128xf32>
    %cst_59 = arith.constant 1.000000e+00 : f32
    %292 = vector.broadcast %cst_59 : f32 to vector<2x128xf32>
    %293 = arith.addf %292, %291 : vector<2x128xf32>
    %294 = arith.divf %292, %293 : vector<2x128xf32>
    %295 = vector.extract_strided_slice %294 {offsets = [0, 0], sizes = [2, 32], strides = [1, 1]} : vector<2x128xf32> to vector<2x32xf32>
    %296 = vector.extract_strided_slice %294 {offsets = [0, 32], sizes = [2, 32], strides = [1, 1]} : vector<2x128xf32> to vector<2x32xf32>
    %297 = vector.extract_strided_slice %294 {offsets = [0, 96], sizes = [2, 32], strides = [1, 1]} : vector<2x128xf32> to vector<2x32xf32>
    %298 = vector.extract_strided_slice %289 {offsets = [0, 64], sizes = [2, 32], strides = [1, 1]} : vector<2x128xf32> to vector<2x32xf32>
    %299 = math.tanh %298 : vector<2x32xf32>
    %300 = arith.mulf %296, %262 : vector<2x32xf32>
    %301 = arith.mulf %295, %299 : vector<2x32xf32>
    %302 = arith.addf %300, %301 : vector<2x32xf32>
    %303 = math.tanh %302 : vector<2x32xf32>
    %304 = arith.mulf %297, %303 : vector<2x32xf32>
    %cst_60 = arith.constant dense<0.000000e+00> : vector<2x128xf32>
    %305 = tpu.matmul %304, %1, %cst_60 {dimension_numbers = #tpu.dot_dimension_numbers<[1], [0], [0], [1], [0, 0, 1, 1], [], []>} : vector<2x32xf32>, vector<32x128xf32>, vector<2x128xf32> -> vector<2x128xf32>
    %cst_61 = arith.constant dense<0.000000e+00> : vector<2x128xf32>
    %306 = tpu.matmul %284, %2, %cst_61 {dimension_numbers = #tpu.dot_dimension_numbers<[1], [0], [0], [1], [0, 0, 1, 1], [], []>} : vector<2x32xf32>, vector<32x128xf32>, vector<2x128xf32> -> vector<2x128xf32>
    %307 = arith.addf %305, %306 : vector<2x128xf32>
    %308 = vector.broadcast %3 : vector<1x128xf32> to vector<2x128xf32>
    %309 = arith.addf %307, %308 : vector<2x128xf32>
    %310 = arith.negf %309 : vector<2x128xf32>
    %311 = math.exp %310 : vector<2x128xf32>
    %cst_62 = arith.constant 1.000000e+00 : f32
    %312 = vector.broadcast %cst_62 : f32 to vector<2x128xf32>
    %313 = arith.addf %312, %311 : vector<2x128xf32>
    %314 = arith.divf %312, %313 : vector<2x128xf32>
    %315 = vector.extract_strided_slice %314 {offsets = [0, 0], sizes = [2, 32], strides = [1, 1]} : vector<2x128xf32> to vector<2x32xf32>
    %316 = vector.extract_strided_slice %314 {offsets = [0, 32], sizes = [2, 32], strides = [1, 1]} : vector<2x128xf32> to vector<2x32xf32>
    %317 = vector.extract_strided_slice %314 {offsets = [0, 96], sizes = [2, 32], strides = [1, 1]} : vector<2x128xf32> to vector<2x32xf32>
    %318 = vector.extract_strided_slice %309 {offsets = [0, 64], sizes = [2, 32], strides = [1, 1]} : vector<2x128xf32> to vector<2x32xf32>
    %319 = math.tanh %318 : vector<2x32xf32>
    %320 = arith.mulf %316, %282 : vector<2x32xf32>
    %321 = arith.mulf %315, %319 : vector<2x32xf32>
    %322 = arith.addf %320, %321 : vector<2x32xf32>
    %323 = math.tanh %322 : vector<2x32xf32>
    %324 = arith.mulf %317, %323 : vector<2x32xf32>
    %c8_i32 = arith.constant 8 : i32
    %c0_63 = arith.constant 0 : index
    %c0_64 = arith.constant 0 : index
    %c0_65 = arith.constant 0 : index
    %325 = vector.load %arg6[%c0_63, %c0_64, %c0_65] : memref<2x4x64xf32, #tpu.memory_space<vmem>>, vector<2x4x64xf32>
    %cst_66 = arith.constant dense<0.000000e+00> : vector<2x64xf32>
    %326 = vector.multi_reduction <add>, %325, %cst_66 [1] : vector<2x4x64xf32> to vector<2x64xf32>
    %cst_67 = arith.constant 4.000000e+00 : f32
    %327 = vector.broadcast %cst_67 : f32 to vector<2x64xf32>
    %328 = arith.divf %326, %327 : vector<2x64xf32>
    %c0_68 = arith.constant 0 : index
    %c0_69 = arith.constant 0 : index
    %329 = vector.load %arg7[%c0_68, %c0_69] : memref<64x7xf32, #tpu.memory_space<vmem>>, vector<64x7xf32>
    %cst_70 = arith.constant dense<0.000000e+00> : vector<2x7xf32>
    %330 = tpu.matmul %328, %329, %cst_70 {dimension_numbers = #tpu.dot_dimension_numbers<[1], [0], [0], [1], [0, 0, 1, 1], [], []>} : vector<2x64xf32>, vector<64x7xf32>, vector<2x7xf32> -> vector<2x7xf32>
    %c0_71 = arith.constant 0 : index
    %c0_72 = arith.constant 0 : index
    %331 = vector.load %arg8[%c0_71, %c0_72] : memref<32x7xf32, #tpu.memory_space<vmem>>, vector<32x7xf32>
    %cst_73 = arith.constant dense<0.000000e+00> : vector<2x7xf32>
    %332 = tpu.matmul %324, %331, %cst_73 {dimension_numbers = #tpu.dot_dimension_numbers<[1], [0], [0], [1], [0, 0, 1, 1], [], []>} : vector<2x32xf32>, vector<32x7xf32>, vector<2x7xf32> -> vector<2x7xf32>
    %333 = arith.addf %330, %332 : vector<2x7xf32>
    %c0_74 = arith.constant 0 : index
    %c0_75 = arith.constant 0 : index
    %334 = vector.load %arg9[%c0_74, %c0_75] : memref<1x7xf32, #tpu.memory_space<vmem>>, vector<1x7xf32>
    %335 = vector.broadcast %334 : vector<1x7xf32> to vector<2x7xf32>
    %336 = arith.addf %333, %335 : vector<2x7xf32>
    %cst_76 = arith.constant 0.000000e+00 : f32
    %337 = vector.broadcast %cst_76 : f32 to vector<2x7xf32>
    %338 = arith.maximumf %336, %337 : vector<2x7xf32>
    %c0_77 = arith.constant 0 : index
    %c0_78 = arith.constant 0 : index
    %339 = vector.load %arg10[%c0_77, %c0_78] : memref<2x7xf32, #tpu.memory_space<vmem>>, vector<2x7xf32>
    tpu.vector_store %arg10[%c0_77, %c0_78], %338 {strides = array<i32>} : memref<2x7xf32, #tpu.memory_space<vmem>>, vector<2x7xf32>,
    return
  }
  func.func @transform_0(%arg0: i32) -> (i32, i32, i32) {
    %c0_i32 = arith.constant 0 : i32
    %c0_i32_0 = arith.constant 0 : i32
    %c0_i32_1 = arith.constant 0 : i32
    %c0_i32_2 = arith.constant 0 : i32
    return %c0_i32, %c0_i32_0, %c0_i32_1 : i32, i32, i32
  }
  func.func @transform_1(%arg0: i32) -> (i32, i32) {
    %c0_i32 = arith.constant 0 : i32
    %c0_i32_0 = arith.constant 0 : i32
    %c0_i32_1 = arith.constant 0 : i32
    return %c0_i32, %c0_i32_0 : i32, i32
  }
  func.func @transform_2(%arg0: i32) -> (i32, i32) {
    %c0_i32 = arith.constant 0 : i32
    %c0_i32_0 = arith.constant 0 : i32
    %c0_i32_1 = arith.constant 0 : i32
    return %c0_i32, %c0_i32_0 : i32, i32
  }
  func.func @transform_3(%arg0: i32) -> (i32, i32) {
    %c0_i32 = arith.constant 0 : i32
    %c0_i32_0 = arith.constant 0 : i32
    %c0_i32_1 = arith.constant 0 : i32
    return %c0_i32, %c0_i32_0 : i32, i32
  }
  func.func @transform_4(%arg0: i32) -> (i32, i32) {
    %c0_i32 = arith.constant 0 : i32
    %c0_i32_0 = arith.constant 0 : i32
    %c0_i32_1 = arith.constant 0 : i32
    return %c0_i32, %c0_i32_0 : i32, i32
  }
  func.func @transform_5(%arg0: i32) -> (i32, i32, i32) {
    %c0_i32 = arith.constant 0 : i32
    %c0_i32_0 = arith.constant 0 : i32
    %c0_i32_1 = arith.constant 0 : i32
    %c0_i32_2 = arith.constant 0 : i32
    return %c0_i32, %c0_i32_0, %c0_i32_1 : i32, i32, i32
  }
  func.func @transform_6(%arg0: i32) -> (i32, i32) {
    %c0_i32 = arith.constant 0 : i32
    %c0_i32_0 = arith.constant 0 : i32
    %c0_i32_1 = arith.constant 0 : i32
    return %c0_i32, %c0_i32_0 : i32, i32
  }
  func.func @transform_7(%arg0: i32) -> (i32, i32) {
    %c0_i32 = arith.constant 0 : i32
    %c0_i32_0 = arith.constant 0 : i32
    %c0_i32_1 = arith.constant 0 : i32
    return %c0_i32, %c0_i32_0 : i32, i32
  }
  func.func @transform_8(%arg0: i32) -> (i32, i32) {
    %c0_i32 = arith.constant 0 : i32
    %c0_i32_0 = arith.constant 0 : i32
    %c0_i32_1 = arith.constant 0 : i32
    return %c0_i32, %c0_i32_0 : i32, i32
  }
  func.func @transform_9(%arg0: i32) -> (i32, i32) {
    %c0_i32 = arith.constant 0 : i32
    %c0_i32_0 = arith.constant 0 : i32
    %c0_i32_1 = arith.constant 0 : i32
    return %c0_i32, %c0_i32_0 : i32, i32
  }
}

</mosaic_0001>

<llo_original>
// kernel: cnn_lstm_forward.4
$region0: #{cnn_lstm_forward.4}
  #allocation0 [shape = 'u32[]', space=smem, size = 0x4, offset = 0x4, fixed_abs, tag = 'smem constant byte address 0x4 - core index']
  #allocation1 [shape = 'u32[144,128]{1,0:T(1,128)}', space=vmem, size = 0x12000, scoped, tag = 'internal scratch']
  %s0 = inlined_call_operand.vmem [shape: f32[512,128], index: 0, kind: input, shape index: {}]
  %s1 = inlined_call_operand.vmem [shape: f32[128,16], index: 1, kind: input, shape index: {}]
  %s2 = inlined_call_operand.vmem [shape: f32[1,16], index: 2, kind: input, shape index: {}]
  %s3 = inlined_call_operand.vmem [shape: f32[128,16], index: 3, kind: output, shape index: {}]
  %s4 = sld [smem:[#allocation0]]
  $region22: #{cnn_lstm_forward.4} parent=0
    _
  %s6 = ssub.s32 1, %s4
  %s7 = scalar_select 0, %s6, %s4
  // Predicated region
  $region2: #{cnn_lstm_forward.4} parent=0 // pred_check
    _
  $region3: #{cnn_lstm_forward.4} parent=0 // pred_check_branch
    %9 = sbr.rel (0) target = $region5
  $region4: #{cnn_lstm_forward.4} parent=0 // pred_region
    _
  $region5: #{cnn_lstm_forward.4} parent=0 // pred_fallthru
    _
  // Predicated region
  $region6: #{cnn_lstm_forward.4} parent=0 // pred_check
    _
  $region7: #{cnn_lstm_forward.4} parent=0 // pred_check_branch
    %11 = sbr.rel (0) target = $region9
  $region8: #{cnn_lstm_forward.4} parent=0 // pred_region
    _
  $region9: #{cnn_lstm_forward.4} parent=0 // pred_fallthru
    _
  // Predicated region
  $region10: #{cnn_lstm_forward.4} parent=0 // pred_check
    _
  $region11: #{cnn_lstm_forward.4} parent=0 // pred_check_branch
    %13 = sbr.rel (0) target = $region13
  $region12: #{cnn_lstm_forward.4} parent=0 // pred_region
    _
  $region13: #{cnn_lstm_forward.4} parent=0 // pred_fallthru
    _
  %v14 = vld [vmem:[%s0] sm:$0xff]
  %v15 = vld [vmem:[%s0 + $0x8] sm:$0xff]
  %v16 = vld [vmem:[%s0 + $0x10] sm:$0xff]
  %v17 = vld [vmem:[%s0 + $0x18] sm:$0xff]
  %v18 = vld [vmem:[%s0 + $0x20] sm:$0xff]
  %v19 = vld [vmem:[%s0 + $0x28] sm:$0xff]
  %v20 = vld [vmem:[%s0 + $0x30] sm:$0xff]
  %v21 = vld [vmem:[%s0 + $0x38] sm:$0xff]
  %v22 = vld [vmem:[%s0 + $0x40] sm:$0xff]
  %v23 = vld [vmem:[%s0 + $0x48] sm:$0xff]
  %v24 = vld [vmem:[%s0 + $0x50] sm:$0xff]
  %v25 = vld [vmem:[%s0 + $0x58] sm:$0xff]
  %v26 = vld [vmem:[%s0 + $0x60] sm:$0xff]
  %v27 = vld [vmem:[%s0 + $0x68] sm:$0xff]
  %v28 = vld [vmem:[%s0 + $0x70] sm:$0xff]
  %v29 = vld [vmem:[%s0 + $0x78] sm:$0xff]
  %v30 = vld [vmem:[%s0 + $0x80] sm:$0xff]
  %v31 = vld [vmem:[%s0 + $0x88] sm:$0xff]
  %v32 = vld [vmem:[%s0 + $0x90] sm:$0xff]
  %v33 = vld [vmem:[%s0 + $0x98] sm:$0xff]
  %v34 = vld [vmem:[%s0 + $0xa0] sm:$0xff]
  %v35 = vld [vmem:[%s0 + $0xa8] sm:$0xff]
  %v36 = vld [vmem:[%s0 + $0xb0] sm:$0xff]
  %v37 = vld [vmem:[%s0 + $0xb8] sm:$0xff]
  %v38 = vld [vmem:[%s0 + $0xc0] sm:$0xff]
  %v39 = vld [vmem:[%s0 + $0xc8] sm:$0xff]
  %v40 = vld [vmem:[%s0 + $0xd0] sm:$0xff]
  %v41 = vld [vmem:[%s0 + $0xd8] sm:$0xff]
  %v42 = vld [vmem:[%s0 + $0xe0] sm:$0xff]
  %v43 = vld [vmem:[%s0 + $0xe8] sm:$0xff]
  %v44 = vld [vmem:[%s0 + $0xf0] sm:$0xff]
  %v45 = vld [vmem:[%s0 + $0xf8] sm:$0xff]
  %v46 = vld [vmem:[%s0 + $0x100] sm:$0xff]
  %v47 = vld [vmem:[%s0 + $0x108] sm:$0xff]
  %v48 = vld [vmem:[%s0 + $0x110] sm:$0xff]
  %v49 = vld [vmem:[%s0 + $0x118] sm:$0xff]
  %v50 = vld [vmem:[%s0 + $0x120] sm:$0xff]
  %v51 = vld [vmem:[%s0 + $0x128] sm:$0xff]
  %v52 = vld [vmem:[%s0 + $0x130] sm:$0xff]
  %v53 = vld [vmem:[%s0 + $0x138] sm:$0xff]
  %v54 = vld [vmem:[%s0 + $0x140] sm:$0xff]
  %v55 = vld [vmem:[%s0 + $0x148] sm:$0xff]
  %v56 = vld [vmem:[%s0 + $0x150] sm:$0xff]
  %v57 = vld [vmem:[%s0 + $0x158] sm:$0xff]
  %v58 = vld [vmem:[%s0 + $0x160] sm:$0xff]
  %v59 = vld [vmem:[%s0 + $0x168] sm:$0xff]
  %v60 = vld [vmem:[%s0 + $0x170] sm:$0xff]
  %v61 = vld [vmem:[%s0 + $0x178] sm:$0xff]
  %v62 = vld [vmem:[%s0 + $0x180] sm:$0xff]
  %v63 = vld [vmem:[%s0 + $0x188] sm:$0xff]
  %v64 = vld [vmem:[%s0 + $0x190] sm:$0xff]
  %v65 = vld [vmem:[%s0 + $0x198] sm:$0xff]
  %v66 = vld [vmem:[%s0 + $0x1a0] sm:$0xff]
  %v67 = vld [vmem:[%s0 + $0x1a8] sm:$0xff]
  %v68 = vld [vmem:[%s0 + $0x1b0] sm:$0xff]
  %v69 = vld [vmem:[%s0 + $0x1b8] sm:$0xff]
  %v70 = vld [vmem:[%s0 + $0x1c0] sm:$0xff]
  %v71 = vld [vmem:[%s0 + $0x1c8] sm:$0xff]
  %v72 = vld [vmem:[%s0 + $0x1d0] sm:$0xff]
  %v73 = vld [vmem:[%s0 + $0x1d8] sm:$0xff]
  %v74 = vld [vmem:[%s0 + $0x1e0] sm:$0xff]
  %v75 = vld [vmem:[%s0 + $0x1e8] sm:$0xff]
  %v76 = vld [vmem:[%s0 + $0x1f0] sm:$0xff]
  %v77 = vld [vmem:[%s0 + $0x1f8] sm:$0xff]
  %v78 = vld [vmem:[%s1] sm:$0xff]
  %v79 = vld [vmem:[%s1 + $0x8] sm:$0xff]
  %v80 = vld [vmem:[%s1 + $0x10] sm:$0xff]
  %v81 = vld [vmem:[%s1 + $0x18] sm:$0xff]
  %v82 = vld [vmem:[%s1 + $0x20] sm:$0xff]
  %v83 = vld [vmem:[%s1 + $0x28] sm:$0xff]
  %v84 = vld [vmem:[%s1 + $0x30] sm:$0xff]
  %v85 = vld [vmem:[%s1 + $0x38] sm:$0xff]
  %v86 = vld [vmem:[%s1 + $0x40] sm:$0xff]
  %v87 = vld [vmem:[%s1 + $0x48] sm:$0xff]
  %v88 = vld [vmem:[%s1 + $0x50] sm:$0xff]
  %v89 = vld [vmem:[%s1 + $0x58] sm:$0xff]
  %v90 = vld [vmem:[%s1 + $0x60] sm:$0xff]
  %v91 = vld [vmem:[%s1 + $0x68] sm:$0xff]
  %v92 = vld [vmem:[%s1 + $0x70] sm:$0xff]
  %v93 = vld [vmem:[%s1 + $0x78] sm:$0xff]
  %94 = vmatprep.subr.mxu0 0.0
  %95 = vmatpush1.msra.mxu0 %v93
  %96 = vmatprep.subr.mxu0 0.0
  %97 = vmatpush1.msra.mxu0 %v92
  %98 = vmatprep.subr.mxu0 0.0
  %99 = vmatpush1.msra.mxu0 %v91
  %100 = vmatprep.subr.mxu0 0.0
  %101 = vmatpush1.msra.mxu0 %v90
  %102 = vmatprep.subr.mxu0 0.0
  %103 = vmatpush1.msra.mxu0 %v89
  %104 = vmatprep.subr.mxu0 0.0
  %105 = vmatpush1.msra.mxu0 %v88
  %106 = vmatprep.subr.mxu0 0.0
  %107 = vmatpush1.msra.mxu0 %v87
  %108 = vmatprep.subr.mxu0 0.0
  %109 = vmatpush1.msra.mxu0 %v86
  %110 = vmatprep.subr.mxu0 0.0
  %111 = vmatpush1.msra.mxu0 %v85
  %112 = vmatprep.subr.mxu0 0.0
  %113 = vmatpush1.msra.mxu0 %v84
  %114 = vmatprep.subr.mxu0 0.0
  %115 = vmatpush1.msra.mxu0 %v83
  %116 = vmatprep.subr.mxu0 0.0
  %117 = vmatpush1.msra.mxu0 %v82
  %118 = vmatprep.subr.mxu0 0.0
  %119 = vmatpush1.msra.mxu0 %v81
  %120 = vmatprep.subr.mxu0 0.0
  %121 = vmatpush1.msra.mxu0 %v80
  %122 = vmatprep.subr.mxu0 0.0
  %123 = vmatpush1.msra.mxu0 %v79
  %124 = vmatprep.subr.mxu0 0.0
  %125 = vmatpush1.msra.mxu0 %v78
  %126 = vmatprep.subr.mxu0 0.0
  %127 = vmatpush2.msra.mxu0 0.0
  %128 = vmatprep.subr.mxu0 0.0
  %129 = vmatpush2.msra.mxu0 0.0
  %130 = vmatprep.subr.mxu0 0.0
  %131 = vmatpush2.msra.mxu0 0.0
  %132 = vmatprep.subr.mxu0 0.0
  %133 = vmatpush2.msra.mxu0 0.0
  %134 = vmatprep.subr.mxu0 0.0
  %135 = vmatpush2.msra.mxu0 0.0
  %136 = vmatprep.subr.mxu0 0.0
  %137 = vmatpush2.msra.mxu0 0.0
  %138 = vmatprep.subr.mxu0 0.0
  %139 = vmatpush2.msra.mxu0 0.0
  %140 = vmatprep.subr.mxu0 0.0
  %141 = vmatpush2.msra.mxu0 0.0
  %142 = vmatprep.subr.mxu0 0.0
  %143 = vmatpush2.msra.mxu0 0.0
  %144 = vmatprep.subr.mxu0 0.0
  %145 = vmatpush2.msra.mxu0 0.0
  %146 = vmatprep.subr.mxu0 0.0
  %147 = vmatpush2.msra.mxu0 0.0
  %148 = vmatprep.subr.mxu0 0.0
  %149 = vmatpush2.msra.mxu0 0.0
  %150 = vmatprep.subr.mxu0 0.0
  %151 = vmatpush2.msra.mxu0 0.0
  %152 = vmatprep.subr.mxu0 0.0
  %153 = vmatpush2.msra.mxu0 0.0
  %154 = vmatprep.subr.mxu0 0.0
  %155 = vmatpush2.msra.mxu0 0.0
  %156 = vmatprep.subr.mxu0 0.0
  %157 = vmatpush2.msra.mxu0 0.0
  %158 = vmatprep.mubr.f32.mxu0 0.0
  %159 = vmatmul.mubr.f32.gmra.mxu0 %v14
  %v160 = vpop.f32.mrf.mxu0
  %v161 = vadd.f32 0.0, %v160
  %v162 = vpop.f32.mrf.mxu0
  %163 = vmatprep.mubr.f32.mxu0 0.0
  %164 = vmatmul.mubr.f32.gmra.mxu0 %v15
  %v165 = vpop.f32.mrf.mxu0
  %v166 = vadd.f32 0.0, %v165
  %v167 = vpop.f32.mrf.mxu0
  %168 = vmatprep.mubr.f32.mxu0 0.0
  %169 = vmatmul.mubr.f32.gmra.mxu0 %v16
  %v170 = vpop.f32.mrf.mxu0
  %v171 = vadd.f32 0.0, %v170
  %v172 = vpop.f32.mrf.mxu0
  %173 = vmatprep.mubr.f32.mxu0 0.0
  %174 = vmatmul.mubr.f32.gmra.mxu0 %v17
  %v175 = vpop.f32.mrf.mxu0
  %v176 = vadd.f32 0.0, %v175
  %v177 = vpop.f32.mrf.mxu0
  %178 = vmatprep.mubr.f32.mxu0 0.0
  %179 = vmatmul.mubr.f32.gmra.mxu0 %v18
  %v180 = vpop.f32.mrf.mxu0
  %v181 = vadd.f32 0.0, %v180
  %v182 = vpop.f32.mrf.mxu0
  %183 = vmatprep.mubr.f32.mxu0 0.0
  %184 = vmatmul.mubr.f32.gmra.mxu0 %v19
  %v185 = vpop.f32.mrf.mxu0
  %v186 = vadd.f32 0.0, %v185
  %v187 = vpop.f32.mrf.mxu0
  %188 = vmatprep.mubr.f32.mxu0 0.0
  %189 = vmatmul.mubr.f32.gmra.mxu0 %v20
  %v190 = vpop.f32.mrf.mxu0
  %v191 = vadd.f32 0.0, %v190
  %v192 = vpop.f32.mrf.mxu0
  %193 = vmatprep.mubr.f32.mxu0 0.0
  %194 = vmatmul.mubr.f32.gmra.mxu0 %v21
  %v195 = vpop.f32.mrf.mxu0
  %v196 = vadd.f32 0.0, %v195
  %v197 = vpop.f32.mrf.mxu0
  %198 = vmatprep.mubr.f32.mxu0 0.0
  %199 = vmatmul.mubr.f32.gmra.mxu0 %v22
  %v200 = vpop.f32.mrf.mxu0
  %v201 = vadd.f32 0.0, %v200
  %v202 = vpop.f32.mrf.mxu0
  %203 = vmatprep.mubr.f32.mxu0 0.0
  %204 = vmatmul.mubr.f32.gmra.mxu0 %v23
  %v205 = vpop.f32.mrf.mxu0
  %v206 = vadd.f32 0.0, %v205
  %v207 = vpop.f32.mrf.mxu0
  %208 = vmatprep.mubr.f32.mxu0 0.0
  %209 = vmatmul.mubr.f32.gmra.mxu0 %v24
  %v210 = vpop.f32.mrf.mxu0
  %v211 = vadd.f32 0.0, %v210
  %v212 = vpop.f32.mrf.mxu0
  %213 = vmatprep.mubr.f32.mxu0 0.0
  %214 = vmatmul.mubr.f32.gmra.mxu0 %v25
  %v215 = vpop.f32.mrf.mxu0
  %v216 = vadd.f32 0.0, %v215
  %v217 = vpop.f32.mrf.mxu0
  %218 = vmatprep.mubr.f32.mxu0 0.0
  %219 = vmatmul.mubr.f32.gmra.mxu0 %v26
  %v220 = vpop.f32.mrf.mxu0
  %v221 = vadd.f32 0.0, %v220
  %v222 = vpop.f32.mrf.mxu0
  %223 = vmatprep.mubr.f32.mxu0 0.0
  %224 = vmatmul.mubr.f32.gmra.mxu0 %v27
  %v225 = vpop.f32.mrf.mxu0
  %v226 = vadd.f32 0.0, %v225
  %v227 = vpop.f32.mrf.mxu0
  %228 = vmatprep.mubr.f32.mxu0 0.0
  %229 = vmatmul.mubr.f32.gmra.mxu0 %v28
  %v230 = vpop.f32.mrf.mxu0
  %v231 = vadd.f32 0.0, %v230
  %v232 = vpop.f32.mrf.mxu0
  %233 = vmatprep.mubr.f32.mxu0 0.0
  %234 = vmatmul.mubr.f32.gmra.mxu0 %v29
  %v235 = vpop.f32.mrf.mxu0
  %v236 = vadd.f32 0.0, %v235
  %v237 = vpop.f32.mrf.mxu0
  %238 = vmatprep.mubr.f32.mxu0 0.0
  %239 = vmatmul.mubr.f32.gmra.mxu0 %v30
  %v240 = vpop.f32.mrf.mxu0
  %v241 = vadd.f32 0.0, %v240
  %v242 = vpop.f32.mrf.mxu0
  %243 = vmatprep.mubr.f32.mxu0 0.0
  %244 = vmatmul.mubr.f32.gmra.mxu0 %v31
  %v245 = vpop.f32.mrf.mxu0
  %v246 = vadd.f32 0.0, %v245
  %v247 = vpop.f32.mrf.mxu0
  %248 = vmatprep.mubr.f32.mxu0 0.0
  %249 = vmatmul.mubr.f32.gmra.mxu0 %v32
  %v250 = vpop.f32.mrf.mxu0
  %v251 = vadd.f32 0.0, %v250
  %v252 = vpop.f32.mrf.mxu0
  %253 = vmatprep.mubr.f32.mxu0 0.0
  %254 = vmatmul.mubr.f32.gmra.mxu0 %v33
  %v255 = vpop.f32.mrf.mxu0
  %v256 = vadd.f32 0.0, %v255
  %v257 = vpop.f32.mrf.mxu0
  %258 = vmatprep.mubr.f32.mxu0 0.0
  %259 = vmatmul.mubr.f32.gmra.mxu0 %v34
  %v260 = vpop.f32.mrf.mxu0
  %v261 = vadd.f32 0.0, %v260
  %v262 = vpop.f32.mrf.mxu0
  %263 = vmatprep.mubr.f32.mxu0 0.0
  %264 = vmatmul.mubr.f32.gmra.mxu0 %v35
  %v265 = vpop.f32.mrf.mxu0
  %v266 = vadd.f32 0.0, %v265
  %v267 = vpop.f32.mrf.mxu0
  %268 = vmatprep.mubr.f32.mxu0 0.0
  %269 = vmatmul.mubr.f32.gmra.mxu0 %v36
  %v270 = vpop.f32.mrf.mxu0
  %v271 = vadd.f32 0.0, %v270
  %v272 = vpop.f32.mrf.mxu0
  %273 = vmatprep.mubr.f32.mxu0 0.0
  %274 = vmatmul.mubr.f32.gmra.mxu0 %v37
  %v275 = vpop.f32.mrf.mxu0
  %v276 = vadd.f32 0.0, %v275
  %v277 = vpop.f32.mrf.mxu0
  %278 = vmatprep.mubr.f32.mxu0 0.0
  %279 = vmatmul.mubr.f32.gmra.mxu0 %v38
  %v280 = vpop.f32.mrf.mxu0
  %v281 = vadd.f32 0.0, %v280
  %v282 = vpop.f32.mrf.mxu0
  %283 = vmatprep.mubr.f32.mxu0 0.0
  %284 = vmatmul.mubr.f32.gmra.mxu0 %v39
  %v285 = vpop.f32.mrf.mxu0
  %v286 = vadd.f32 0.0, %v285
  %v287 = vpop.f32.mrf.mxu0
  %288 = vmatprep.mubr.f32.mxu0 0.0
  %289 = vmatmul.mubr.f32.gmra.mxu0 %v40
  %v290 = vpop.f32.mrf.mxu0
  %v291 = vadd.f32 0.0, %v290
  %v292 = vpop.f32.mrf.mxu0
  %293 = vmatprep.mubr.f32.mxu0 0.0
  %294 = vmatmul.mubr.f32.gmra.mxu0 %v41
  %v295 = vpop.f32.mrf.mxu0
  %v296 = vadd.f32 0.0, %v295
  %v297 = vpop.f32.mrf.mxu0
  %298 = vmatprep.mubr.f32.mxu0 0.0
  %299 = vmatmul.mubr.f32.gmra.mxu0 %v42
  %v300 = vpop.f32.mrf.mxu0
  %v301 = vadd.f32 0.0, %v300
  %v302 = vpop.f32.mrf.mxu0
  %303 = vmatprep.mubr.f32.mxu0 0.0
  %304 = vmatmul.mubr.f32.gmra.mxu0 %v43
  %v305 = vpop.f32.mrf.mxu0
  %v306 = vadd.f32 0.0, %v305
  %v307 = vpop.f32.mrf.mxu0
  %308 = vmatprep.mubr.f32.mxu0 0.0
  %309 = vmatmul.mubr.f32.gmra.mxu0 %v44
  %v310 = vpop.f32.mrf.mxu0
  %v311 = vadd.f32 0.0, %v310
  %v312 = vpop.f32.mrf.mxu0
  %313 = vmatprep.mubr.f32.mxu0 0.0
  %314 = vmatmul.mubr.f32.gmra.mxu0 %v45
  %v315 = vpop.f32.mrf.mxu0
  %v316 = vadd.f32 0.0, %v315
  %v317 = vpop.f32.mrf.mxu0
  %318 = vmatprep.mubr.f32.mxu0 0.0
  %319 = vmatmul.mubr.f32.gmra.mxu0 %v46
  %v320 = vpop.f32.mrf.mxu0
  %v321 = vadd.f32 0.0, %v320
  %v322 = vpop.f32.mrf.mxu0
  %323 = vmatprep.mubr.f32.mxu0 0.0
  %324 = vmatmul.mubr.f32.gmra.mxu0 %v47
  %v325 = vpop.f32.mrf.mxu0
  %v326 = vadd.f32 0.0, %v325
  %v327 = vpop.f32.mrf.mxu0
  %328 = vmatprep.mubr.f32.mxu0 0.0
  %329 = vmatmul.mubr.f32.gmra.mxu0 %v48
  %v330 = vpop.f32.mrf.mxu0
  %v331 = vadd.f32 0.0, %v330
  %v332 = vpop.f32.mrf.mxu0
  %333 = vmatprep.mubr.f32.mxu0 0.0
  %334 = vmatmul.mubr.f32.gmra.mxu0 %v49
  %v335 = vpop.f32.mrf.mxu0
  %v336 = vadd.f32 0.0, %v335
  %v337 = vpop.f32.mrf.mxu0
  %338 = vmatprep.mubr.f32.mxu0 0.0
  %339 = vmatmul.mubr.f32.gmra.mxu0 %v50
  %v340 = vpop.f32.mrf.mxu0
  %v341 = vadd.f32 0.0, %v340
  %v342 = vpop.f32.mrf.mxu0
  %343 = vmatprep.mubr.f32.mxu0 0.0
  %344 = vmatmul.mubr.f32.gmra.mxu0 %v51
  %v345 = vpop.f32.mrf.mxu0
  %v346 = vadd.f32 0.0, %v345
  %v347 = vpop.f32.mrf.mxu0
  %348 = vmatprep.mubr.f32.mxu0 0.0
  %349 = vmatmul.mubr.f32.gmra.mxu0 %v52
  %v350 = vpop.f32.mrf.mxu0
  %v351 = vadd.f32 0.0, %v350
  %v352 = vpop.f32.mrf.mxu0
  %353 = vmatprep.mubr.f32.mxu0 0.0
  %354 = vmatmul.mubr.f32.gmra.mxu0 %v53
  %v355 = vpop.f32.mrf.mxu0
  %v356 = vadd.f32 0.0, %v355
  %v357 = vpop.f32.mrf.mxu0
  %358 = vmatprep.mubr.f32.mxu0 0.0
  %359 = vmatmul.mubr.f32.gmra.mxu0 %v54
  %v360 = vpop.f32.mrf.mxu0
  %v361 = vadd.f32 0.0, %v360
  %v362 = vpop.f32.mrf.mxu0
  %363 = vmatprep.mubr.f32.mxu0 0.0
  %364 = vmatmul.mubr.f32.gmra.mxu0 %v55
  %v365 = vpop.f32.mrf.mxu0
  %v366 = vadd.f32 0.0, %v365
  %v367 = vpop.f32.mrf.mxu0
  %368 = vmatprep.mubr.f32.mxu0 0.0
  %369 = vmatmul.mubr.f32.gmra.mxu0 %v56
  %v370 = vpop.f32.mrf.mxu0
  %v371 = vadd.f32 0.0, %v370
  %v372 = vpop.f32.mrf.mxu0
  %373 = vmatprep.mubr.f32.mxu0 0.0
  %374 = vmatmul.mubr.f32.gmra.mxu0 %v57
  %v375 = vpop.f32.mrf.mxu0
  %v376 = vadd.f32 0.0, %v375
  %v377 = vpop.f32.mrf.mxu0
  %378 = vmatprep.mubr.f32.mxu0 0.0
  %379 = vmatmul.mubr.f32.gmra.mxu0 %v58
  %v380 = vpop.f32.mrf.mxu0
  %v381 = vadd.f32 0.0, %v380
  %v382 = vpop.f32.mrf.mxu0
  %383 = vmatprep.mubr.f32.mxu0 0.0
  %384 = vmatmul.mubr.f32.gmra.mxu0 %v59
  %v385 = vpop.f32.mrf.mxu0
  %v386 = vadd.f32 0.0, %v385
  %v387 = vpop.f32.mrf.mxu0
  %388 = vmatprep.mubr.f32.mxu0 0.0
  %389 = vmatmul.mubr.f32.gmra.mxu0 %v60
  %v390 = vpop.f32.mrf.mxu0
  %v391 = vadd.f32 0.0, %v390
  %v392 = vpop.f32.mrf.mxu0
  %393 = vmatprep.mubr.f32.mxu0 0.0
  %394 = vmatmul.mubr.f32.gmra.mxu0 %v61
  %v395 = vpop.f32.mrf.mxu0
  %v396 = vadd.f32 0.0, %v395
  %v397 = vpop.f32.mrf.mxu0
  %398 = vmatprep.mubr.f32.mxu0 0.0
  %399 = vmatmul.mubr.f32.gmra.mxu0 %v62
  %v400 = vpop.f32.mrf.mxu0
  %v401 = vadd.f32 0.0, %v400
  %v402 = vpop.f32.mrf.mxu0
  %403 = vmatprep.mubr.f32.mxu0 0.0
  %404 = vmatmul.mubr.f32.gmra.mxu0 %v63
  %v405 = vpop.f32.mrf.mxu0
  %v406 = vadd.f32 0.0, %v405
  %v407 = vpop.f32.mrf.mxu0
  %408 = vmatprep.mubr.f32.mxu0 0.0
  %409 = vmatmul.mubr.f32.gmra.mxu0 %v64
  %v410 = vpop.f32.mrf.mxu0
  %v411 = vadd.f32 0.0, %v410
  %v412 = vpop.f32.mrf.mxu0
  %413 = vmatprep.mubr.f32.mxu0 0.0
  %414 = vmatmul.mubr.f32.gmra.mxu0 %v65
  %v415 = vpop.f32.mrf.mxu0
  %v416 = vadd.f32 0.0, %v415
  %v417 = vpop.f32.mrf.mxu0
  %418 = vmatprep.mubr.f32.mxu0 0.0
  %419 = vmatmul.mubr.f32.gmra.mxu0 %v66
  %v420 = vpop.f32.mrf.mxu0
  %v421 = vadd.f32 0.0, %v420
  %v422 = vpop.f32.mrf.mxu0
  %423 = vmatprep.mubr.f32.mxu0 0.0
  %424 = vmatmul.mubr.f32.gmra.mxu0 %v67
  %v425 = vpop.f32.mrf.mxu0
  %v426 = vadd.f32 0.0, %v425
  %v427 = vpop.f32.mrf.mxu0
  %428 = vmatprep.mubr.f32.mxu0 0.0
  %429 = vmatmul.mubr.f32.gmra.mxu0 %v68
  %v430 = vpop.f32.mrf.mxu0
  %v431 = vadd.f32 0.0, %v430
  %v432 = vpop.f32.mrf.mxu0
  %433 = vmatprep.mubr.f32.mxu0 0.0
  %434 = vmatmul.mubr.f32.gmra.mxu0 %v69
  %v435 = vpop.f32.mrf.mxu0
  %v436 = vadd.f32 0.0, %v435
  %v437 = vpop.f32.mrf.mxu0
  %438 = vmatprep.mubr.f32.mxu0 0.0
  %439 = vmatmul.mubr.f32.gmra.mxu0 %v70
  %v440 = vpop.f32.mrf.mxu0
  %v441 = vadd.f32 0.0, %v440
  %v442 = vpop.f32.mrf.mxu0
  %443 = vmatprep.mubr.f32.mxu0 0.0
  %444 = vmatmul.mubr.f32.gmra.mxu0 %v71
  %v445 = vpop.f32.mrf.mxu0
  %v446 = vadd.f32 0.0, %v445
  %v447 = vpop.f32.mrf.mxu0
  %448 = vmatprep.mubr.f32.mxu0 0.0
  %449 = vmatmul.mubr.f32.gmra.mxu0 %v72
  %v450 = vpop.f32.mrf.mxu0
  %v451 = vadd.f32 0.0, %v450
  %v452 = vpop.f32.mrf.mxu0
  %453 = vmatprep.mubr.f32.mxu0 0.0
  %454 = vmatmul.mubr.f32.gmra.mxu0 %v73
  %v455 = vpop.f32.mrf.mxu0
  %v456 = vadd.f32 0.0, %v455
  %v457 = vpop.f32.mrf.mxu0
  %458 = vmatprep.mubr.f32.mxu0 0.0
  %459 = vmatmul.mubr.f32.gmra.mxu0 %v74
  %v460 = vpop.f32.mrf.mxu0
  %v461 = vadd.f32 0.0, %v460
  %v462 = vpop.f32.mrf.mxu0
  %463 = vmatprep.mubr.f32.mxu0 0.0
  %464 = vmatmul.mubr.f32.gmra.mxu0 %v75
  %v465 = vpop.f32.mrf.mxu0
  %v466 = vadd.f32 0.0, %v465
  %v467 = vpop.f32.mrf.mxu0
  %468 = vmatprep.mubr.f32.mxu0 0.0
  %469 = vmatmul.mubr.f32.gmra.mxu0 %v76
  %v470 = vpop.f32.mrf.mxu0
  %v471 = vadd.f32 0.0, %v470
  %v472 = vpop.f32.mrf.mxu0
  %473 = vmatprep.mubr.f32.mxu0 0.0
  %474 = vmatmul.mubr.f32.gmra.mxu0 %v77
  %v475 = vpop.f32.mrf.mxu0
  %v476 = vadd.f32 0.0, %v475
  %v477 = vpop.f32.mrf.mxu0
  %478 = vdwg.mxu0
  %v479 = vmax.f32 %v161, %v241
  %v480 = vmax.f32 %v166, %v246
  %v481 = vmax.f32 %v171, %v251
  %v482 = vmax.f32 %v176, %v256
  %v483 = vmax.f32 %v181, %v261
  %v484 = vmax.f32 %v186, %v266
  %v485 = vmax.f32 %v191, %v271
  %v486 = vmax.f32 %v196, %v276
  %v487 = vmax.f32 %v201, %v281
  %v488 = vmax.f32 %v206, %v286
  %v489 = vmax.f32 %v211, %v291
  %v490 = vmax.f32 %v216, %v296
  %v491 = vmax.f32 %v221, %v301
  %v492 = vmax.f32 %v226, %v306
  %v493 = vmax.f32 %v231, %v311
  %v494 = vmax.f32 %v236, %v316
  %v495 = vmax.f32 %v321, %v401
  %v496 = vmax.f32 %v326, %v406
  %v497 = vmax.f32 %v331, %v411
  %v498 = vmax.f32 %v336, %v416
  %v499 = vmax.f32 %v341, %v421
  %v500 = vmax.f32 %v346, %v426
  %v501 = vmax.f32 %v351, %v431
  %v502 = vmax.f32 %v356, %v436
  %v503 = vmax.f32 %v361, %v441
  %v504 = vmax.f32 %v366, %v446
  %v505 = vmax.f32 %v371, %v451
  %v506 = vmax.f32 %v376, %v456
  %v507 = vmax.f32 %v381, %v461
  %v508 = vmax.f32 %v386, %v466
  %v509 = vmax.f32 %v391, %v471
  %v510 = vmax.f32 %v396, %v476
  %v511 = vmax.f32 %v479, %v495
  %v512 = vmax.f32 %v480, %v496
  %v513 = vmax.f32 %v481, %v497
  %v514 = vmax.f32 %v482, %v498
  %v515 = vmax.f32 %v483, %v499
  %v516 = vmax.f32 %v484, %v500
  %v517 = vmax.f32 %v485, %v501
  %v518 = vmax.f32 %v486, %v502
  %v519 = vmax.f32 %v487, %v503
  %v520 = vmax.f32 %v488, %v504
  %v521 = vmax.f32 %v489, %v505
  %v522 = vmax.f32 %v490, %v506
  %v523 = vmax.f32 %v491, %v507
  %v524 = vmax.f32 %v492, %v508
  %v525 = vmax.f32 %v493, %v509
  %v526 = vmax.f32 %v494, %v510
  %v527 = vld [vmem:[%s2] sm:$0x1]
  %v529 = vlaneseq
  %v530 = vshrl.u32 %v529, 7
  %v531 = vsub.s32 0, %v530
  %v532 = vrot.slane %v527, %v531
  %v534 = vadd.f32 %v511, %v532
  %v535 = vadd.f32 %v512, %v532
  %v536 = vadd.f32 %v513, %v532
  %v537 = vadd.f32 %v514, %v532
  %v538 = vadd.f32 %v515, %v532
  %v539 = vadd.f32 %v516, %v532
  %v540 = vadd.f32 %v517, %v532
  %v541 = vadd.f32 %v518, %v532
  %v542 = vadd.f32 %v519, %v532
  %v543 = vadd.f32 %v520, %v532
  %v544 = vadd.f32 %v521, %v532
  %v545 = vadd.f32 %v522, %v532
  %v546 = vadd.f32 %v523, %v532
  %v547 = vadd.f32 %v524, %v532
  %v548 = vadd.f32 %v525, %v532
  %v549 = vadd.f32 %v526, %v532
  %v550 = vmax.f32 %v534, 0.0
  %v551 = vmax.f32 %v535, 0.0
  %v552 = vmax.f32 %v536, 0.0
  %v553 = vmax.f32 %v537, 0.0
  %v554 = vmax.f32 %v538, 0.0
  %v555 = vmax.f32 %v539, 0.0
  %v556 = vmax.f32 %v540, 0.0
  %v557 = vmax.f32 %v541, 0.0
  %v558 = vmax.f32 %v542, 0.0
  %v559 = vmax.f32 %v543, 0.0
  %v560 = vmax.f32 %v544, 0.0
  %v561 = vmax.f32 %v545, 0.0
  %v562 = vmax.f32 %v546, 0.0
  %v563 = vmax.f32 %v547, 0.0
  %v564 = vmax.f32 %v548, 0.0
  %v565 = vmax.f32 %v549, 0.0
  %vm566 = vcmask 130048
  %567 = vst.msk [vmem:[%s3] sm:$0xff] %vm566, %v550
  %568 = vst.msk [vmem:[%s3 + $0x8] sm:$0xff] %vm566, %v551
  %569 = vst.msk [vmem:[%s3 + $0x10] sm:$0xff] %vm566, %v552
  %570 = vst.msk [vmem:[%s3 + $0x18] sm:$0xff] %vm566, %v553
  %571 = vst.msk [vmem:[%s3 + $0x20] sm:$0xff] %vm566, %v554
  %572 = vst.msk [vmem:[%s3 + $0x28] sm:$0xff] %vm566, %v555
  %573 = vst.msk [vmem:[%s3 + $0x30] sm:$0xff] %vm566, %v556
  %574 = vst.msk [vmem:[%s3 + $0x38] sm:$0xff] %vm566, %v557
  %575 = vst.msk [vmem:[%s3 + $0x40] sm:$0xff] %vm566, %v558
  %576 = vst.msk [vmem:[%s3 + $0x48] sm:$0xff] %vm566, %v559
  %577 = vst.msk [vmem:[%s3 + $0x50] sm:$0xff] %vm566, %v560
  %578 = vst.msk [vmem:[%s3 + $0x58] sm:$0xff] %vm566, %v561
  %579 = vst.msk [vmem:[%s3 + $0x60] sm:$0xff] %vm566, %v562
  %580 = vst.msk [vmem:[%s3 + $0x68] sm:$0xff] %vm566, %v563
  %581 = vst.msk [vmem:[%s3 + $0x70] sm:$0xff] %vm566, %v564
  %582 = vst.msk [vmem:[%s3 + $0x78] sm:$0xff] %vm566, %v565
  // Predicated region
  $region14: #{cnn_lstm_forward.4} parent=0 // pred_check
    _
  $region15: #{cnn_lstm_forward.4} parent=0 // pred_check_branch
    %584 = sbr.rel (0) target = $region17
  $region16: #{cnn_lstm_forward.4} parent=0 // pred_region
    _
  $region17: #{cnn_lstm_forward.4} parent=0 // pred_fallthru
    _
  // Predicated region
  $region18: #{cnn_lstm_forward.4} parent=0 // pred_check
    _
  $region19: #{cnn_lstm_forward.4} parent=0 // pred_check_branch
    %586 = sbr.rel (0) target = $region21
  $region20: #{cnn_lstm_forward.4} parent=0 // pred_region
    _
  $region21: #{cnn_lstm_forward.4} parent=0 // pred_fallthru
    _

// kernel: cnn_lstm_forward.5
$region0: #{cnn_lstm_forward.5}
  #allocation0 [shape = 'u32[]', space=smem, size = 0x4, offset = 0x4, fixed_abs, tag = 'smem constant byte address 0x4 - core index']
  #allocation1 [shape = 'u32[144,128]{1,0:T(1,128)}', space=vmem, size = 0x12000, scoped, tag = 'internal scratch']
  %s0 = inlined_call_operand.vmem [shape: f32[128,256], index: 0, kind: input, shape index: {}]
  %s1 = inlined_call_operand.vmem [shape: f32[256,32], index: 1, kind: input, shape index: {}]
  %s2 = inlined_call_operand.vmem [shape: f32[1,32], index: 2, kind: input, shape index: {}]
  %s3 = inlined_call_operand.vmem [shape: f32[32,32], index: 3, kind: output, shape index: {}]
  %s4 = sld [smem:[#allocation0]]
  $region22: #{cnn_lstm_forward.5} parent=0
    _
  %s6 = ssub.s32 1, %s4
  %s7 = scalar_select 0, %s6, %s4
  // Predicated region
  $region2: #{cnn_lstm_forward.5} parent=0 // pred_check
    _
  $region3: #{cnn_lstm_forward.5} parent=0 // pred_check_branch
    %9 = sbr.rel (0) target = $region5
  $region4: #{cnn_lstm_forward.5} parent=0 // pred_region
    _
  $region5: #{cnn_lstm_forward.5} parent=0 // pred_fallthru
    _
  // Predicated region
  $region6: #{cnn_lstm_forward.5} parent=0 // pred_check
    _
  $region7: #{cnn_lstm_forward.5} parent=0 // pred_check_branch
    %11 = sbr.rel (0) target = $region9
  $region8: #{cnn_lstm_forward.5} parent=0 // pred_region
    _
  $region9: #{cnn_lstm_forward.5} parent=0 // pred_fallthru
    _
  // Predicated region
  $region10: #{cnn_lstm_forward.5} parent=0 // pred_check
    _
  $region11: #{cnn_lstm_forward.5} parent=0 // pred_check_branch
    %13 = sbr.rel (0) target = $region13
  $region12: #{cnn_lstm_forward.5} parent=0 // pred_region
    _
  $region13: #{cnn_lstm_forward.5} parent=0 // pred_fallthru
    _
  %v14 = vld [vmem:[%s0] sm:$0xff]
  %v15 = vld [vmem:[%s0 + $0x8] sm:$0xff]
  %v16 = vld [vmem:[%s0 + $0x10] sm:$0xff]
  %v17 = vld [vmem:[%s0 + $0x18] sm:$0xff]
  %v18 = vld [vmem:[%s0 + $0x20] sm:$0xff]
  %v19 = vld [vmem:[%s0 + $0x28] sm:$0xff]
  %v20 = vld [vmem:[%s0 + $0x30] sm:$0xff]
  %v21 = vld [vmem:[%s0 + $0x38] sm:$0xff]
  %v22 = vld [vmem:[%s0 + $0x40] sm:$0xff]
  %v23 = vld [vmem:[%s0 + $0x48] sm:$0xff]
  %v24 = vld [vmem:[%s0 + $0x50] sm:$0xff]
  %v25 = vld [vmem:[%s0 + $0x58] sm:$0xff]
  %v26 = vld [vmem:[%s0 + $0x60] sm:$0xff]
  %v27 = vld [vmem:[%s0 + $0x68] sm:$0xff]
  %v28 = vld [vmem:[%s0 + $0x70] sm:$0xff]
  %v29 = vld [vmem:[%s0 + $0x78] sm:$0xff]
  %v30 = vld [vmem:[%s0 + $0x80] sm:$0xff]
  %v31 = vld [vmem:[%s0 + $0x88] sm:$0xff]
  %v32 = vld [vmem:[%s0 + $0x90] sm:$0xff]
  %v33 = vld [vmem:[%s0 + $0x98] sm:$0xff]
  %v34 = vld [vmem:[%s0 + $0xa0] sm:$0xff]
  %v35 = vld [vmem:[%s0 + $0xa8] sm:$0xff]
  %v36 = vld [vmem:[%s0 + $0xb0] sm:$0xff]
  %v37 = vld [vmem:[%s0 + $0xb8] sm:$0xff]
  %v38 = vld [vmem:[%s0 + $0xc0] sm:$0xff]
  %v39 = vld [vmem:[%s0 + $0xc8] sm:$0xff]
  %v40 = vld [vmem:[%s0 + $0xd0] sm:$0xff]
  %v41 = vld [vmem:[%s0 + $0xd8] sm:$0xff]
  %v42 = vld [vmem:[%s0 + $0xe0] sm:$0xff]
  %v43 = vld [vmem:[%s0 + $0xe8] sm:$0xff]
  %v44 = vld [vmem:[%s0 + $0xf0] sm:$0xff]
  %v45 = vld [vmem:[%s0 + $0xf8] sm:$0xff]
  %v46 = vld [vmem:[%s1] sm:$0xff]
  %v47 = vld [vmem:[%s1 + $0x8] sm:$0xff]
  %v48 = vld [vmem:[%s1 + $0x10] sm:$0xff]
  %v49 = vld [vmem:[%s1 + $0x18] sm:$0xff]
  %v50 = vld [vmem:[%s1 + $0x20] sm:$0xff]
  %v51 = vld [vmem:[%s1 + $0x28] sm:$0xff]
  %v52 = vld [vmem:[%s1 + $0x30] sm:$0xff]
  %v53 = vld [vmem:[%s1 + $0x38] sm:$0xff]
  %v54 = vld [vmem:[%s1 + $0x40] sm:$0xff]
  %v55 = vld [vmem:[%s1 + $0x48] sm:$0xff]
  %v56 = vld [vmem:[%s1 + $0x50] sm:$0xff]
  %v57 = vld [vmem:[%s1 + $0x58] sm:$0xff]
  %v58 = vld [vmem:[%s1 + $0x60] sm:$0xff]
  %v59 = vld [vmem:[%s1 + $0x68] sm:$0xff]
  %v60 = vld [vmem:[%s1 + $0x70] sm:$0xff]
  %v61 = vld [vmem:[%s1 + $0x78] sm:$0xff]
  %v62 = vld [vmem:[%s1 + $0x80] sm:$0xff]
  %v63 = vld [vmem:[%s1 + $0x88] sm:$0xff]
  %v64 = vld [vmem:[%s1 + $0x90] sm:$0xff]
  %v65 = vld [vmem:[%s1 + $0x98] sm:$0xff]
  %v66 = vld [vmem:[%s1 + $0xa0] sm:$0xff]
  %v67 = vld [vmem:[%s1 + $0xa8] sm:$0xff]
  %v68 = vld [vmem:[%s1 + $0xb0] sm:$0xff]
  %v69 = vld [vmem:[%s1 + $0xb8] sm:$0xff]
  %v70 = vld [vmem:[%s1 + $0xc0] sm:$0xff]
  %v71 = vld [vmem:[%s1 + $0xc8] sm:$0xff]
  %v72 = vld [vmem:[%s1 + $0xd0] sm:$0xff]
  %v73 = vld [vmem:[%s1 + $0xd8] sm:$0xff]
  %v74 = vld [vmem:[%s1 + $0xe0] sm:$0xff]
  %v75 = vld [vmem:[%s1 + $0xe8] sm:$0xff]
  %v76 = vld [vmem:[%s1 + $0xf0] sm:$0xff]
  %v77 = vld [vmem:[%s1 + $0xf8] sm:$0xff]
  %78 = vmatprep.subr.mxu0 0.0
  %79 = vmatpush1.msra.mxu0 %v61
  %80 = vmatprep.subr.mxu0 0.0
  %81 = vmatpush1.msra.mxu0 %v60
  %82 = vmatprep.subr.mxu0 0.0
  %83 = vmatpush1.msra.mxu0 %v59
  %84 = vmatprep.subr.mxu0 0.0
  %85 = vmatpush1.msra.mxu0 %v58
  %86 = vmatprep.subr.mxu0 0.0
  %87 = vmatpush1.msra.mxu0 %v57
  %88 = vmatprep.subr.mxu0 0.0
  %89 = vmatpush1.msra.mxu0 %v56
  %90 = vmatprep.subr.mxu0 0.0
  %91 = vmatpush1.msra.mxu0 %v55
  %92 = vmatprep.subr.mxu0 0.0
  %93 = vmatpush1.msra.mxu0 %v54
  %94 = vmatprep.subr.mxu0 0.0
  %95 = vmatpush1.msra.mxu0 %v53
  %96 = vmatprep.subr.mxu0 0.0
  %97 = vmatpush1.msra.mxu0 %v52
  %98 = vmatprep.subr.mxu0 0.0
  %99 = vmatpush1.msra.mxu0 %v51
  %100 = vmatprep.subr.mxu0 0.0
  %101 = vmatpush1.msra.mxu0 %v50
  %102 = vmatprep.subr.mxu0 0.0
  %103 = vmatpush1.msra.mxu0 %v49
  %104 = vmatprep.subr.mxu0 0.0
  %105 = vmatpush1.msra.mxu0 %v48
  %106 = vmatprep.subr.mxu0 0.0
  %107 = vmatpush1.msra.mxu0 %v47
  %108 = vmatprep.subr.mxu0 0.0
  %109 = vmatpush1.msra.mxu0 %v46
  %110 = vmatprep.subr.mxu0 0.0
  %111 = vmatpush2.msra.mxu0 %v77
  %112 = vmatprep.subr.mxu0 0.0
  %113 = vmatpush2.msra.mxu0 %v76
  %114 = vmatprep.subr.mxu0 0.0
  %115 = vmatpush2.msra.mxu0 %v75
  %116 = vmatprep.subr.mxu0 0.0
  %117 = vmatpush2.msra.mxu0 %v74
  %118 = vmatprep.subr.mxu0 0.0
  %119 = vmatpush2.msra.mxu0 %v73
  %120 = vmatprep.subr.mxu0 0.0
  %121 = vmatpush2.msra.mxu0 %v72
  %122 = vmatprep.subr.mxu0 0.0
  %123 = vmatpush2.msra.mxu0 %v71
  %124 = vmatprep.subr.mxu0 0.0
  %125 = vmatpush2.msra.mxu0 %v70
  %126 = vmatprep.subr.mxu0 0.0
  %127 = vmatpush2.msra.mxu0 %v69
  %128 = vmatprep.subr.mxu0 0.0
  %129 = vmatpush2.msra.mxu0 %v68
  %130 = vmatprep.subr.mxu0 0.0
  %131 = vmatpush2.msra.mxu0 %v67
  %132 = vmatprep.subr.mxu0 0.0
  %133 = vmatpush2.msra.mxu0 %v66
  %134 = vmatprep.subr.mxu0 0.0
  %135 = vmatpush2.msra.mxu0 %v65
  %136 = vmatprep.subr.mxu0 0.0
  %137 = vmatpush2.msra.mxu0 %v64
  %138 = vmatprep.subr.mxu0 0.0
  %139 = vmatpush2.msra.mxu0 %v63
  %140 = vmatprep.subr.mxu0 0.0
  %141 = vmatpush2.msra.mxu0 %v62
  %142 = vmatprep.mubr.f32.mxu0 %v15
  %143 = vmatmul.mubr.f32.gmra.mxu0 %v14
  %v144 = vpop.f32.mrf.mxu0
  %v145 = vadd.f32 0.0, %v144
  %v146 = vpop.f32.mrf.mxu0
  %147 = vmatprep.mubr.f32.mxu0 %v17
  %148 = vmatmul.mubr.f32.gmra.mxu0 %v16
  %v149 = vpop.f32.mrf.mxu0
  %v150 = vadd.f32 0.0, %v149
  %v151 = vpop.f32.mrf.mxu0
  %152 = vmatprep.mubr.f32.mxu0 %v19
  %153 = vmatmul.mubr.f32.gmra.mxu0 %v18
  %v154 = vpop.f32.mrf.mxu0
  %v155 = vadd.f32 0.0, %v154
  %v156 = vpop.f32.mrf.mxu0
  %157 = vmatprep.mubr.f32.mxu0 %v21
  %158 = vmatmul.mubr.f32.gmra.mxu0 %v20
  %v159 = vpop.f32.mrf.mxu0
  %v160 = vadd.f32 0.0, %v159
  %v161 = vpop.f32.mrf.mxu0
  %162 = vmatprep.mubr.f32.mxu0 %v23
  %163 = vmatmul.mubr.f32.gmra.mxu0 %v22
  %v164 = vpop.f32.mrf.mxu0
  %v165 = vadd.f32 0.0, %v164
  %v166 = vpop.f32.mrf.mxu0
  %167 = vmatprep.mubr.f32.mxu0 %v25
  %168 = vmatmul.mubr.f32.gmra.mxu0 %v24
  %v169 = vpop.f32.mrf.mxu0
  %v170 = vadd.f32 0.0, %v169
  %v171 = vpop.f32.mrf.mxu0
  %172 = vmatprep.mubr.f32.mxu0 %v27
  %173 = vmatmul.mubr.f32.gmra.mxu0 %v26
  %v174 = vpop.f32.mrf.mxu0
  %v175 = vadd.f32 0.0, %v174
  %v176 = vpop.f32.mrf.mxu0
  %177 = vmatprep.mubr.f32.mxu0 %v29
  %178 = vmatmul.mubr.f32.gmra.mxu0 %v28
  %v179 = vpop.f32.mrf.mxu0
  %v180 = vadd.f32 0.0, %v179
  %v181 = vpop.f32.mrf.mxu0
  %182 = vmatprep.mubr.f32.mxu0 %v31
  %183 = vmatmul.mubr.f32.gmra.mxu0 %v30
  %v184 = vpop.f32.mrf.mxu0
  %v185 = vadd.f32 0.0, %v184
  %v186 = vpop.f32.mrf.mxu0
  %187 = vmatprep.mubr.f32.mxu0 %v33
  %188 = vmatmul.mubr.f32.gmra.mxu0 %v32
  %v189 = vpop.f32.mrf.mxu0
  %v190 = vadd.f32 0.0, %v189
  %v191 = vpop.f32.mrf.mxu0
  %192 = vmatprep.mubr.f32.mxu0 %v35
  %193 = vmatmul.mubr.f32.gmra.mxu0 %v34
  %v194 = vpop.f32.mrf.mxu0
  %v195 = vadd.f32 0.0, %v194
  %v196 = vpop.f32.mrf.mxu0
  %197 = vmatprep.mubr.f32.mxu0 %v37
  %198 = vmatmul.mubr.f32.gmra.mxu0 %v36
  %v199 = vpop.f32.mrf.mxu0
  %v200 = vadd.f32 0.0, %v199
  %v201 = vpop.f32.mrf.mxu0
  %202 = vmatprep.mubr.f32.mxu0 %v39
  %203 = vmatmul.mubr.f32.gmra.mxu0 %v38
  %v204 = vpop.f32.mrf.mxu0
  %v205 = vadd.f32 0.0, %v204
  %v206 = vpop.f32.mrf.mxu0
  %207 = vmatprep.mubr.f32.mxu0 %v41
  %208 = vmatmul.mubr.f32.gmra.mxu0 %v40
  %v209 = vpop.f32.mrf.mxu0
  %v210 = vadd.f32 0.0, %v209
  %v211 = vpop.f32.mrf.mxu0
  %212 = vmatprep.mubr.f32.mxu0 %v43
  %213 = vmatmul.mubr.f32.gmra.mxu0 %v42
  %v214 = vpop.f32.mrf.mxu0
  %v215 = vadd.f32 0.0, %v214
  %v216 = vpop.f32.mrf.mxu0
  %217 = vmatprep.mubr.f32.mxu0 %v45
  %218 = vmatmul.mubr.f32.gmra.mxu0 %v44
  %v219 = vpop.f32.mrf.mxu0
  %v220 = vadd.f32 0.0, %v219
  %v221 = vpop.f32.mrf.mxu0
  %222 = vdwg.mxu0
  %v223 = vmax.f32 %v145, %v165
  %v224 = vmax.f32 %v150, %v170
  %v225 = vmax.f32 %v155, %v175
  %v226 = vmax.f32 %v160, %v180
  %v227 = vmax.f32 %v185, %v205
  %v228 = vmax.f32 %v190, %v210
  %v229 = vmax.f32 %v195, %v215
  %v230 = vmax.f32 %v200, %v220
  %v231 = vmax.f32 %v223, %v227
  %v232 = vmax.f32 %v224, %v228
  %v233 = vmax.f32 %v225, %v229
  %v234 = vmax.f32 %v226, %v230
  %v235 = vld [vmem:[%s2] sm:$0x1]
  %v237 = vlaneseq
  %v238 = vshrl.u32 %v237, 7
  %v239 = vsub.s32 0, %v238
  %v240 = vrot.slane %v235, %v239
  %v242 = vadd.f32 %v231, %v240
  %v243 = vadd.f32 %v232, %v240
  %v244 = vadd.f32 %v233, %v240
  %v245 = vadd.f32 %v234, %v240
  %v246 = vmax.f32 %v242, 0.0
  %v247 = vmax.f32 %v243, 0.0
  %v248 = vmax.f32 %v244, 0.0
  %v249 = vmax.f32 %v245, 0.0
  %vm250 = vcmask 261120
  %251 = vst.msk [vmem:[%s3] sm:$0xff] %vm250, %v246
  %252 = vst.msk [vmem:[%s3 + $0x8] sm:$0xff] %vm250, %v247
  %253 = vst.msk [vmem:[%s3 + $0x10] sm:$0xff] %vm250, %v248
  %254 = vst.msk [vmem:[%s3 + $0x18] sm:$0xff] %vm250, %v249
  // Predicated region
  $region14: #{cnn_lstm_forward.5} parent=0 // pred_check
    _
  $region15: #{cnn_lstm_forward.5} parent=0 // pred_check_branch
    %256 = sbr.rel (0) target = $region17
  $region16: #{cnn_lstm_forward.5} parent=0 // pred_region
    _
  $region17: #{cnn_lstm_forward.5} parent=0 // pred_fallthru
    _
  // Predicated region
  $region18: #{cnn_lstm_forward.5} parent=0 // pred_check
    _
  $region19: #{cnn_lstm_forward.5} parent=0 // pred_check_branch
    %258 = sbr.rel (0) target = $region21
  $region20: #{cnn_lstm_forward.5} parent=0 // pred_region
    _
  $region21: #{cnn_lstm_forward.5} parent=0 // pred_fallthru
    _

// kernel: cnn_lstm_forward.6
$region0: #{cnn_lstm_forward.6}
  #allocation0 [shape = 'u32[]', space=smem, size = 0x4, offset = 0x4, fixed_abs, tag = 'smem constant byte address 0x4 - core index']
  #allocation1 [shape = 'u32[144,128]{1,0:T(1,128)}', space=vmem, size = 0x12000, scoped, tag = 'internal scratch']
  %s0 = inlined_call_operand.vmem [shape: f32[32,384], index: 0, kind: input, shape index: {}]
  %s1 = inlined_call_operand.vmem [shape: f32[384,64], index: 1, kind: input, shape index: {}]
  %s2 = inlined_call_operand.vmem [shape: f32[1,64], index: 2, kind: input, shape index: {}]
  %s3 = inlined_call_operand.vmem [shape: f32[8,64], index: 3, kind: output, shape index: {}]
  %s4 = sld [smem:[#allocation0]]
  $region22: #{cnn_lstm_forward.6} parent=0
    _
  %s6 = ssub.s32 1, %s4
  %s7 = scalar_select 0, %s6, %s4
  // Predicated region
  $region2: #{cnn_lstm_forward.6} parent=0 // pred_check
    _
  $region3: #{cnn_lstm_forward.6} parent=0 // pred_check_branch
    %9 = sbr.rel (0) target = $region5
  $region4: #{cnn_lstm_forward.6} parent=0 // pred_region
    _
  $region5: #{cnn_lstm_forward.6} parent=0 // pred_fallthru
    _
  // Predicated region
  $region6: #{cnn_lstm_forward.6} parent=0 // pred_check
    _
  $region7: #{cnn_lstm_forward.6} parent=0 // pred_check_branch
    %11 = sbr.rel (0) target = $region9
  $region8: #{cnn_lstm_forward.6} parent=0 // pred_region
    _
  $region9: #{cnn_lstm_forward.6} parent=0 // pred_fallthru
    _
  // Predicated region
  $region10: #{cnn_lstm_forward.6} parent=0 // pred_check
    _
  $region11: #{cnn_lstm_forward.6} parent=0 // pred_check_branch
    %13 = sbr.rel (0) target = $region13
  $region12: #{cnn_lstm_forward.6} parent=0 // pred_region
    _
  $region13: #{cnn_lstm_forward.6} parent=0 // pred_fallthru
    _
  %v14 = vld [vmem:[%s0] sm:$0xff]
  %v15 = vld [vmem:[%s0 + $0x8] sm:$0xff]
  %v16 = vld [vmem:[%s0 + $0x10] sm:$0xff]
  %v17 = vld [vmem:[%s0 + $0x18] sm:$0xff]
  %v18 = vld [vmem:[%s0 + $0x20] sm:$0xff]
  %v19 = vld [vmem:[%s0 + $0x28] sm:$0xff]
  %v20 = vld [vmem:[%s0 + $0x30] sm:$0xff]
  %v21 = vld [vmem:[%s0 + $0x38] sm:$0xff]
  %v22 = vld [vmem:[%s0 + $0x40] sm:$0xff]
  %v23 = vld [vmem:[%s0 + $0x48] sm:$0xff]
  %v24 = vld [vmem:[%s0 + $0x50] sm:$0xff]
  %v25 = vld [vmem:[%s0 + $0x58] sm:$0xff]
  %v26 = vld [vmem:[%s1] sm:$0xff]
  %v27 = vld [vmem:[%s1 + $0x8] sm:$0xff]
  %v28 = vld [vmem:[%s1 + $0x10] sm:$0xff]
  %v29 = vld [vmem:[%s1 + $0x18] sm:$0xff]
  %v30 = vld [vmem:[%s1 + $0x20] sm:$0xff]
  %v31 = vld [vmem:[%s1 + $0x28] sm:$0xff]
  %v32 = vld [vmem:[%s1 + $0x30] sm:$0xff]
  %v33 = vld [vmem:[%s1 + $0x38] sm:$0xff]
  %v34 = vld [vmem:[%s1 + $0x40] sm:$0xff]
  %v35 = vld [vmem:[%s1 + $0x48] sm:$0xff]
  %v36 = vld [vmem:[%s1 + $0x50] sm:$0xff]
  %v37 = vld [vmem:[%s1 + $0x58] sm:$0xff]
  %v38 = vld [vmem:[%s1 + $0x60] sm:$0xff]
  %v39 = vld [vmem:[%s1 + $0x68] sm:$0xff]
  %v40 = vld [vmem:[%s1 + $0x70] sm:$0xff]
  %v41 = vld [vmem:[%s1 + $0x78] sm:$0xff]
  %v42 = vld [vmem:[%s1 + $0x80] sm:$0xff]
  %v43 = vld [vmem:[%s1 + $0x88] sm:$0xff]
  %v44 = vld [vmem:[%s1 + $0x90] sm:$0xff]
  %v45 = vld [vmem:[%s1 + $0x98] sm:$0xff]
  %v46 = vld [vmem:[%s1 + $0xa0] sm:$0xff]
  %v47 = vld [vmem:[%s1 + $0xa8] sm:$0xff]
  %v48 = vld [vmem:[%s1 + $0xb0] sm:$0xff]
  %v49 = vld [vmem:[%s1 + $0xb8] sm:$0xff]
  %v50 = vld [vmem:[%s1 + $0xc0] sm:$0xff]
  %v51 = vld [vmem:[%s1 + $0xc8] sm:$0xff]
  %v52 = vld [vmem:[%s1 + $0xd0] sm:$0xff]
  %v53 = vld [vmem:[%s1 + $0xd8] sm:$0xff]
  %v54 = vld [vmem:[%s1 + $0xe0] sm:$0xff]
  %v55 = vld [vmem:[%s1 + $0xe8] sm:$0xff]
  %v56 = vld [vmem:[%s1 + $0xf0] sm:$0xff]
  %v57 = vld [vmem:[%s1 + $0xf8] sm:$0xff]
  %v58 = vld [vmem:[%s1 + $0x100] sm:$0xff]
  %v59 = vld [vmem:[%s1 + $0x108] sm:$0xff]
  %v60 = vld [vmem:[%s1 + $0x110] sm:$0xff]
  %v61 = vld [vmem:[%s1 + $0x118] sm:$0xff]
  %v62 = vld [vmem:[%s1 + $0x120] sm:$0xff]
  %v63 = vld [vmem:[%s1 + $0x128] sm:$0xff]
  %v64 = vld [vmem:[%s1 + $0x130] sm:$0xff]
  %v65 = vld [vmem:[%s1 + $0x138] sm:$0xff]
  %v66 = vld [vmem:[%s1 + $0x140] sm:$0xff]
  %v67 = vld [vmem:[%s1 + $0x148] sm:$0xff]
  %v68 = vld [vmem:[%s1 + $0x150] sm:$0xff]
  %v69 = vld [vmem:[%s1 + $0x158] sm:$0xff]
  %v70 = vld [vmem:[%s1 + $0x160] sm:$0xff]
  %v71 = vld [vmem:[%s1 + $0x168] sm:$0xff]
  %v72 = vld [vmem:[%s1 + $0x170] sm:$0xff]
  %v73 = vld [vmem:[%s1 + $0x178] sm:$0xff]
  %74 = vmatprep.subr.mxu0 0.0
  %75 = vmatpush1.msra.mxu0 %v41
  %76 = vmatprep.subr.mxu0 0.0
  %77 = vmatpush1.msra.mxu0 %v40
  %78 = vmatprep.subr.mxu0 0.0
  %79 = vmatpush1.msra.mxu0 %v39
  %80 = vmatprep.subr.mxu0 0.0
  %81 = vmatpush1.msra.mxu0 %v38
  %82 = vmatprep.subr.mxu0 0.0
  %83 = vmatpush1.msra.mxu0 %v37
  %84 = vmatprep.subr.mxu0 0.0
  %85 = vmatpush1.msra.mxu0 %v36
  %86 = vmatprep.subr.mxu0 0.0
  %87 = vmatpush1.msra.mxu0 %v35
  %88 = vmatprep.subr.mxu0 0.0
  %89 = vmatpush1.msra.mxu0 %v34
  %90 = vmatprep.subr.mxu0 0.0
  %91 = vmatpush1.msra.mxu0 %v33
  %92 = vmatprep.subr.mxu0 0.0
  %93 = vmatpush1.msra.mxu0 %v32
  %94 = vmatprep.subr.mxu0 0.0
  %95 = vmatpush1.msra.mxu0 %v31
  %96 = vmatprep.subr.mxu0 0.0
  %97 = vmatpush1.msra.mxu0 %v30
  %98 = vmatprep.subr.mxu0 0.0
  %99 = vmatpush1.msra.mxu0 %v29
  %100 = vmatprep.subr.mxu0 0.0
  %101 = vmatpush1.msra.mxu0 %v28
  %102 = vmatprep.subr.mxu0 0.0
  %103 = vmatpush1.msra.mxu0 %v27
  %104 = vmatprep.subr.mxu0 0.0
  %105 = vmatpush1.msra.mxu0 %v26
  %106 = vmatprep.subr.mxu0 0.0
  %107 = vmatpush2.msra.mxu0 %v57
  %108 = vmatprep.subr.mxu0 0.0
  %109 = vmatpush2.msra.mxu0 %v56
  %110 = vmatprep.subr.mxu0 0.0
  %111 = vmatpush2.msra.mxu0 %v55
  %112 = vmatprep.subr.mxu0 0.0
  %113 = vmatpush2.msra.mxu0 %v54
  %114 = vmatprep.subr.mxu0 0.0
  %115 = vmatpush2.msra.mxu0 %v53
  %116 = vmatprep.subr.mxu0 0.0
  %117 = vmatpush2.msra.mxu0 %v52
  %118 = vmatprep.subr.mxu0 0.0
  %119 = vmatpush2.msra.mxu0 %v51
  %120 = vmatprep.subr.mxu0 0.0
  %121 = vmatpush2.msra.mxu0 %v50
  %122 = vmatprep.subr.mxu0 0.0
  %123 = vmatpush2.msra.mxu0 %v49
  %124 = vmatprep.subr.mxu0 0.0
  %125 = vmatpush2.msra.mxu0 %v48
  %126 = vmatprep.subr.mxu0 0.0
  %127 = vmatpush2.msra.mxu0 %v47
  %128 = vmatprep.subr.mxu0 0.0
  %129 = vmatpush2.msra.mxu0 %v46
  %130 = vmatprep.subr.mxu0 0.0
  %131 = vmatpush2.msra.mxu0 %v45
  %132 = vmatprep.subr.mxu0 0.0
  %133 = vmatpush2.msra.mxu0 %v44
  %134 = vmatprep.subr.mxu0 0.0
  %135 = vmatpush2.msra.mxu0 %v43
  %136 = vmatprep.subr.mxu0 0.0
  %137 = vmatpush2.msra.mxu0 %v42
  %138 = vmatprep.mubr.f32.mxu0 %v15
  %139 = vmatmul.mubr.f32.gmra.mxu0 %v14
  %v140 = vpop.f32.mrf.mxu0
  %v141 = vadd.f32 0.0, %v140
  %v142 = vpop.f32.mrf.mxu0
  %143 = vmatprep.mubr.f32.mxu0 %v18
  %144 = vmatmul.mubr.f32.gmra.mxu0 %v17
  %v145 = vpop.f32.mrf.mxu0
  %v146 = vadd.f32 0.0, %v145
  %v147 = vpop.f32.mrf.mxu0
  %148 = vmatprep.mubr.f32.mxu0 %v21
  %149 = vmatmul.mubr.f32.gmra.mxu0 %v20
  %v150 = vpop.f32.mrf.mxu0
  %v151 = vadd.f32 0.0, %v150
  %v152 = vpop.f32.mrf.mxu0
  %153 = vmatprep.mubr.f32.mxu0 %v24
  %154 = vmatmul.mubr.f32.gmra.mxu0 %v23
  %v155 = vpop.f32.mrf.mxu0
  %v156 = vadd.f32 0.0, %v155
  %v157 = vpop.f32.mrf.mxu0
  %158 = vdwg.mxu0
  %159 = vmatprep.subr.mxu0 0.0
  %160 = vmatpush1.msra.mxu0 %v73
  %161 = vmatprep.subr.mxu0 0.0
  %162 = vmatpush1.msra.mxu0 %v72
  %163 = vmatprep.subr.mxu0 0.0
  %164 = vmatpush1.msra.mxu0 %v71
  %165 = vmatprep.subr.mxu0 0.0
  %166 = vmatpush1.msra.mxu0 %v70
  %167 = vmatprep.subr.mxu0 0.0
  %168 = vmatpush1.msra.mxu0 %v69
  %169 = vmatprep.subr.mxu0 0.0
  %170 = vmatpush1.msra.mxu0 %v68
  %171 = vmatprep.subr.mxu0 0.0
  %172 = vmatpush1.msra.mxu0 %v67
  %173 = vmatprep.subr.mxu0 0.0
  %174 = vmatpush1.msra.mxu0 %v66
  %175 = vmatprep.subr.mxu0 0.0
  %176 = vmatpush1.msra.mxu0 %v65
  %177 = vmatprep.subr.mxu0 0.0
  %178 = vmatpush1.msra.mxu0 %v64
  %179 = vmatprep.subr.mxu0 0.0
  %180 = vmatpush1.msra.mxu0 %v63
  %181 = vmatprep.subr.mxu0 0.0
  %182 = vmatpush1.msra.mxu0 %v62
  %183 = vmatprep.subr.mxu0 0.0
  %184 = vmatpush1.msra.mxu0 %v61
  %185 = vmatprep.subr.mxu0 0.0
  %186 = vmatpush1.msra.mxu0 %v60
  %187 = vmatprep.subr.mxu0 0.0
  %188 = vmatpush1.msra.mxu0 %v59
  %189 = vmatprep.subr.mxu0 0.0
  %190 = vmatpush1.msra.mxu0 %v58
  %191 = vmatprep.subr.mxu0 0.0
  %192 = vmatpush2.msra.mxu0 0.0
  %193 = vmatprep.subr.mxu0 0.0
  %194 = vmatpush2.msra.mxu0 0.0
  %195 = vmatprep.subr.mxu0 0.0
  %196 = vmatpush2.msra.mxu0 0.0
  %197 = vmatprep.subr.mxu0 0.0
  %198 = vmatpush2.msra.mxu0 0.0
  %199 = vmatprep.subr.mxu0 0.0
  %200 = vmatpush2.msra.mxu0 0.0
  %201 = vmatprep.subr.mxu0 0.0
  %202 = vmatpush2.msra.mxu0 0.0
  %203 = vmatprep.subr.mxu0 0.0
  %204 = vmatpush2.msra.mxu0 0.0
  %205 = vmatprep.subr.mxu0 0.0
  %206 = vmatpush2.msra.mxu0 0.0
  %207 = vmatprep.subr.mxu0 0.0
  %208 = vmatpush2.msra.mxu0 0.0
  %209 = vmatprep.subr.mxu0 0.0
  %210 = vmatpush2.msra.mxu0 0.0
  %211 = vmatprep.subr.mxu0 0.0
  %212 = vmatpush2.msra.mxu0 0.0
  %213 = vmatprep.subr.mxu0 0.0
  %214 = vmatpush2.msra.mxu0 0.0
  %215 = vmatprep.subr.mxu0 0.0
  %216 = vmatpush2.msra.mxu0 0.0
  %217 = vmatprep.subr.mxu0 0.0
  %218 = vmatpush2.msra.mxu0 0.0
  %219 = vmatprep.subr.mxu0 0.0
  %220 = vmatpush2.msra.mxu0 0.0
  %221 = vmatprep.subr.mxu0 0.0
  %222 = vmatpush2.msra.mxu0 0.0
  %223 = vmatprep.mubr.f32.mxu0 0.0
  %224 = vmatmul.mubr.f32.gmra.mxu0 %v16
  %v225 = vpop.f32.mrf.mxu0
  %v226 = vadd.f32 %v141, %v225
  %v227 = vpop.f32.mrf.mxu0
  %228 = vmatprep.mubr.f32.mxu0 0.0
  %229 = vmatmul.mubr.f32.gmra.mxu0 %v19
  %v230 = vpop.f32.mrf.mxu0
  %v231 = vadd.f32 %v146, %v230
  %v232 = vpop.f32.mrf.mxu0
  %233 = vmatprep.mubr.f32.mxu0 0.0
  %234 = vmatmul.mubr.f32.gmra.mxu0 %v22
  %v235 = vpop.f32.mrf.mxu0
  %v236 = vadd.f32 %v151, %v235
  %v237 = vpop.f32.mrf.mxu0
  %238 = vmatprep.mubr.f32.mxu0 0.0
  %239 = vmatmul.mubr.f32.gmra.mxu0 %v25
  %v240 = vpop.f32.mrf.mxu0
  %v241 = vadd.f32 %v156, %v240
  %v242 = vpop.f32.mrf.mxu0
  %243 = vdwg.mxu0
  %v244 = vmax.f32 %v226, %v231
  %v245 = vmax.f32 %v236, %v241
  %v246 = vmax.f32 %v244, %v245
  %v247 = vld [vmem:[%s2] sm:$0x1]
  %v249 = vlaneseq
  %v250 = vshrl.u32 %v249, 7
  %v251 = vsub.s32 0, %v250
  %v252 = vrot.slane %v247, %v251
  %v254 = vadd.f32 %v246, %v252
  %v255 = vmax.f32 %v254, 0.0
  %vm256 = vcmask 523264
  %257 = vst.msk [vmem:[%s3] sm:$0xff] %vm256, %v255
  // Predicated region
  $region14: #{cnn_lstm_forward.6} parent=0 // pred_check
    _
  $region15: #{cnn_lstm_forward.6} parent=0 // pred_check_branch
    %259 = sbr.rel (0) target = $region17
  $region16: #{cnn_lstm_forward.6} parent=0 // pred_region
    _
  $region17: #{cnn_lstm_forward.6} parent=0 // pred_fallthru
    _
  // Predicated region
  $region18: #{cnn_lstm_forward.6} parent=0 // pred_check
    _
  $region19: #{cnn_lstm_forward.6} parent=0 // pred_check_branch
    %261 = sbr.rel (0) target = $region21
  $region20: #{cnn_lstm_forward.6} parent=0 // pred_region
    _
  $region21: #{cnn_lstm_forward.6} parent=0 // pred_fallthru
    _

// kernel: cnn_lstm_forward.7
$region0: #{cnn_lstm_forward.7}
  #allocation0 [shape = 'u32[]', space=smem, size = 0x4, offset = 0x4, fixed_abs, tag = 'smem constant byte address 0x4 - core index']
  #allocation1 [shape = 'u32[144,128]{1,0:T(1,128)}', space=vmem, size = 0x12000, scoped, tag = 'internal scratch']
  %s0 = inlined_call_operand.vmem [shape: f32[8,2,128], index: 0, kind: input, shape index: {}]
  %s1 = inlined_call_operand.vmem [shape: f32[32,128], index: 1, kind: input, shape index: {}]
  %s2 = inlined_call_operand.vmem [shape: f32[32,128], index: 2, kind: input, shape index: {}]
  %s3 = inlined_call_operand.vmem [shape: f32[32,128], index: 3, kind: input, shape index: {}]
  %s4 = inlined_call_operand.vmem [shape: f32[1,128], index: 4, kind: input, shape index: {}]
  %s5 = inlined_call_operand.vmem [shape: f32[2,4,64], index: 5, kind: input, shape index: {}]
  %s6 = inlined_call_operand.vmem [shape: f32[64,7], index: 6, kind: input, shape index: {}]
  %s7 = inlined_call_operand.vmem [shape: f32[32,7], index: 7, kind: input, shape index: {}]
  %s8 = inlined_call_operand.vmem [shape: f32[1,7], index: 8, kind: input, shape index: {}]
  %s9 = inlined_call_operand.hbm [shape: f32[2,7], index: 9, kind: output, shape index: {}]
  %s10 = sld [smem:[#allocation0]]
  $region46: #{cnn_lstm_forward.7} parent=0
    _
  %s12 = ssub.s32 1, %s10
  %s13 = scalar_select 0, %s12, %s10
  $region1: #{cnn_lstm_forward.7} parent=0
    #allocation2 [shape = 'u8[1024]{0}', space=vmem, size = 0x400, scoped, tag = 'output window, operand 0, single buffered']
    #allocation3 [shape = 's32[1]{0}', space=sflag, size = 0x4, scoped, tag = 'scoped memory for cnn_lstm_forward.7']
    %14 = vsyncpa [#allocation3], 0
    // Predicated region
    $region2: #{cnn_lstm_forward.7} parent=1 // pred_check
      _
    $region3: #{cnn_lstm_forward.7} parent=1 // pred_check_branch
      %16 = sbr.rel (0) target = $region5
    $region4: #{cnn_lstm_forward.7} parent=1 // pred_region
      _
    $region5: #{cnn_lstm_forward.7} parent=1 // pred_fallthru
      _
    // Predicated region
    $region6: #{cnn_lstm_forward.7} parent=1 // pred_check
      _
    $region7: #{cnn_lstm_forward.7} parent=1 // pred_check_branch
      %18 = sbr.rel (0) target = $region9
    $region8: #{cnn_lstm_forward.7} parent=1 // pred_region
      _
    $region9: #{cnn_lstm_forward.7} parent=1 // pred_fallthru
      _
    // Predicated region
    $region10: #{cnn_lstm_forward.7} parent=1 // pred_check
      _
    $region11: #{cnn_lstm_forward.7} parent=1 // pred_check_branch
      %20 = sbr.rel (0) target = $region13
    $region12: #{cnn_lstm_forward.7} parent=1 // pred_region
      _
    $region13: #{cnn_lstm_forward.7} parent=1 // pred_fallthru
      _
    // Predicated region
    $region14: #{cnn_lstm_forward.7} parent=1 // pred_check
      _
    $region15: #{cnn_lstm_forward.7} parent=1 // pred_check_branch
      %22 = sbr.rel (0) target = $region17
    $region16: #{cnn_lstm_forward.7} parent=1 // pred_region
      _
    $region17: #{cnn_lstm_forward.7} parent=1 // pred_fallthru
      _
    // Predicated region
    $region18: #{cnn_lstm_forward.7} parent=1 // pred_check
      _
    $region19: #{cnn_lstm_forward.7} parent=1 // pred_check_branch
      %24 = sbr.rel (0) target = $region21
    $region20: #{cnn_lstm_forward.7} parent=1 // pred_region
      _
    $region21: #{cnn_lstm_forward.7} parent=1 // pred_fallthru
      _
    // Predicated region
    $region22: #{cnn_lstm_forward.7} parent=1 // pred_check
      _
    $region23: #{cnn_lstm_forward.7} parent=1 // pred_check_branch
      %26 = sbr.rel (0) target = $region25
    $region24: #{cnn_lstm_forward.7} parent=1 // pred_region
      _
    $region25: #{cnn_lstm_forward.7} parent=1 // pred_fallthru
      _
    // Predicated region
    $region26: #{cnn_lstm_forward.7} parent=1 // pred_check
      _
    $region27: #{cnn_lstm_forward.7} parent=1 // pred_check_branch
      %28 = sbr.rel (0) target = $region29
    $region28: #{cnn_lstm_forward.7} parent=1 // pred_region
      _
    $region29: #{cnn_lstm_forward.7} parent=1 // pred_fallthru
      _
    // Predicated region
    $region30: #{cnn_lstm_forward.7} parent=1 // pred_check
      _
    $region31: #{cnn_lstm_forward.7} parent=1 // pred_check_branch
      %30 = sbr.rel (0) target = $region33
    $region32: #{cnn_lstm_forward.7} parent=1 // pred_region
      _
    $region33: #{cnn_lstm_forward.7} parent=1 // pred_fallthru
      _
    // Predicated region
    $region34: #{cnn_lstm_forward.7} parent=1 // pred_check
      _
    $region35: #{cnn_lstm_forward.7} parent=1 // pred_check_branch
      %32 = sbr.rel (0) target = $region37
    $region36: #{cnn_lstm_forward.7} parent=1 // pred_region
      _
    $region37: #{cnn_lstm_forward.7} parent=1 // pred_fallthru
      _
    %v33 = vld [vmem:[%s1] sm:$0xff]
    %v34 = vld [vmem:[%s1 + $0x8] sm:$0xff]
    %v35 = vld [vmem:[%s1 + $0x10] sm:$0xff]
    %v36 = vld [vmem:[%s1 + $0x18] sm:$0xff]
    %v37 = vld [vmem:[%s2] sm:$0xff]
    %v38 = vld [vmem:[%s2 + $0x8] sm:$0xff]
    %v39 = vld [vmem:[%s2 + $0x10] sm:$0xff]
    %v40 = vld [vmem:[%s2 + $0x18] sm:$0xff]
    %v41 = vld [vmem:[%s3] sm:$0xff]
    %v42 = vld [vmem:[%s3 + $0x8] sm:$0xff]
    %v43 = vld [vmem:[%s3 + $0x10] sm:$0xff]
    %v44 = vld [vmem:[%s3 + $0x18] sm:$0xff]
    %v45 = vld [vmem:[%s4] sm:$0x1]
    %v46 = vld [vmem:[%s0] sm:$0x3]
    %vm47 = vcmask 261120
    %v49 = vsel %vm47, 0.0, 0
    %51 = vmatprep.subr.mxu0 0.0
    %52 = vmatpush1.msra.mxu0 0.0
    %53 = vmatprep.subr.mxu0 0.0
    %54 = vmatpush1.msra.mxu0 0.0
    %55 = vmatprep.subr.mxu0 0.0
    %56 = vmatpush1.msra.mxu0 0.0
    %57 = vmatprep.subr.mxu0 0.0
    %58 = vmatpush1.msra.mxu0 0.0
    %59 = vmatprep.subr.mxu0 0.0
    %60 = vmatpush1.msra.mxu0 0.0
    %61 = vmatprep.subr.mxu0 0.0
    %62 = vmatpush1.msra.mxu0 0.0
    %63 = vmatprep.subr.mxu0 0.0
    %64 = vmatpush1.msra.mxu0 0.0
    %65 = vmatprep.subr.mxu0 0.0
    %66 = vmatpush1.msra.mxu0 0.0
    %67 = vmatprep.subr.mxu0 0.0
    %68 = vmatpush1.msra.mxu0 0.0
    %69 = vmatprep.subr.mxu0 0.0
    %70 = vmatpush1.msra.mxu0 0.0
    %71 = vmatprep.subr.mxu0 0.0
    %72 = vmatpush1.msra.mxu0 0.0
    %73 = vmatprep.subr.mxu0 0.0
    %74 = vmatpush1.msra.mxu0 0.0
    %75 = vmatprep.subr.mxu0 0.0
    %76 = vmatpush1.msra.mxu0 %v36
    %77 = vmatprep.subr.mxu0 0.0
    %78 = vmatpush1.msra.mxu0 %v35
    %79 = vmatprep.subr.mxu0 0.0
    %80 = vmatpush1.msra.mxu0 %v34
    %81 = vmatprep.subr.mxu0 0.0
    %82 = vmatpush1.msra.mxu0 %v33
    %83 = vmatprep.subr.mxu0 0.0
    %84 = vmatpush2.msra.mxu0 0.0
    %85 = vmatprep.subr.mxu0 0.0
    %86 = vmatpush2.msra.mxu0 0.0
    %87 = vmatprep.subr.mxu0 0.0
    %88 = vmatpush2.msra.mxu0 0.0
    %89 = vmatprep.subr.mxu0 0.0
    %90 = vmatpush2.msra.mxu0 0.0
    %91 = vmatprep.subr.mxu0 0.0
    %92 = vmatpush2.msra.mxu0 0.0
    %93 = vmatprep.subr.mxu0 0.0
    %94 = vmatpush2.msra.mxu0 0.0
    %95 = vmatprep.subr.mxu0 0.0
    %96 = vmatpush2.msra.mxu0 0.0
    %97 = vmatprep.subr.mxu0 0.0
    %98 = vmatpush2.msra.mxu0 0.0
    %99 = vmatprep.subr.mxu0 0.0
    %100 = vmatpush2.msra.mxu0 0.0
    %101 = vmatprep.subr.mxu0 0.0
    %102 = vmatpush2.msra.mxu0 0.0
    %103 = vmatprep.subr.mxu0 0.0
    %104 = vmatpush2.msra.mxu0 0.0
    %105 = vmatprep.subr.mxu0 0.0
    %106 = vmatpush2.msra.mxu0 0.0
    %107 = vmatprep.subr.mxu0 0.0
    %108 = vmatpush2.msra.mxu0 0.0
    %109 = vmatprep.subr.mxu0 0.0
    %110 = vmatpush2.msra.mxu0 0.0
    %111 = vmatprep.subr.mxu0 0.0
    %112 = vmatpush2.msra.mxu0 0.0
    %113 = vmatprep.subr.mxu0 0.0
    %114 = vmatpush2.msra.mxu0 0.0
    %115 = vmatprep.mubr.f32.mxu0 0.0
    %116 = vmatmul.mubr.f32.gmra.mxu0 %v49
    %v117 = vpop.f32.mrf.mxu0
    %v118 = vadd.f32 0.0, %v117
    %v119 = vpop.f32.mrf.mxu0
    %120 = vdwg.mxu0
    %v121 = vadd.f32 %v46, %v118
    %v122 = vxor.u32 %v121, 2147483648
    %v123 = vmul.f32 %v122, 1.442695
    %v124 = vpow.pop %v123
    %v125 = vadd.f32 %v124, 1.0
    %v126 = vrcp.pop %v125
    %v127 = vmul.f32 1.0, %v126
    %v128 = vtanh.pop %v121
    %v129 = vmul.f32 %v127, 0.0
    %131 = vrot.lane.b32.xlu0 %v128, 64
    %v132 = vpop.permute.xlu0 %131
    %v134 = vmul.f32 %v127, %v132
    %136 = vrot.lane.b32.xlu0 %v134, 32
    %v137 = vpop.permute.xlu0 %136
    %v139 = vadd.f32 %v129, %v137
    %v140 = vtanh.pop %v139
    %142 = vrot.lane.b32.xlu0 %v140, 64
    %v143 = vpop.permute.xlu0 %142
    %v145 = vmul.f32 %v127, %v143
    %146 = vmatprep.subr.mxu0 0.0
    %147 = vmatpush1.msra.mxu0 0.0
    %148 = vmatprep.subr.mxu0 0.0
    %149 = vmatpush1.msra.mxu0 0.0
    %150 = vmatprep.subr.mxu0 0.0
    %151 = vmatpush1.msra.mxu0 0.0
    %152 = vmatprep.subr.mxu0 0.0
    %153 = vmatpush1.msra.mxu0 0.0
    %154 = vmatprep.subr.mxu0 0.0
    %155 = vmatpush1.msra.mxu0 0.0
    %156 = vmatprep.subr.mxu0 0.0
    %157 = vmatpush1.msra.mxu0 0.0
    %158 = vmatprep.subr.mxu0 0.0
    %159 = vmatpush1.msra.mxu0 0.0
    %160 = vmatprep.subr.mxu0 0.0
    %161 = vmatpush1.msra.mxu0 0.0
    %162 = vmatprep.subr.mxu0 0.0
    %163 = vmatpush1.msra.mxu0 0.0
    %164 = vmatprep.subr.mxu0 0.0
    %165 = vmatpush1.msra.mxu0 0.0
    %166 = vmatprep.subr.mxu0 0.0
    %167 = vmatpush1.msra.mxu0 0.0
    %168 = vmatprep.subr.mxu0 0.0
    %169 = vmatpush1.msra.mxu0 0.0
    %170 = vmatprep.subr.mxu0 0.0
    %171 = vmatpush1.msra.mxu0 %v44
    %172 = vmatprep.subr.mxu0 0.0
    %173 = vmatpush1.msra.mxu0 %v43
    %174 = vmatprep.subr.mxu0 0.0
    %175 = vmatpush1.msra.mxu0 %v42
    %176 = vmatprep.subr.mxu0 0.0
    %177 = vmatpush1.msra.mxu0 %v41
    %178 = vmatprep.subr.mxu0 0.0
    %179 = vmatpush2.msra.mxu0 0.0
    %180 = vmatprep.subr.mxu0 0.0
    %181 = vmatpush2.msra.mxu0 0.0
    %182 = vmatprep.subr.mxu0 0.0
    %183 = vmatpush2.msra.mxu0 0.0
    %184 = vmatprep.subr.mxu0 0.0
    %185 = vmatpush2.msra.mxu0 0.0
    %186 = vmatprep.subr.mxu0 0.0
    %187 = vmatpush2.msra.mxu0 0.0
    %188 = vmatprep.subr.mxu0 0.0
    %189 = vmatpush2.msra.mxu0 0.0
    %190 = vmatprep.subr.mxu0 0.0
    %191 = vmatpush2.msra.mxu0 0.0
    %192 = vmatprep.subr.mxu0 0.0
    %193 = vmatpush2.msra.mxu0 0.0
    %194 = vmatprep.subr.mxu0 0.0
    %195 = vmatpush2.msra.mxu0 0.0
    %196 = vmatprep.subr.mxu0 0.0
    %197 = vmatpush2.msra.mxu0 0.0
    %198 = vmatprep.subr.mxu0 0.0
    %199 = vmatpush2.msra.mxu0 0.0
    %200 = vmatprep.subr.mxu0 0.0
    %201 = vmatpush2.msra.mxu0 0.0
    %202 = vmatprep.subr.mxu0 0.0
    %203 = vmatpush2.msra.mxu0 0.0
    %204 = vmatprep.subr.mxu0 0.0
    %205 = vmatpush2.msra.mxu0 0.0
    %206 = vmatprep.subr.mxu0 0.0
    %207 = vmatpush2.msra.mxu0 0.0
    %208 = vmatprep.subr.mxu0 0.0
    %209 = vmatpush2.msra.mxu0 0.0
    %210 = vmatprep.mubr.f32.mxu0 0.0
    %211 = vmatmul.mubr.f32.gmra.mxu0 %v49
    %v212 = vpop.f32.mrf.mxu0
    %v213 = vadd.f32 0.0, %v212
    %v214 = vpop.f32.mrf.mxu0
    %215 = vdwg.mxu0
    %217 = vrot.lane.b32.xlu0 %v145, 32
    %v218 = vpop.permute.xlu0 %217
    %v219 = vsel %vm47, %v218, 0
    %221 = vmatprep.subr.mxu0 0.0
    %222 = vmatpush1.msra.mxu0 0.0
    %223 = vmatprep.subr.mxu0 0.0
    %224 = vmatpush1.msra.mxu0 0.0
    %225 = vmatprep.subr.mxu0 0.0
    %226 = vmatpush1.msra.mxu0 0.0
    %227 = vmatprep.subr.mxu0 0.0
    %228 = vmatpush1.msra.mxu0 0.0
    %229 = vmatprep.subr.mxu0 0.0
    %230 = vmatpush1.msra.mxu0 0.0
    %231 = vmatprep.subr.mxu0 0.0
    %232 = vmatpush1.msra.mxu0 0.0
    %233 = vmatprep.subr.mxu0 0.0
    %234 = vmatpush1.msra.mxu0 0.0
    %235 = vmatprep.subr.mxu0 0.0
    %236 = vmatpush1.msra.mxu0 0.0
    %237 = vmatprep.subr.mxu0 0.0
    %238 = vmatpush1.msra.mxu0 0.0
    %239 = vmatprep.subr.mxu0 0.0
    %240 = vmatpush1.msra.mxu0 0.0
    %241 = vmatprep.subr.mxu0 0.0
    %242 = vmatpush1.msra.mxu0 0.0
    %243 = vmatprep.subr.mxu0 0.0
    %244 = vmatpush1.msra.mxu0 0.0
    %245 = vmatprep.subr.mxu0 0.0
    %246 = vmatpush1.msra.mxu0 %v40
    %247 = vmatprep.subr.mxu0 0.0
    %248 = vmatpush1.msra.mxu0 %v39
    %249 = vmatprep.subr.mxu0 0.0
    %250 = vmatpush1.msra.mxu0 %v38
    %251 = vmatprep.subr.mxu0 0.0
    %252 = vmatpush1.msra.mxu0 %v37
    %253 = vmatprep.subr.mxu0 0.0
    %254 = vmatpush2.msra.mxu0 0.0
    %255 = vmatprep.subr.mxu0 0.0
    %256 = vmatpush2.msra.mxu0 0.0
    %257 = vmatprep.subr.mxu0 0.0
    %258 = vmatpush2.msra.mxu0 0.0
    %259 = vmatprep.subr.mxu0 0.0
    %260 = vmatpush2.msra.mxu0 0.0
    %261 = vmatprep.subr.mxu0 0.0
    %262 = vmatpush2.msra.mxu0 0.0
    %263 = vmatprep.subr.mxu0 0.0
    %264 = vmatpush2.msra.mxu0 0.0
    %265 = vmatprep.subr.mxu0 0.0
    %266 = vmatpush2.msra.mxu0 0.0
    %267 = vmatprep.subr.mxu0 0.0
    %268 = vmatpush2.msra.mxu0 0.0
    %269 = vmatprep.subr.mxu0 0.0
    %270 = vmatpush2.msra.mxu0 0.0
    %271 = vmatprep.subr.mxu0 0.0
    %272 = vmatpush2.msra.mxu0 0.0
    %273 = vmatprep.subr.mxu0 0.0
    %274 = vmatpush2.msra.mxu0 0.0
    %275 = vmatprep.subr.mxu0 0.0
    %276 = vmatpush2.msra.mxu0 0.0
    %277 = vmatprep.subr.mxu0 0.0
    %278 = vmatpush2.msra.mxu0 0.0
    %279 = vmatprep.subr.mxu0 0.0
    %280 = vmatpush2.msra.mxu0 0.0
    %281 = vmatprep.subr.mxu0 0.0
    %282 = vmatpush2.msra.mxu0 0.0
    %283 = vmatprep.subr.mxu0 0.0
    %284 = vmatpush2.msra.mxu0 0.0
    %285 = vmatprep.mubr.f32.mxu0 0.0
    %286 = vmatmul.mubr.f32.gmra.mxu0 %v219
    %v287 = vpop.f32.mrf.mxu0
    %v288 = vadd.f32 %v213, %v287
    %v289 = vpop.f32.mrf.mxu0
    %290 = vdwg.mxu0
    %v292 = vlaneseq
    %v293 = vshrl.u32 %v292, 7
    %v294 = vsub.s32 0, %v293
    %v295 = vrot.slane %v45, %v294
    %v297 = vadd.f32 %v288, %v295
    %v298 = vxor.u32 %v297, 2147483648
    %v299 = vmul.f32 %v298, 1.442695
    %v300 = vpow.pop %v299
    %v301 = vadd.f32 %v300, 1.0
    %v302 = vrcp.pop %v301
    %v303 = vmul.f32 1.0, %v302
    %v304 = vtanh.pop %v297
    %v305 = vmul.f32 %v303, 0.0
    %307 = vrot.lane.b32.xlu0 %v304, 64
    %v308 = vpop.permute.xlu0 %307
    %v310 = vmul.f32 %v303, %v308
    %312 = vrot.lane.b32.xlu0 %v310, 32
    %v313 = vpop.permute.xlu0 %312
    %v315 = vadd.f32 %v305, %v313
    %v316 = vtanh.pop %v315
    %318 = vrot.lane.b32.xlu0 %v316, 64
    %v319 = vpop.permute.xlu0 %318
    %v321 = vmul.f32 %v303, %v319
    %s322 = scalar_lea.vmem %s0, 2
    %v323 = vld [vmem:[%s322] sm:$0x3]
    %324 = vmatprep.subr.mxu0 0.0
    %325 = vmatpush1.msra.mxu0 0.0
    %326 = vmatprep.subr.mxu0 0.0
    %327 = vmatpush1.msra.mxu0 0.0
    %328 = vmatprep.subr.mxu0 0.0
    %329 = vmatpush1.msra.mxu0 0.0
    %330 = vmatprep.subr.mxu0 0.0
    %331 = vmatpush1.msra.mxu0 0.0
    %332 = vmatprep.subr.mxu0 0.0
    %333 = vmatpush1.msra.mxu0 0.0
    %334 = vmatprep.subr.mxu0 0.0
    %335 = vmatpush1.msra.mxu0 0.0
    %336 = vmatprep.subr.mxu0 0.0
    %337 = vmatpush1.msra.mxu0 0.0
    %338 = vmatprep.subr.mxu0 0.0
    %339 = vmatpush1.msra.mxu0 0.0
    %340 = vmatprep.subr.mxu0 0.0
    %341 = vmatpush1.msra.mxu0 0.0
    %342 = vmatprep.subr.mxu0 0.0
    %343 = vmatpush1.msra.mxu0 0.0
    %344 = vmatprep.subr.mxu0 0.0
    %345 = vmatpush1.msra.mxu0 0.0
    %346 = vmatprep.subr.mxu0 0.0
    %347 = vmatpush1.msra.mxu0 0.0
    %348 = vmatprep.subr.mxu0 0.0
    %349 = vmatpush1.msra.mxu0 %v36
    %350 = vmatprep.subr.mxu0 0.0
    %351 = vmatpush1.msra.mxu0 %v35
    %352 = vmatprep.subr.mxu0 0.0
    %353 = vmatpush1.msra.mxu0 %v34
    %354 = vmatprep.subr.mxu0 0.0
    %355 = vmatpush1.msra.mxu0 %v33
    %356 = vmatprep.subr.mxu0 0.0
    %357 = vmatpush2.msra.mxu0 0.0
    %358 = vmatprep.subr.mxu0 0.0
    %359 = vmatpush2.msra.mxu0 0.0
    %360 = vmatprep.subr.mxu0 0.0
    %361 = vmatpush2.msra.mxu0 0.0
    %362 = vmatprep.subr.mxu0 0.0
    %363 = vmatpush2.msra.mxu0 0.0
    %364 = vmatprep.subr.mxu0 0.0
    %365 = vmatpush2.msra.mxu0 0.0
    %366 = vmatprep.subr.mxu0 0.0
    %367 = vmatpush2.msra.mxu0 0.0
    %368 = vmatprep.subr.mxu0 0.0
    %369 = vmatpush2.msra.mxu0 0.0
    %370 = vmatprep.subr.mxu0 0.0
    %371 = vmatpush2.msra.mxu0 0.0
    %372 = vmatprep.subr.mxu0 0.0
    %373 = vmatpush2.msra.mxu0 0.0
    %374 = vmatprep.subr.mxu0 0.0
    %375 = vmatpush2.msra.mxu0 0.0
    %376 = vmatprep.subr.mxu0 0.0
    %377 = vmatpush2.msra.mxu0 0.0
    %378 = vmatprep.subr.mxu0 0.0
    %379 = vmatpush2.msra.mxu0 0.0
    %380 = vmatprep.subr.mxu0 0.0
    %381 = vmatpush2.msra.mxu0 0.0
    %382 = vmatprep.subr.mxu0 0.0
    %383 = vmatpush2.msra.mxu0 0.0
    %384 = vmatprep.subr.mxu0 0.0
    %385 = vmatpush2.msra.mxu0 0.0
    %386 = vmatprep.subr.mxu0 0.0
    %387 = vmatpush2.msra.mxu0 0.0
    %388 = vmatprep.mubr.f32.mxu0 0.0
    %389 = vmatmul.mubr.f32.gmra.mxu0 %v219
    %v390 = vpop.f32.mrf.mxu0
    %v391 = vadd.f32 0.0, %v390
    %v392 = vpop.f32.mrf.mxu0
    %393 = vdwg.mxu0
    %v394 = vadd.f32 %v323, %v391
    %v395 = vxor.u32 %v394, 2147483648
    %v396 = vmul.f32 %v395, 1.442695
    %v397 = vpow.pop %v396
    %v398 = vadd.f32 %v397, 1.0
    %v399 = vrcp.pop %v398
    %v400 = vmul.f32 1.0, %v399
    %v401 = vtanh.pop %v394
    %v402 = vmul.f32 %v400, %v139
    %404 = vrot.lane.b32.xlu0 %v401, 64
    %v405 = vpop.permute.xlu0 %404
    %v407 = vmul.f32 %v400, %v405
    %409 = vrot.lane.b32.xlu0 %v407, 32
    %v410 = vpop.permute.xlu0 %409
    %v412 = vadd.f32 %v402, %v410
    %v413 = vtanh.pop %v412
    %415 = vrot.lane.b32.xlu0 %v413, 64
    %v416 = vpop.permute.xlu0 %415
    %v418 = vmul.f32 %v400, %v416
    %420 = vrot.lane.b32.xlu0 %v321, 32
    %v421 = vpop.permute.xlu0 %420
    %v422 = vsel %vm47, %v421, 0
    %424 = vmatprep.subr.mxu0 0.0
    %425 = vmatpush1.msra.mxu0 0.0
    %426 = vmatprep.subr.mxu0 0.0
    %427 = vmatpush1.msra.mxu0 0.0
    %428 = vmatprep.subr.mxu0 0.0
    %429 = vmatpush1.msra.mxu0 0.0
    %430 = vmatprep.subr.mxu0 0.0
    %431 = vmatpush1.msra.mxu0 0.0
    %432 = vmatprep.subr.mxu0 0.0
    %433 = vmatpush1.msra.mxu0 0.0
    %434 = vmatprep.subr.mxu0 0.0
    %435 = vmatpush1.msra.mxu0 0.0
    %436 = vmatprep.subr.mxu0 0.0
    %437 = vmatpush1.msra.mxu0 0.0
    %438 = vmatprep.subr.mxu0 0.0
    %439 = vmatpush1.msra.mxu0 0.0
    %440 = vmatprep.subr.mxu0 0.0
    %441 = vmatpush1.msra.mxu0 0.0
    %442 = vmatprep.subr.mxu0 0.0
    %443 = vmatpush1.msra.mxu0 0.0
    %444 = vmatprep.subr.mxu0 0.0
    %445 = vmatpush1.msra.mxu0 0.0
    %446 = vmatprep.subr.mxu0 0.0
    %447 = vmatpush1.msra.mxu0 0.0
    %448 = vmatprep.subr.mxu0 0.0
    %449 = vmatpush1.msra.mxu0 %v44
    %450 = vmatprep.subr.mxu0 0.0
    %451 = vmatpush1.msra.mxu0 %v43
    %452 = vmatprep.subr.mxu0 0.0
    %453 = vmatpush1.msra.mxu0 %v42
    %454 = vmatprep.subr.mxu0 0.0
    %455 = vmatpush1.msra.mxu0 %v41
    %456 = vmatprep.subr.mxu0 0.0
    %457 = vmatpush2.msra.mxu0 0.0
    %458 = vmatprep.subr.mxu0 0.0
    %459 = vmatpush2.msra.mxu0 0.0
    %460 = vmatprep.subr.mxu0 0.0
    %461 = vmatpush2.msra.mxu0 0.0
    %462 = vmatprep.subr.mxu0 0.0
    %463 = vmatpush2.msra.mxu0 0.0
    %464 = vmatprep.subr.mxu0 0.0
    %465 = vmatpush2.msra.mxu0 0.0
    %466 = vmatprep.subr.mxu0 0.0
    %467 = vmatpush2.msra.mxu0 0.0
    %468 = vmatprep.subr.mxu0 0.0
    %469 = vmatpush2.msra.mxu0 0.0
    %470 = vmatprep.subr.mxu0 0.0
    %471 = vmatpush2.msra.mxu0 0.0
    %472 = vmatprep.subr.mxu0 0.0
    %473 = vmatpush2.msra.mxu0 0.0
    %474 = vmatprep.subr.mxu0 0.0
    %475 = vmatpush2.msra.mxu0 0.0
    %476 = vmatprep.subr.mxu0 0.0
    %477 = vmatpush2.msra.mxu0 0.0
    %478 = vmatprep.subr.mxu0 0.0
    %479 = vmatpush2.msra.mxu0 0.0
    %480 = vmatprep.subr.mxu0 0.0
    %481 = vmatpush2.msra.mxu0 0.0
    %482 = vmatprep.subr.mxu0 0.0
    %483 = vmatpush2.msra.mxu0 0.0
    %484 = vmatprep.subr.mxu0 0.0
    %485 = vmatpush2.msra.mxu0 0.0
    %486 = vmatprep.subr.mxu0 0.0
    %487 = vmatpush2.msra.mxu0 0.0
    %488 = vmatprep.mubr.f32.mxu0 0.0
    %489 = vmatmul.mubr.f32.gmra.mxu0 %v422
    %v490 = vpop.f32.mrf.mxu0
    %v491 = vadd.f32 0.0, %v490
    %v492 = vpop.f32.mrf.mxu0
    %493 = vdwg.mxu0
    %495 = vrot.lane.b32.xlu0 %v418, 32
    %v496 = vpop.permute.xlu0 %495
    %v497 = vsel %vm47, %v496, 0
    %499 = vmatprep.subr.mxu0 0.0
    %500 = vmatpush1.msra.mxu0 0.0
    %501 = vmatprep.subr.mxu0 0.0
    %502 = vmatpush1.msra.mxu0 0.0
    %503 = vmatprep.subr.mxu0 0.0
    %504 = vmatpush1.msra.mxu0 0.0
    %505 = vmatprep.subr.mxu0 0.0
    %506 = vmatpush1.msra.mxu0 0.0
    %507 = vmatprep.subr.mxu0 0.0
    %508 = vmatpush1.msra.mxu0 0.0
    %509 = vmatprep.subr.mxu0 0.0
    %510 = vmatpush1.msra.mxu0 0.0
    %511 = vmatprep.subr.mxu0 0.0
    %512 = vmatpush1.msra.mxu0 0.0
    %513 = vmatprep.subr.mxu0 0.0
    %514 = vmatpush1.msra.mxu0 0.0
    %515 = vmatprep.subr.mxu0 0.0
    %516 = vmatpush1.msra.mxu0 0.0
    %517 = vmatprep.subr.mxu0 0.0
    %518 = vmatpush1.msra.mxu0 0.0
    %519 = vmatprep.subr.mxu0 0.0
    %520 = vmatpush1.msra.mxu0 0.0
    %521 = vmatprep.subr.mxu0 0.0
    %522 = vmatpush1.msra.mxu0 0.0
    %523 = vmatprep.subr.mxu0 0.0
    %524 = vmatpush1.msra.mxu0 %v40
    %525 = vmatprep.subr.mxu0 0.0
    %526 = vmatpush1.msra.mxu0 %v39
    %527 = vmatprep.subr.mxu0 0.0
    %528 = vmatpush1.msra.mxu0 %v38
    %529 = vmatprep.subr.mxu0 0.0
    %530 = vmatpush1.msra.mxu0 %v37
    %531 = vmatprep.subr.mxu0 0.0
    %532 = vmatpush2.msra.mxu0 0.0
    %533 = vmatprep.subr.mxu0 0.0
    %534 = vmatpush2.msra.mxu0 0.0
    %535 = vmatprep.subr.mxu0 0.0
    %536 = vmatpush2.msra.mxu0 0.0
    %537 = vmatprep.subr.mxu0 0.0
    %538 = vmatpush2.msra.mxu0 0.0
    %539 = vmatprep.subr.mxu0 0.0
    %540 = vmatpush2.msra.mxu0 0.0
    %541 = vmatprep.subr.mxu0 0.0
    %542 = vmatpush2.msra.mxu0 0.0
    %543 = vmatprep.subr.mxu0 0.0
    %544 = vmatpush2.msra.mxu0 0.0
    %545 = vmatprep.subr.mxu0 0.0
    %546 = vmatpush2.msra.mxu0 0.0
    %547 = vmatprep.subr.mxu0 0.0
    %548 = vmatpush2.msra.mxu0 0.0
    %549 = vmatprep.subr.mxu0 0.0
    %550 = vmatpush2.msra.mxu0 0.0
    %551 = vmatprep.subr.mxu0 0.0
    %552 = vmatpush2.msra.mxu0 0.0
    %553 = vmatprep.subr.mxu0 0.0
    %554 = vmatpush2.msra.mxu0 0.0
    %555 = vmatprep.subr.mxu0 0.0
    %556 = vmatpush2.msra.mxu0 0.0
    %557 = vmatprep.subr.mxu0 0.0
    %558 = vmatpush2.msra.mxu0 0.0
    %559 = vmatprep.subr.mxu0 0.0
    %560 = vmatpush2.msra.mxu0 0.0
    %561 = vmatprep.subr.mxu0 0.0
    %562 = vmatpush2.msra.mxu0 0.0
    %563 = vmatprep.mubr.f32.mxu0 0.0
    %564 = vmatmul.mubr.f32.gmra.mxu0 %v497
    %v565 = vpop.f32.mrf.mxu0
    %v566 = vadd.f32 %v491, %v565
    %v567 = vpop.f32.mrf.mxu0
    %568 = vdwg.mxu0
    %v569 = vadd.f32 %v566, %v295
    %v570 = vxor.u32 %v569, 2147483648
    %v571 = vmul.f32 %v570, 1.442695
    %v572 = vpow.pop %v571
    %v573 = vadd.f32 %v572, 1.0
    %v574 = vrcp.pop %v573
    %v575 = vmul.f32 1.0, %v574
    %v576 = vtanh.pop %v569
    %v577 = vmul.f32 %v575, %v315
    %579 = vrot.lane.b32.xlu0 %v576, 64
    %v580 = vpop.permute.xlu0 %579
    %v582 = vmul.f32 %v575, %v580
    %584 = vrot.lane.b32.xlu0 %v582, 32
    %v585 = vpop.permute.xlu0 %584
    %v587 = vadd.f32 %v577, %v585
    %v588 = vtanh.pop %v587
    %590 = vrot.lane.b32.xlu0 %v588, 64
    %v591 = vpop.permute.xlu0 %590
    %v593 = vmul.f32 %v575, %v591
    %s594 = scalar_lea.vmem %s0, 4
    %v595 = vld [vmem:[%s594] sm:$0x3]
    %596 = vmatprep.subr.mxu0 0.0
    %597 = vmatpush1.msra.mxu0 0.0
    %598 = vmatprep.subr.mxu0 0.0
    %599 = vmatpush1.msra.mxu0 0.0
    %600 = vmatprep.subr.mxu0 0.0
    %601 = vmatpush1.msra.mxu0 0.0
    %602 = vmatprep.subr.mxu0 0.0
    %603 = vmatpush1.msra.mxu0 0.0
    %604 = vmatprep.subr.mxu0 0.0
    %605 = vmatpush1.msra.mxu0 0.0
    %606 = vmatprep.subr.mxu0 0.0
    %607 = vmatpush1.msra.mxu0 0.0
    %608 = vmatprep.subr.mxu0 0.0
    %609 = vmatpush1.msra.mxu0 0.0
    %610 = vmatprep.subr.mxu0 0.0
    %611 = vmatpush1.msra.mxu0 0.0
    %612 = vmatprep.subr.mxu0 0.0
    %613 = vmatpush1.msra.mxu0 0.0
    %614 = vmatprep.subr.mxu0 0.0
    %615 = vmatpush1.msra.mxu0 0.0
    %616 = vmatprep.subr.mxu0 0.0
    %617 = vmatpush1.msra.mxu0 0.0
    %618 = vmatprep.subr.mxu0 0.0
    %619 = vmatpush1.msra.mxu0 0.0
    %620 = vmatprep.subr.mxu0 0.0
    %621 = vmatpush1.msra.mxu0 %v36
    %622 = vmatprep.subr.mxu0 0.0
    %623 = vmatpush1.msra.mxu0 %v35
    %624 = vmatprep.subr.mxu0 0.0
    %625 = vmatpush1.msra.mxu0 %v34
    %626 = vmatprep.subr.mxu0 0.0
    %627 = vmatpush1.msra.mxu0 %v33
    %628 = vmatprep.subr.mxu0 0.0
    %629 = vmatpush2.msra.mxu0 0.0
    %630 = vmatprep.subr.mxu0 0.0
    %631 = vmatpush2.msra.mxu0 0.0
    %632 = vmatprep.subr.mxu0 0.0
    %633 = vmatpush2.msra.mxu0 0.0
    %634 = vmatprep.subr.mxu0 0.0
    %635 = vmatpush2.msra.mxu0 0.0
    %636 = vmatprep.subr.mxu0 0.0
    %637 = vmatpush2.msra.mxu0 0.0
    %638 = vmatprep.subr.mxu0 0.0
    %639 = vmatpush2.msra.mxu0 0.0
    %640 = vmatprep.subr.mxu0 0.0
    %641 = vmatpush2.msra.mxu0 0.0
    %642 = vmatprep.subr.mxu0 0.0
    %643 = vmatpush2.msra.mxu0 0.0
    %644 = vmatprep.subr.mxu0 0.0
    %645 = vmatpush2.msra.mxu0 0.0
    %646 = vmatprep.subr.mxu0 0.0
    %647 = vmatpush2.msra.mxu0 0.0
    %648 = vmatprep.subr.mxu0 0.0
    %649 = vmatpush2.msra.mxu0 0.0
    %650 = vmatprep.subr.mxu0 0.0
    %651 = vmatpush2.msra.mxu0 0.0
    %652 = vmatprep.subr.mxu0 0.0
    %653 = vmatpush2.msra.mxu0 0.0
    %654 = vmatprep.subr.mxu0 0.0
    %655 = vmatpush2.msra.mxu0 0.0
    %656 = vmatprep.subr.mxu0 0.0
    %657 = vmatpush2.msra.mxu0 0.0
    %658 = vmatprep.subr.mxu0 0.0
    %659 = vmatpush2.msra.mxu0 0.0
    %660 = vmatprep.mubr.f32.mxu0 0.0
    %661 = vmatmul.mubr.f32.gmra.mxu0 %v497
    %v662 = vpop.f32.mrf.mxu0
    %v663 = vadd.f32 0.0, %v662
    %v664 = vpop.f32.mrf.mxu0
    %665 = vdwg.mxu0
    %v666 = vadd.f32 %v595, %v663
    %v667 = vxor.u32 %v666, 2147483648
    %v668 = vmul.f32 %v667, 1.442695
    %v669 = vpow.pop %v668
    %v670 = vadd.f32 %v669, 1.0
    %v671 = vrcp.pop %v670
    %v672 = vmul.f32 1.0, %v671
    %v673 = vtanh.pop %v666
    %v674 = vmul.f32 %v672, %v412
    %676 = vrot.lane.b32.xlu0 %v673, 64
    %v677 = vpop.permute.xlu0 %676
    %v679 = vmul.f32 %v672, %v677
    %681 = vrot.lane.b32.xlu0 %v679, 32
    %v682 = vpop.permute.xlu0 %681
    %v684 = vadd.f32 %v674, %v682
    %v685 = vtanh.pop %v684
    %687 = vrot.lane.b32.xlu0 %v685, 64
    %v688 = vpop.permute.xlu0 %687
    %v690 = vmul.f32 %v672, %v688
    %692 = vrot.lane.b32.xlu0 %v593, 32
    %v693 = vpop.permute.xlu0 %692
    %v694 = vsel %vm47, %v693, 0
    %696 = vmatprep.subr.mxu0 0.0
    %697 = vmatpush1.msra.mxu0 0.0
    %698 = vmatprep.subr.mxu0 0.0
    %699 = vmatpush1.msra.mxu0 0.0
    %700 = vmatprep.subr.mxu0 0.0
    %701 = vmatpush1.msra.mxu0 0.0
    %702 = vmatprep.subr.mxu0 0.0
    %703 = vmatpush1.msra.mxu0 0.0
    %704 = vmatprep.subr.mxu0 0.0
    %705 = vmatpush1.msra.mxu0 0.0
    %706 = vmatprep.subr.mxu0 0.0
    %707 = vmatpush1.msra.mxu0 0.0
    %708 = vmatprep.subr.mxu0 0.0
    %709 = vmatpush1.msra.mxu0 0.0
    %710 = vmatprep.subr.mxu0 0.0
    %711 = vmatpush1.msra.mxu0 0.0
    %712 = vmatprep.subr.mxu0 0.0
    %713 = vmatpush1.msra.mxu0 0.0
    %714 = vmatprep.subr.mxu0 0.0
    %715 = vmatpush1.msra.mxu0 0.0
    %716 = vmatprep.subr.mxu0 0.0
    %717 = vmatpush1.msra.mxu0 0.0
    %718 = vmatprep.subr.mxu0 0.0
    %719 = vmatpush1.msra.mxu0 0.0
    %720 = vmatprep.subr.mxu0 0.0
    %721 = vmatpush1.msra.mxu0 %v44
    %722 = vmatprep.subr.mxu0 0.0
    %723 = vmatpush1.msra.mxu0 %v43
    %724 = vmatprep.subr.mxu0 0.0
    %725 = vmatpush1.msra.mxu0 %v42
    %726 = vmatprep.subr.mxu0 0.0
    %727 = vmatpush1.msra.mxu0 %v41
    %728 = vmatprep.subr.mxu0 0.0
    %729 = vmatpush2.msra.mxu0 0.0
    %730 = vmatprep.subr.mxu0 0.0
    %731 = vmatpush2.msra.mxu0 0.0
    %732 = vmatprep.subr.mxu0 0.0
    %733 = vmatpush2.msra.mxu0 0.0
    %734 = vmatprep.subr.mxu0 0.0
    %735 = vmatpush2.msra.mxu0 0.0
    %736 = vmatprep.subr.mxu0 0.0
    %737 = vmatpush2.msra.mxu0 0.0
    %738 = vmatprep.subr.mxu0 0.0
    %739 = vmatpush2.msra.mxu0 0.0
    %740 = vmatprep.subr.mxu0 0.0
    %741 = vmatpush2.msra.mxu0 0.0
    %742 = vmatprep.subr.mxu0 0.0
    %743 = vmatpush2.msra.mxu0 0.0
    %744 = vmatprep.subr.mxu0 0.0
    %745 = vmatpush2.msra.mxu0 0.0
    %746 = vmatprep.subr.mxu0 0.0
    %747 = vmatpush2.msra.mxu0 0.0
    %748 = vmatprep.subr.mxu0 0.0
    %749 = vmatpush2.msra.mxu0 0.0
    %750 = vmatprep.subr.mxu0 0.0
    %751 = vmatpush2.msra.mxu0 0.0
    %752 = vmatprep.subr.mxu0 0.0
    %753 = vmatpush2.msra.mxu0 0.0
    %754 = vmatprep.subr.mxu0 0.0
    %755 = vmatpush2.msra.mxu0 0.0
    %756 = vmatprep.subr.mxu0 0.0
    %757 = vmatpush2.msra.mxu0 0.0
    %758 = vmatprep.subr.mxu0 0.0
    %759 = vmatpush2.msra.mxu0 0.0
    %760 = vmatprep.mubr.f32.mxu0 0.0
    %761 = vmatmul.mubr.f32.gmra.mxu0 %v694
    %v762 = vpop.f32.mrf.mxu0
    %v763 = vadd.f32 0.0, %v762
    %v764 = vpop.f32.mrf.mxu0
    %765 = vdwg.mxu0
    %767 = vrot.lane.b32.xlu0 %v690, 32
    %v768 = vpop.permute.xlu0 %767
    %v769 = vsel %vm47, %v768, 0
    %771 = vmatprep.subr.mxu0 0.0
    %772 = vmatpush1.msra.mxu0 0.0
    %773 = vmatprep.subr.mxu0 0.0
    %774 = vmatpush1.msra.mxu0 0.0
    %775 = vmatprep.subr.mxu0 0.0
    %776 = vmatpush1.msra.mxu0 0.0
    %777 = vmatprep.subr.mxu0 0.0
    %778 = vmatpush1.msra.mxu0 0.0
    %779 = vmatprep.subr.mxu0 0.0
    %780 = vmatpush1.msra.mxu0 0.0
    %781 = vmatprep.subr.mxu0 0.0
    %782 = vmatpush1.msra.mxu0 0.0
    %783 = vmatprep.subr.mxu0 0.0
    %784 = vmatpush1.msra.mxu0 0.0
    %785 = vmatprep.subr.mxu0 0.0
    %786 = vmatpush1.msra.mxu0 0.0
    %787 = vmatprep.subr.mxu0 0.0
    %788 = vmatpush1.msra.mxu0 0.0
    %789 = vmatprep.subr.mxu0 0.0
    %790 = vmatpush1.msra.mxu0 0.0
    %791 = vmatprep.subr.mxu0 0.0
    %792 = vmatpush1.msra.mxu0 0.0
    %793 = vmatprep.subr.mxu0 0.0
    %794 = vmatpush1.msra.mxu0 0.0
    %795 = vmatprep.subr.mxu0 0.0
    %796 = vmatpush1.msra.mxu0 %v40
    %797 = vmatprep.subr.mxu0 0.0
    %798 = vmatpush1.msra.mxu0 %v39
    %799 = vmatprep.subr.mxu0 0.0
    %800 = vmatpush1.msra.mxu0 %v38
    %801 = vmatprep.subr.mxu0 0.0
    %802 = vmatpush1.msra.mxu0 %v37
    %803 = vmatprep.subr.mxu0 0.0
    %804 = vmatpush2.msra.mxu0 0.0
    %805 = vmatprep.subr.mxu0 0.0
    %806 = vmatpush2.msra.mxu0 0.0
    %807 = vmatprep.subr.mxu0 0.0
    %808 = vmatpush2.msra.mxu0 0.0
    %809 = vmatprep.subr.mxu0 0.0
    %810 = vmatpush2.msra.mxu0 0.0
    %811 = vmatprep.subr.mxu0 0.0
    %812 = vmatpush2.msra.mxu0 0.0
    %813 = vmatprep.subr.mxu0 0.0
    %814 = vmatpush2.msra.mxu0 0.0
    %815 = vmatprep.subr.mxu0 0.0
    %816 = vmatpush2.msra.mxu0 0.0
    %817 = vmatprep.subr.mxu0 0.0
    %818 = vmatpush2.msra.mxu0 0.0
    %819 = vmatprep.subr.mxu0 0.0
    %820 = vmatpush2.msra.mxu0 0.0
    %821 = vmatprep.subr.mxu0 0.0
    %822 = vmatpush2.msra.mxu0 0.0
    %823 = vmatprep.subr.mxu0 0.0
    %824 = vmatpush2.msra.mxu0 0.0
    %825 = vmatprep.subr.mxu0 0.0
    %826 = vmatpush2.msra.mxu0 0.0
    %827 = vmatprep.subr.mxu0 0.0
    %828 = vmatpush2.msra.mxu0 0.0
    %829 = vmatprep.subr.mxu0 0.0
    %830 = vmatpush2.msra.mxu0 0.0
    %831 = vmatprep.subr.mxu0 0.0
    %832 = vmatpush2.msra.mxu0 0.0
    %833 = vmatprep.subr.mxu0 0.0
    %834 = vmatpush2.msra.mxu0 0.0
    %835 = vmatprep.mubr.f32.mxu0 0.0
    %836 = vmatmul.mubr.f32.gmra.mxu0 %v769
    %v837 = vpop.f32.mrf.mxu0
    %v838 = vadd.f32 %v763, %v837
    %v839 = vpop.f32.mrf.mxu0
    %840 = vdwg.mxu0
    %v841 = vadd.f32 %v838, %v295
    %v842 = vxor.u32 %v841, 2147483648
    %v843 = vmul.f32 %v842, 1.442695
    %v844 = vpow.pop %v843
    %v845 = vadd.f32 %v844, 1.0
    %v846 = vrcp.pop %v845
    %v847 = vmul.f32 1.0, %v846
    %v848 = vtanh.pop %v841
    %v849 = vmul.f32 %v847, %v587
    %851 = vrot.lane.b32.xlu0 %v848, 64
    %v852 = vpop.permute.xlu0 %851
    %v854 = vmul.f32 %v847, %v852
    %856 = vrot.lane.b32.xlu0 %v854, 32
    %v857 = vpop.permute.xlu0 %856
    %v859 = vadd.f32 %v849, %v857
    %v860 = vtanh.pop %v859
    %862 = vrot.lane.b32.xlu0 %v860, 64
    %v863 = vpop.permute.xlu0 %862
    %v865 = vmul.f32 %v847, %v863
    %s866 = scalar_lea.vmem %s0, 6
    %v867 = vld [vmem:[%s866] sm:$0x3]
    %868 = vmatprep.subr.mxu0 0.0
    %869 = vmatpush1.msra.mxu0 0.0
    %870 = vmatprep.subr.mxu0 0.0
    %871 = vmatpush1.msra.mxu0 0.0
    %872 = vmatprep.subr.mxu0 0.0
    %873 = vmatpush1.msra.mxu0 0.0
    %874 = vmatprep.subr.mxu0 0.0
    %875 = vmatpush1.msra.mxu0 0.0
    %876 = vmatprep.subr.mxu0 0.0
    %877 = vmatpush1.msra.mxu0 0.0
    %878 = vmatprep.subr.mxu0 0.0
    %879 = vmatpush1.msra.mxu0 0.0
    %880 = vmatprep.subr.mxu0 0.0
    %881 = vmatpush1.msra.mxu0 0.0
    %882 = vmatprep.subr.mxu0 0.0
    %883 = vmatpush1.msra.mxu0 0.0
    %884 = vmatprep.subr.mxu0 0.0
    %885 = vmatpush1.msra.mxu0 0.0
    %886 = vmatprep.subr.mxu0 0.0
    %887 = vmatpush1.msra.mxu0 0.0
    %888 = vmatprep.subr.mxu0 0.0
    %889 = vmatpush1.msra.mxu0 0.0
    %890 = vmatprep.subr.mxu0 0.0
    %891 = vmatpush1.msra.mxu0 0.0
    %892 = vmatprep.subr.mxu0 0.0
    %893 = vmatpush1.msra.mxu0 %v36
    %894 = vmatprep.subr.mxu0 0.0
    %895 = vmatpush1.msra.mxu0 %v35
    %896 = vmatprep.subr.mxu0 0.0
    %897 = vmatpush1.msra.mxu0 %v34
    %898 = vmatprep.subr.mxu0 0.0
    %899 = vmatpush1.msra.mxu0 %v33
    %900 = vmatprep.subr.mxu0 0.0
    %901 = vmatpush2.msra.mxu0 0.0
    %902 = vmatprep.subr.mxu0 0.0
    %903 = vmatpush2.msra.mxu0 0.0
    %904 = vmatprep.subr.mxu0 0.0
    %905 = vmatpush2.msra.mxu0 0.0
    %906 = vmatprep.subr.mxu0 0.0
    %907 = vmatpush2.msra.mxu0 0.0
    %908 = vmatprep.subr.mxu0 0.0
    %909 = vmatpush2.msra.mxu0 0.0
    %910 = vmatprep.subr.mxu0 0.0
    %911 = vmatpush2.msra.mxu0 0.0
    %912 = vmatprep.subr.mxu0 0.0
    %913 = vmatpush2.msra.mxu0 0.0
    %914 = vmatprep.subr.mxu0 0.0
    %915 = vmatpush2.msra.mxu0 0.0
    %916 = vmatprep.subr.mxu0 0.0
    %917 = vmatpush2.msra.mxu0 0.0
    %918 = vmatprep.subr.mxu0 0.0
    %919 = vmatpush2.msra.mxu0 0.0
    %920 = vmatprep.subr.mxu0 0.0
    %921 = vmatpush2.msra.mxu0 0.0
    %922 = vmatprep.subr.mxu0 0.0
    %923 = vmatpush2.msra.mxu0 0.0
    %924 = vmatprep.subr.mxu0 0.0
    %925 = vmatpush2.msra.mxu0 0.0
    %926 = vmatprep.subr.mxu0 0.0
    %927 = vmatpush2.msra.mxu0 0.0
    %928 = vmatprep.subr.mxu0 0.0
    %929 = vmatpush2.msra.mxu0 0.0
    %930 = vmatprep.subr.mxu0 0.0
    %931 = vmatpush2.msra.mxu0 0.0
    %932 = vmatprep.mubr.f32.mxu0 0.0
    %933 = vmatmul.mubr.f32.gmra.mxu0 %v769
    %v934 = vpop.f32.mrf.mxu0
    %v935 = vadd.f32 0.0, %v934
    %v936 = vpop.f32.mrf.mxu0
    %937 = vdwg.mxu0
    %v938 = vadd.f32 %v867, %v935
    %v939 = vxor.u32 %v938, 2147483648
    %v940 = vmul.f32 %v939, 1.442695
    %v941 = vpow.pop %v940
    %v942 = vadd.f32 %v941, 1.0
    %v943 = vrcp.pop %v942
    %v944 = vmul.f32 1.0, %v943
    %v945 = vtanh.pop %v938
    %v946 = vmul.f32 %v944, %v684
    %948 = vrot.lane.b32.xlu0 %v945, 64
    %v949 = vpop.permute.xlu0 %948
    %v951 = vmul.f32 %v944, %v949
    %953 = vrot.lane.b32.xlu0 %v951, 32
    %v954 = vpop.permute.xlu0 %953
    %v956 = vadd.f32 %v946, %v954
    %v957 = vtanh.pop %v956
    %959 = vrot.lane.b32.xlu0 %v957, 64
    %v960 = vpop.permute.xlu0 %959
    %v962 = vmul.f32 %v944, %v960
    %964 = vrot.lane.b32.xlu0 %v865, 32
    %v965 = vpop.permute.xlu0 %964
    %v966 = vsel %vm47, %v965, 0
    %968 = vmatprep.subr.mxu0 0.0
    %969 = vmatpush1.msra.mxu0 0.0
    %970 = vmatprep.subr.mxu0 0.0
    %971 = vmatpush1.msra.mxu0 0.0
    %972 = vmatprep.subr.mxu0 0.0
    %973 = vmatpush1.msra.mxu0 0.0
    %974 = vmatprep.subr.mxu0 0.0
    %975 = vmatpush1.msra.mxu0 0.0
    %976 = vmatprep.subr.mxu0 0.0
    %977 = vmatpush1.msra.mxu0 0.0
    %978 = vmatprep.subr.mxu0 0.0
    %979 = vmatpush1.msra.mxu0 0.0
    %980 = vmatprep.subr.mxu0 0.0
    %981 = vmatpush1.msra.mxu0 0.0
    %982 = vmatprep.subr.mxu0 0.0
    %983 = vmatpush1.msra.mxu0 0.0
    %984 = vmatprep.subr.mxu0 0.0
    %985 = vmatpush1.msra.mxu0 0.0
    %986 = vmatprep.subr.mxu0 0.0
    %987 = vmatpush1.msra.mxu0 0.0
    %988 = vmatprep.subr.mxu0 0.0
    %989 = vmatpush1.msra.mxu0 0.0
    %990 = vmatprep.subr.mxu0 0.0
    %991 = vmatpush1.msra.mxu0 0.0
    %992 = vmatprep.subr.mxu0 0.0
    %993 = vmatpush1.msra.mxu0 %v44
    %994 = vmatprep.subr.mxu0 0.0
    %995 = vmatpush1.msra.mxu0 %v43
    %996 = vmatprep.subr.mxu0 0.0
    %997 = vmatpush1.msra.mxu0 %v42
    %998 = vmatprep.subr.mxu0 0.0
    %999 = vmatpush1.msra.mxu0 %v41
    %1000 = vmatprep.subr.mxu0 0.0
    %1001 = vmatpush2.msra.mxu0 0.0
    %1002 = vmatprep.subr.mxu0 0.0
    %1003 = vmatpush2.msra.mxu0 0.0
    %1004 = vmatprep.subr.mxu0 0.0
    %1005 = vmatpush2.msra.mxu0 0.0
    %1006 = vmatprep.subr.mxu0 0.0
    %1007 = vmatpush2.msra.mxu0 0.0
    %1008 = vmatprep.subr.mxu0 0.0
    %1009 = vmatpush2.msra.mxu0 0.0
    %1010 = vmatprep.subr.mxu0 0.0
    %1011 = vmatpush2.msra.mxu0 0.0
    %1012 = vmatprep.subr.mxu0 0.0
    %1013 = vmatpush2.msra.mxu0 0.0
    %1014 = vmatprep.subr.mxu0 0.0
    %1015 = vmatpush2.msra.mxu0 0.0
    %1016 = vmatprep.subr.mxu0 0.0
    %1017 = vmatpush2.msra.mxu0 0.0
    %1018 = vmatprep.subr.mxu0 0.0
    %1019 = vmatpush2.msra.mxu0 0.0
    %1020 = vmatprep.subr.mxu0 0.0
    %1021 = vmatpush2.msra.mxu0 0.0
    %1022 = vmatprep.subr.mxu0 0.0
    %1023 = vmatpush2.msra.mxu0 0.0
    %1024 = vmatprep.subr.mxu0 0.0
    %1025 = vmatpush2.msra.mxu0 0.0
    %1026 = vmatprep.subr.mxu0 0.0
    %1027 = vmatpush2.msra.mxu0 0.0
    %1028 = vmatprep.subr.mxu0 0.0
    %1029 = vmatpush2.msra.mxu0 0.0
    %1030 = vmatprep.subr.mxu0 0.0
    %1031 = vmatpush2.msra.mxu0 0.0
    %1032 = vmatprep.mubr.f32.mxu0 0.0
    %1033 = vmatmul.mubr.f32.gmra.mxu0 %v966
    %v1034 = vpop.f32.mrf.mxu0
    %v1035 = vadd.f32 0.0, %v1034
    %v1036 = vpop.f32.mrf.mxu0
    %1037 = vdwg.mxu0
    %1039 = vrot.lane.b32.xlu0 %v962, 32
    %v1040 = vpop.permute.xlu0 %1039
    %v1041 = vsel %vm47, %v1040, 0
    %1043 = vmatprep.subr.mxu0 0.0
    %1044 = vmatpush1.msra.mxu0 0.0
    %1045 = vmatprep.subr.mxu0 0.0
    %1046 = vmatpush1.msra.mxu0 0.0
    %1047 = vmatprep.subr.mxu0 0.0
    %1048 = vmatpush1.msra.mxu0 0.0
    %1049 = vmatprep.subr.mxu0 0.0
    %1050 = vmatpush1.msra.mxu0 0.0
    %1051 = vmatprep.subr.mxu0 0.0
    %1052 = vmatpush1.msra.mxu0 0.0
    %1053 = vmatprep.subr.mxu0 0.0
    %1054 = vmatpush1.msra.mxu0 0.0
    %1055 = vmatprep.subr.mxu0 0.0
    %1056 = vmatpush1.msra.mxu0 0.0
    %1057 = vmatprep.subr.mxu0 0.0
    %1058 = vmatpush1.msra.mxu0 0.0
    %1059 = vmatprep.subr.mxu0 0.0
    %1060 = vmatpush1.msra.mxu0 0.0
    %1061 = vmatprep.subr.mxu0 0.0
    %1062 = vmatpush1.msra.mxu0 0.0
    %1063 = vmatprep.subr.mxu0 0.0
    %1064 = vmatpush1.msra.mxu0 0.0
    %1065 = vmatprep.subr.mxu0 0.0
    %1066 = vmatpush1.msra.mxu0 0.0
    %1067 = vmatprep.subr.mxu0 0.0
    %1068 = vmatpush1.msra.mxu0 %v40
    %1069 = vmatprep.subr.mxu0 0.0
    %1070 = vmatpush1.msra.mxu0 %v39
    %1071 = vmatprep.subr.mxu0 0.0
    %1072 = vmatpush1.msra.mxu0 %v38
    %1073 = vmatprep.subr.mxu0 0.0
    %1074 = vmatpush1.msra.mxu0 %v37
    %1075 = vmatprep.subr.mxu0 0.0
    %1076 = vmatpush2.msra.mxu0 0.0
    %1077 = vmatprep.subr.mxu0 0.0
    %1078 = vmatpush2.msra.mxu0 0.0
    %1079 = vmatprep.subr.mxu0 0.0
    %1080 = vmatpush2.msra.mxu0 0.0
    %1081 = vmatprep.subr.mxu0 0.0
    %1082 = vmatpush2.msra.mxu0 0.0
    %1083 = vmatprep.subr.mxu0 0.0
    %1084 = vmatpush2.msra.mxu0 0.0
    %1085 = vmatprep.subr.mxu0 0.0
    %1086 = vmatpush2.msra.mxu0 0.0
    %1087 = vmatprep.subr.mxu0 0.0
    %1088 = vmatpush2.msra.mxu0 0.0
    %1089 = vmatprep.subr.mxu0 0.0
    %1090 = vmatpush2.msra.mxu0 0.0
    %1091 = vmatprep.subr.mxu0 0.0
    %1092 = vmatpush2.msra.mxu0 0.0
    %1093 = vmatprep.subr.mxu0 0.0
    %1094 = vmatpush2.msra.mxu0 0.0
    %1095 = vmatprep.subr.mxu0 0.0
    %1096 = vmatpush2.msra.mxu0 0.0
    %1097 = vmatprep.subr.mxu0 0.0
    %1098 = vmatpush2.msra.mxu0 0.0
    %1099 = vmatprep.subr.mxu0 0.0
    %1100 = vmatpush2.msra.mxu0 0.0
    %1101 = vmatprep.subr.mxu0 0.0
    %1102 = vmatpush2.msra.mxu0 0.0
    %1103 = vmatprep.subr.mxu0 0.0
    %1104 = vmatpush2.msra.mxu0 0.0
    %1105 = vmatprep.subr.mxu0 0.0
    %1106 = vmatpush2.msra.mxu0 0.0
    %1107 = vmatprep.mubr.f32.mxu0 0.0
    %1108 = vmatmul.mubr.f32.gmra.mxu0 %v1041
    %v1109 = vpop.f32.mrf.mxu0
    %v1110 = vadd.f32 %v1035, %v1109
    %v1111 = vpop.f32.mrf.mxu0
    %1112 = vdwg.mxu0
    %v1113 = vadd.f32 %v1110, %v295
    %v1114 = vxor.u32 %v1113, 2147483648
    %v1115 = vmul.f32 %v1114, 1.442695
    %v1116 = vpow.pop %v1115
    %v1117 = vadd.f32 %v1116, 1.0
    %v1118 = vrcp.pop %v1117
    %v1119 = vmul.f32 1.0, %v1118
    %v1120 = vtanh.pop %v1113
    %v1121 = vmul.f32 %v1119, %v859
    %1123 = vrot.lane.b32.xlu0 %v1120, 64
    %v1124 = vpop.permute.xlu0 %1123
    %v1126 = vmul.f32 %v1119, %v1124
    %1128 = vrot.lane.b32.xlu0 %v1126, 32
    %v1129 = vpop.permute.xlu0 %1128
    %v1131 = vadd.f32 %v1121, %v1129
    %v1132 = vtanh.pop %v1131
    %1134 = vrot.lane.b32.xlu0 %v1132, 64
    %v1135 = vpop.permute.xlu0 %1134
    %v1137 = vmul.f32 %v1119, %v1135
    %s1138 = scalar_lea.vmem %s0, 8
    %v1139 = vld [vmem:[%s1138] sm:$0x3]
    %1140 = vmatprep.subr.mxu0 0.0
    %1141 = vmatpush1.msra.mxu0 0.0
    %1142 = vmatprep.subr.mxu0 0.0
    %1143 = vmatpush1.msra.mxu0 0.0
    %1144 = vmatprep.subr.mxu0 0.0
    %1145 = vmatpush1.msra.mxu0 0.0
    %1146 = vmatprep.subr.mxu0 0.0
    %1147 = vmatpush1.msra.mxu0 0.0
    %1148 = vmatprep.subr.mxu0 0.0
    %1149 = vmatpush1.msra.mxu0 0.0
    %1150 = vmatprep.subr.mxu0 0.0
    %1151 = vmatpush1.msra.mxu0 0.0
    %1152 = vmatprep.subr.mxu0 0.0
    %1153 = vmatpush1.msra.mxu0 0.0
    %1154 = vmatprep.subr.mxu0 0.0
    %1155 = vmatpush1.msra.mxu0 0.0
    %1156 = vmatprep.subr.mxu0 0.0
    %1157 = vmatpush1.msra.mxu0 0.0
    %1158 = vmatprep.subr.mxu0 0.0
    %1159 = vmatpush1.msra.mxu0 0.0
    %1160 = vmatprep.subr.mxu0 0.0
    %1161 = vmatpush1.msra.mxu0 0.0
    %1162 = vmatprep.subr.mxu0 0.0
    %1163 = vmatpush1.msra.mxu0 0.0
    %1164 = vmatprep.subr.mxu0 0.0
    %1165 = vmatpush1.msra.mxu0 %v36
    %1166 = vmatprep.subr.mxu0 0.0
    %1167 = vmatpush1.msra.mxu0 %v35
    %1168 = vmatprep.subr.mxu0 0.0
    %1169 = vmatpush1.msra.mxu0 %v34
    %1170 = vmatprep.subr.mxu0 0.0
    %1171 = vmatpush1.msra.mxu0 %v33
    %1172 = vmatprep.subr.mxu0 0.0
    %1173 = vmatpush2.msra.mxu0 0.0
    %1174 = vmatprep.subr.mxu0 0.0
    %1175 = vmatpush2.msra.mxu0 0.0
    %1176 = vmatprep.subr.mxu0 0.0
    %1177 = vmatpush2.msra.mxu0 0.0
    %1178 = vmatprep.subr.mxu0 0.0
    %1179 = vmatpush2.msra.mxu0 0.0
    %1180 = vmatprep.subr.mxu0 0.0
    %1181 = vmatpush2.msra.mxu0 0.0
    %1182 = vmatprep.subr.mxu0 0.0
    %1183 = vmatpush2.msra.mxu0 0.0
    %1184 = vmatprep.subr.mxu0 0.0
    %1185 = vmatpush2.msra.mxu0 0.0
    %1186 = vmatprep.subr.mxu0 0.0
    %1187 = vmatpush2.msra.mxu0 0.0
    %1188 = vmatprep.subr.mxu0 0.0
    %1189 = vmatpush2.msra.mxu0 0.0
    %1190 = vmatprep.subr.mxu0 0.0
    %1191 = vmatpush2.msra.mxu0 0.0
    %1192 = vmatprep.subr.mxu0 0.0
    %1193 = vmatpush2.msra.mxu0 0.0
    %1194 = vmatprep.subr.mxu0 0.0
    %1195 = vmatpush2.msra.mxu0 0.0
    %1196 = vmatprep.subr.mxu0 0.0
    %1197 = vmatpush2.msra.mxu0 0.0
    %1198 = vmatprep.subr.mxu0 0.0
    %1199 = vmatpush2.msra.mxu0 0.0
    %1200 = vmatprep.subr.mxu0 0.0
    %1201 = vmatpush2.msra.mxu0 0.0
    %1202 = vmatprep.subr.mxu0 0.0
    %1203 = vmatpush2.msra.mxu0 0.0
    %1204 = vmatprep.mubr.f32.mxu0 0.0
    %1205 = vmatmul.mubr.f32.gmra.mxu0 %v1041
    %v1206 = vpop.f32.mrf.mxu0
    %v1207 = vadd.f32 0.0, %v1206
    %v1208 = vpop.f32.mrf.mxu0
    %1209 = vdwg.mxu0
    %v1210 = vadd.f32 %v1139, %v1207
    %v1211 = vxor.u32 %v1210, 2147483648
    %v1212 = vmul.f32 %v1211, 1.442695
    %v1213 = vpow.pop %v1212
    %v1214 = vadd.f32 %v1213, 1.0
    %v1215 = vrcp.pop %v1214
    %v1216 = vmul.f32 1.0, %v1215
    %v1217 = vtanh.pop %v1210
    %v1218 = vmul.f32 %v1216, %v956
    %1220 = vrot.lane.b32.xlu0 %v1217, 64
    %v1221 = vpop.permute.xlu0 %1220
    %v1223 = vmul.f32 %v1216, %v1221
    %1225 = vrot.lane.b32.xlu0 %v1223, 32
    %v1226 = vpop.permute.xlu0 %1225
    %v1228 = vadd.f32 %v1218, %v1226
    %v1229 = vtanh.pop %v1228
    %1231 = vrot.lane.b32.xlu0 %v1229, 64
    %v1232 = vpop.permute.xlu0 %1231
    %v1234 = vmul.f32 %v1216, %v1232
    %1236 = vrot.lane.b32.xlu0 %v1137, 32
    %v1237 = vpop.permute.xlu0 %1236
    %v1238 = vsel %vm47, %v1237, 0
    %1240 = vmatprep.subr.mxu0 0.0
    %1241 = vmatpush1.msra.mxu0 0.0
    %1242 = vmatprep.subr.mxu0 0.0
    %1243 = vmatpush1.msra.mxu0 0.0
    %1244 = vmatprep.subr.mxu0 0.0
    %1245 = vmatpush1.msra.mxu0 0.0
    %1246 = vmatprep.subr.mxu0 0.0
    %1247 = vmatpush1.msra.mxu0 0.0
    %1248 = vmatprep.subr.mxu0 0.0
    %1249 = vmatpush1.msra.mxu0 0.0
    %1250 = vmatprep.subr.mxu0 0.0
    %1251 = vmatpush1.msra.mxu0 0.0
    %1252 = vmatprep.subr.mxu0 0.0
    %1253 = vmatpush1.msra.mxu0 0.0
    %1254 = vmatprep.subr.mxu0 0.0
    %1255 = vmatpush1.msra.mxu0 0.0
    %1256 = vmatprep.subr.mxu0 0.0
    %1257 = vmatpush1.msra.mxu0 0.0
    %1258 = vmatprep.subr.mxu0 0.0
    %1259 = vmatpush1.msra.mxu0 0.0
    %1260 = vmatprep.subr.mxu0 0.0
    %1261 = vmatpush1.msra.mxu0 0.0
    %1262 = vmatprep.subr.mxu0 0.0
    %1263 = vmatpush1.msra.mxu0 0.0
    %1264 = vmatprep.subr.mxu0 0.0
    %1265 = vmatpush1.msra.mxu0 %v44
    %1266 = vmatprep.subr.mxu0 0.0
    %1267 = vmatpush1.msra.mxu0 %v43
    %1268 = vmatprep.subr.mxu0 0.0
    %1269 = vmatpush1.msra.mxu0 %v42
    %1270 = vmatprep.subr.mxu0 0.0
    %1271 = vmatpush1.msra.mxu0 %v41
    %1272 = vmatprep.subr.mxu0 0.0
    %1273 = vmatpush2.msra.mxu0 0.0
    %1274 = vmatprep.subr.mxu0 0.0
    %1275 = vmatpush2.msra.mxu0 0.0
    %1276 = vmatprep.subr.mxu0 0.0
    %1277 = vmatpush2.msra.mxu0 0.0
    %1278 = vmatprep.subr.mxu0 0.0
    %1279 = vmatpush2.msra.mxu0 0.0
    %1280 = vmatprep.subr.mxu0 0.0
    %1281 = vmatpush2.msra.mxu0 0.0
    %1282 = vmatprep.subr.mxu0 0.0
    %1283 = vmatpush2.msra.mxu0 0.0
    %1284 = vmatprep.subr.mxu0 0.0
    %1285 = vmatpush2.msra.mxu0 0.0
    %1286 = vmatprep.subr.mxu0 0.0
    %1287 = vmatpush2.msra.mxu0 0.0
    %1288 = vmatprep.subr.mxu0 0.0
    %1289 = vmatpush2.msra.mxu0 0.0
    %1290 = vmatprep.subr.mxu0 0.0
    %1291 = vmatpush2.msra.mxu0 0.0
    %1292 = vmatprep.subr.mxu0 0.0
    %1293 = vmatpush2.msra.mxu0 0.0
    %1294 = vmatprep.subr.mxu0 0.0
    %1295 = vmatpush2.msra.mxu0 0.0
    %1296 = vmatprep.subr.mxu0 0.0
    %1297 = vmatpush2.msra.mxu0 0.0
    %1298 = vmatprep.subr.mxu0 0.0
    %1299 = vmatpush2.msra.mxu0 0.0
    %1300 = vmatprep.subr.mxu0 0.0
    %1301 = vmatpush2.msra.mxu0 0.0
    %1302 = vmatprep.subr.mxu0 0.0
    %1303 = vmatpush2.msra.mxu0 0.0
    %1304 = vmatprep.mubr.f32.mxu0 0.0
    %1305 = vmatmul.mubr.f32.gmra.mxu0 %v1238
    %v1306 = vpop.f32.mrf.mxu0
    %v1307 = vadd.f32 0.0, %v1306
    %v1308 = vpop.f32.mrf.mxu0
    %1309 = vdwg.mxu0
    %1311 = vrot.lane.b32.xlu0 %v1234, 32
    %v1312 = vpop.permute.xlu0 %1311
    %v1313 = vsel %vm47, %v1312, 0
    %1315 = vmatprep.subr.mxu0 0.0
    %1316 = vmatpush1.msra.mxu0 0.0
    %1317 = vmatprep.subr.mxu0 0.0
    %1318 = vmatpush1.msra.mxu0 0.0
    %1319 = vmatprep.subr.mxu0 0.0
    %1320 = vmatpush1.msra.mxu0 0.0
    %1321 = vmatprep.subr.mxu0 0.0
    %1322 = vmatpush1.msra.mxu0 0.0
    %1323 = vmatprep.subr.mxu0 0.0
    %1324 = vmatpush1.msra.mxu0 0.0
    %1325 = vmatprep.subr.mxu0 0.0
    %1326 = vmatpush1.msra.mxu0 0.0
    %1327 = vmatprep.subr.mxu0 0.0
    %1328 = vmatpush1.msra.mxu0 0.0
    %1329 = vmatprep.subr.mxu0 0.0
    %1330 = vmatpush1.msra.mxu0 0.0
    %1331 = vmatprep.subr.mxu0 0.0
    %1332 = vmatpush1.msra.mxu0 0.0
    %1333 = vmatprep.subr.mxu0 0.0
    %1334 = vmatpush1.msra.mxu0 0.0
    %1335 = vmatprep.subr.mxu0 0.0
    %1336 = vmatpush1.msra.mxu0 0.0
    %1337 = vmatprep.subr.mxu0 0.0
    %1338 = vmatpush1.msra.mxu0 0.0
    %1339 = vmatprep.subr.mxu0 0.0
    %1340 = vmatpush1.msra.mxu0 %v40
    %1341 = vmatprep.subr.mxu0 0.0
    %1342 = vmatpush1.msra.mxu0 %v39
    %1343 = vmatprep.subr.mxu0 0.0
    %1344 = vmatpush1.msra.mxu0 %v38
    %1345 = vmatprep.subr.mxu0 0.0
    %1346 = vmatpush1.msra.mxu0 %v37
    %1347 = vmatprep.subr.mxu0 0.0
    %1348 = vmatpush2.msra.mxu0 0.0
    %1349 = vmatprep.subr.mxu0 0.0
    %1350 = vmatpush2.msra.mxu0 0.0
    %1351 = vmatprep.subr.mxu0 0.0
    %1352 = vmatpush2.msra.mxu0 0.0
    %1353 = vmatprep.subr.mxu0 0.0
    %1354 = vmatpush2.msra.mxu0 0.0
    %1355 = vmatprep.subr.mxu0 0.0
    %1356 = vmatpush2.msra.mxu0 0.0
    %1357 = vmatprep.subr.mxu0 0.0
    %1358 = vmatpush2.msra.mxu0 0.0
    %1359 = vmatprep.subr.mxu0 0.0
    %1360 = vmatpush2.msra.mxu0 0.0
    %1361 = vmatprep.subr.mxu0 0.0
    %1362 = vmatpush2.msra.mxu0 0.0
    %1363 = vmatprep.subr.mxu0 0.0
    %1364 = vmatpush2.msra.mxu0 0.0
    %1365 = vmatprep.subr.mxu0 0.0
    %1366 = vmatpush2.msra.mxu0 0.0
    %1367 = vmatprep.subr.mxu0 0.0
    %1368 = vmatpush2.msra.mxu0 0.0
    %1369 = vmatprep.subr.mxu0 0.0
    %1370 = vmatpush2.msra.mxu0 0.0
    %1371 = vmatprep.subr.mxu0 0.0
    %1372 = vmatpush2.msra.mxu0 0.0
    %1373 = vmatprep.subr.mxu0 0.0
    %1374 = vmatpush2.msra.mxu0 0.0
    %1375 = vmatprep.subr.mxu0 0.0
    %1376 = vmatpush2.msra.mxu0 0.0
    %1377 = vmatprep.subr.mxu0 0.0
    %1378 = vmatpush2.msra.mxu0 0.0
    %1379 = vmatprep.mubr.f32.mxu0 0.0
    %1380 = vmatmul.mubr.f32.gmra.mxu0 %v1313
    %v1381 = vpop.f32.mrf.mxu0
    %v1382 = vadd.f32 %v1307, %v1381
    %v1383 = vpop.f32.mrf.mxu0
    %1384 = vdwg.mxu0
    %v1385 = vadd.f32 %v1382, %v295
    %v1386 = vxor.u32 %v1385, 2147483648
    %v1387 = vmul.f32 %v1386, 1.442695
    %v1388 = vpow.pop %v1387
    %v1389 = vadd.f32 %v1388, 1.0
    %v1390 = vrcp.pop %v1389
    %v1391 = vmul.f32 1.0, %v1390
    %v1392 = vtanh.pop %v1385
    %v1393 = vmul.f32 %v1391, %v1131
    %1395 = vrot.lane.b32.xlu0 %v1392, 64
    %v1396 = vpop.permute.xlu0 %1395
    %v1398 = vmul.f32 %v1391, %v1396
    %1400 = vrot.lane.b32.xlu0 %v1398, 32
    %v1401 = vpop.permute.xlu0 %1400
    %v1403 = vadd.f32 %v1393, %v1401
    %v1404 = vtanh.pop %v1403
    %1406 = vrot.lane.b32.xlu0 %v1404, 64
    %v1407 = vpop.permute.xlu0 %1406
    %v1409 = vmul.f32 %v1391, %v1407
    %s1410 = scalar_lea.vmem %s0, 10
    %v1411 = vld [vmem:[%s1410] sm:$0x3]
    %1412 = vmatprep.subr.mxu0 0.0
    %1413 = vmatpush1.msra.mxu0 0.0
    %1414 = vmatprep.subr.mxu0 0.0
    %1415 = vmatpush1.msra.mxu0 0.0
    %1416 = vmatprep.subr.mxu0 0.0
    %1417 = vmatpush1.msra.mxu0 0.0
    %1418 = vmatprep.subr.mxu0 0.0
    %1419 = vmatpush1.msra.mxu0 0.0
    %1420 = vmatprep.subr.mxu0 0.0
    %1421 = vmatpush1.msra.mxu0 0.0
    %1422 = vmatprep.subr.mxu0 0.0
    %1423 = vmatpush1.msra.mxu0 0.0
    %1424 = vmatprep.subr.mxu0 0.0
    %1425 = vmatpush1.msra.mxu0 0.0
    %1426 = vmatprep.subr.mxu0 0.0
    %1427 = vmatpush1.msra.mxu0 0.0
    %1428 = vmatprep.subr.mxu0 0.0
    %1429 = vmatpush1.msra.mxu0 0.0
    %1430 = vmatprep.subr.mxu0 0.0
    %1431 = vmatpush1.msra.mxu0 0.0
    %1432 = vmatprep.subr.mxu0 0.0
    %1433 = vmatpush1.msra.mxu0 0.0
    %1434 = vmatprep.subr.mxu0 0.0
    %1435 = vmatpush1.msra.mxu0 0.0
    %1436 = vmatprep.subr.mxu0 0.0
    %1437 = vmatpush1.msra.mxu0 %v36
    %1438 = vmatprep.subr.mxu0 0.0
    %1439 = vmatpush1.msra.mxu0 %v35
    %1440 = vmatprep.subr.mxu0 0.0
    %1441 = vmatpush1.msra.mxu0 %v34
    %1442 = vmatprep.subr.mxu0 0.0
    %1443 = vmatpush1.msra.mxu0 %v33
    %1444 = vmatprep.subr.mxu0 0.0
    %1445 = vmatpush2.msra.mxu0 0.0
    %1446 = vmatprep.subr.mxu0 0.0
    %1447 = vmatpush2.msra.mxu0 0.0
    %1448 = vmatprep.subr.mxu0 0.0
    %1449 = vmatpush2.msra.mxu0 0.0
    %1450 = vmatprep.subr.mxu0 0.0
    %1451 = vmatpush2.msra.mxu0 0.0
    %1452 = vmatprep.subr.mxu0 0.0
    %1453 = vmatpush2.msra.mxu0 0.0
    %1454 = vmatprep.subr.mxu0 0.0
    %1455 = vmatpush2.msra.mxu0 0.0
    %1456 = vmatprep.subr.mxu0 0.0
    %1457 = vmatpush2.msra.mxu0 0.0
    %1458 = vmatprep.subr.mxu0 0.0
    %1459 = vmatpush2.msra.mxu0 0.0
    %1460 = vmatprep.subr.mxu0 0.0
    %1461 = vmatpush2.msra.mxu0 0.0
    %1462 = vmatprep.subr.mxu0 0.0
    %1463 = vmatpush2.msra.mxu0 0.0
    %1464 = vmatprep.subr.mxu0 0.0
    %1465 = vmatpush2.msra.mxu0 0.0
    %1466 = vmatprep.subr.mxu0 0.0
    %1467 = vmatpush2.msra.mxu0 0.0
    %1468 = vmatprep.subr.mxu0 0.0
    %1469 = vmatpush2.msra.mxu0 0.0
    %1470 = vmatprep.subr.mxu0 0.0
    %1471 = vmatpush2.msra.mxu0 0.0
    %1472 = vmatprep.subr.mxu0 0.0
    %1473 = vmatpush2.msra.mxu0 0.0
    %1474 = vmatprep.subr.mxu0 0.0
    %1475 = vmatpush2.msra.mxu0 0.0
    %1476 = vmatprep.mubr.f32.mxu0 0.0
    %1477 = vmatmul.mubr.f32.gmra.mxu0 %v1313
    %v1478 = vpop.f32.mrf.mxu0
    %v1479 = vadd.f32 0.0, %v1478
    %v1480 = vpop.f32.mrf.mxu0
    %1481 = vdwg.mxu0
    %v1482 = vadd.f32 %v1411, %v1479
    %v1483 = vxor.u32 %v1482, 2147483648
    %v1484 = vmul.f32 %v1483, 1.442695
    %v1485 = vpow.pop %v1484
    %v1486 = vadd.f32 %v1485, 1.0
    %v1487 = vrcp.pop %v1486
    %v1488 = vmul.f32 1.0, %v1487
    %v1489 = vtanh.pop %v1482
    %v1490 = vmul.f32 %v1488, %v1228
    %1492 = vrot.lane.b32.xlu0 %v1489, 64
    %v1493 = vpop.permute.xlu0 %1492
    %v1495 = vmul.f32 %v1488, %v1493
    %1497 = vrot.lane.b32.xlu0 %v1495, 32
    %v1498 = vpop.permute.xlu0 %1497
    %v1500 = vadd.f32 %v1490, %v1498
    %v1501 = vtanh.pop %v1500
    %1503 = vrot.lane.b32.xlu0 %v1501, 64
    %v1504 = vpop.permute.xlu0 %1503
    %v1506 = vmul.f32 %v1488, %v1504
    %1508 = vrot.lane.b32.xlu0 %v1409, 32
    %v1509 = vpop.permute.xlu0 %1508
    %v1510 = vsel %vm47, %v1509, 0
    %1512 = vmatprep.subr.mxu0 0.0
    %1513 = vmatpush1.msra.mxu0 0.0
    %1514 = vmatprep.subr.mxu0 0.0
    %1515 = vmatpush1.msra.mxu0 0.0
    %1516 = vmatprep.subr.mxu0 0.0
    %1517 = vmatpush1.msra.mxu0 0.0
    %1518 = vmatprep.subr.mxu0 0.0
    %1519 = vmatpush1.msra.mxu0 0.0
    %1520 = vmatprep.subr.mxu0 0.0
    %1521 = vmatpush1.msra.mxu0 0.0
    %1522 = vmatprep.subr.mxu0 0.0
    %1523 = vmatpush1.msra.mxu0 0.0
    %1524 = vmatprep.subr.mxu0 0.0
    %1525 = vmatpush1.msra.mxu0 0.0
    %1526 = vmatprep.subr.mxu0 0.0
    %1527 = vmatpush1.msra.mxu0 0.0
    %1528 = vmatprep.subr.mxu0 0.0
    %1529 = vmatpush1.msra.mxu0 0.0
    %1530 = vmatprep.subr.mxu0 0.0
    %1531 = vmatpush1.msra.mxu0 0.0
    %1532 = vmatprep.subr.mxu0 0.0
    %1533 = vmatpush1.msra.mxu0 0.0
    %1534 = vmatprep.subr.mxu0 0.0
    %1535 = vmatpush1.msra.mxu0 0.0
    %1536 = vmatprep.subr.mxu0 0.0
    %1537 = vmatpush1.msra.mxu0 %v44
    %1538 = vmatprep.subr.mxu0 0.0
    %1539 = vmatpush1.msra.mxu0 %v43
    %1540 = vmatprep.subr.mxu0 0.0
    %1541 = vmatpush1.msra.mxu0 %v42
    %1542 = vmatprep.subr.mxu0 0.0
    %1543 = vmatpush1.msra.mxu0 %v41
    %1544 = vmatprep.subr.mxu0 0.0
    %1545 = vmatpush2.msra.mxu0 0.0
    %1546 = vmatprep.subr.mxu0 0.0
    %1547 = vmatpush2.msra.mxu0 0.0
    %1548 = vmatprep.subr.mxu0 0.0
    %1549 = vmatpush2.msra.mxu0 0.0
    %1550 = vmatprep.subr.mxu0 0.0
    %1551 = vmatpush2.msra.mxu0 0.0
    %1552 = vmatprep.subr.mxu0 0.0
    %1553 = vmatpush2.msra.mxu0 0.0
    %1554 = vmatprep.subr.mxu0 0.0
    %1555 = vmatpush2.msra.mxu0 0.0
    %1556 = vmatprep.subr.mxu0 0.0
    %1557 = vmatpush2.msra.mxu0 0.0
    %1558 = vmatprep.subr.mxu0 0.0
    %1559 = vmatpush2.msra.mxu0 0.0
    %1560 = vmatprep.subr.mxu0 0.0
    %1561 = vmatpush2.msra.mxu0 0.0
    %1562 = vmatprep.subr.mxu0 0.0
    %1563 = vmatpush2.msra.mxu0 0.0
    %1564 = vmatprep.subr.mxu0 0.0
    %1565 = vmatpush2.msra.mxu0 0.0
    %1566 = vmatprep.subr.mxu0 0.0
    %1567 = vmatpush2.msra.mxu0 0.0
    %1568 = vmatprep.subr.mxu0 0.0
    %1569 = vmatpush2.msra.mxu0 0.0
    %1570 = vmatprep.subr.mxu0 0.0
    %1571 = vmatpush2.msra.mxu0 0.0
    %1572 = vmatprep.subr.mxu0 0.0
    %1573 = vmatpush2.msra.mxu0 0.0
    %1574 = vmatprep.subr.mxu0 0.0
    %1575 = vmatpush2.msra.mxu0 0.0
    %1576 = vmatprep.mubr.f32.mxu0 0.0
    %1577 = vmatmul.mubr.f32.gmra.mxu0 %v1510
    %v1578 = vpop.f32.mrf.mxu0
    %v1579 = vadd.f32 0.0, %v1578
    %v1580 = vpop.f32.mrf.mxu0
    %1581 = vdwg.mxu0
    %1583 = vrot.lane.b32.xlu0 %v1506, 32
    %v1584 = vpop.permute.xlu0 %1583
    %v1585 = vsel %vm47, %v1584, 0
    %1587 = vmatprep.subr.mxu0 0.0
    %1588 = vmatpush1.msra.mxu0 0.0
    %1589 = vmatprep.subr.mxu0 0.0
    %1590 = vmatpush1.msra.mxu0 0.0
    %1591 = vmatprep.subr.mxu0 0.0
    %1592 = vmatpush1.msra.mxu0 0.0
    %1593 = vmatprep.subr.mxu0 0.0
    %1594 = vmatpush1.msra.mxu0 0.0
    %1595 = vmatprep.subr.mxu0 0.0
    %1596 = vmatpush1.msra.mxu0 0.0
    %1597 = vmatprep.subr.mxu0 0.0
    %1598 = vmatpush1.msra.mxu0 0.0
    %1599 = vmatprep.subr.mxu0 0.0
    %1600 = vmatpush1.msra.mxu0 0.0
    %1601 = vmatprep.subr.mxu0 0.0
    %1602 = vmatpush1.msra.mxu0 0.0
    %1603 = vmatprep.subr.mxu0 0.0
    %1604 = vmatpush1.msra.mxu0 0.0
    %1605 = vmatprep.subr.mxu0 0.0
    %1606 = vmatpush1.msra.mxu0 0.0
    %1607 = vmatprep.subr.mxu0 0.0
    %1608 = vmatpush1.msra.mxu0 0.0
    %1609 = vmatprep.subr.mxu0 0.0
    %1610 = vmatpush1.msra.mxu0 0.0
    %1611 = vmatprep.subr.mxu0 0.0
    %1612 = vmatpush1.msra.mxu0 %v40
    %1613 = vmatprep.subr.mxu0 0.0
    %1614 = vmatpush1.msra.mxu0 %v39
    %1615 = vmatprep.subr.mxu0 0.0
    %1616 = vmatpush1.msra.mxu0 %v38
    %1617 = vmatprep.subr.mxu0 0.0
    %1618 = vmatpush1.msra.mxu0 %v37
    %1619 = vmatprep.subr.mxu0 0.0
    %1620 = vmatpush2.msra.mxu0 0.0
    %1621 = vmatprep.subr.mxu0 0.0
    %1622 = vmatpush2.msra.mxu0 0.0
    %1623 = vmatprep.subr.mxu0 0.0
    %1624 = vmatpush2.msra.mxu0 0.0
    %1625 = vmatprep.subr.mxu0 0.0
    %1626 = vmatpush2.msra.mxu0 0.0
    %1627 = vmatprep.subr.mxu0 0.0
    %1628 = vmatpush2.msra.mxu0 0.0
    %1629 = vmatprep.subr.mxu0 0.0
    %1630 = vmatpush2.msra.mxu0 0.0
    %1631 = vmatprep.subr.mxu0 0.0
    %1632 = vmatpush2.msra.mxu0 0.0
    %1633 = vmatprep.subr.mxu0 0.0
    %1634 = vmatpush2.msra.mxu0 0.0
    %1635 = vmatprep.subr.mxu0 0.0
    %1636 = vmatpush2.msra.mxu0 0.0
    %1637 = vmatprep.subr.mxu0 0.0
    %1638 = vmatpush2.msra.mxu0 0.0
    %1639 = vmatprep.subr.mxu0 0.0
    %1640 = vmatpush2.msra.mxu0 0.0
    %1641 = vmatprep.subr.mxu0 0.0
    %1642 = vmatpush2.msra.mxu0 0.0
    %1643 = vmatprep.subr.mxu0 0.0
    %1644 = vmatpush2.msra.mxu0 0.0
    %1645 = vmatprep.subr.mxu0 0.0
    %1646 = vmatpush2.msra.mxu0 0.0
    %1647 = vmatprep.subr.mxu0 0.0
    %1648 = vmatpush2.msra.mxu0 0.0
    %1649 = vmatprep.subr.mxu0 0.0
    %1650 = vmatpush2.msra.mxu0 0.0
    %1651 = vmatprep.mubr.f32.mxu0 0.0
    %1652 = vmatmul.mubr.f32.gmra.mxu0 %v1585
    %v1653 = vpop.f32.mrf.mxu0
    %v1654 = vadd.f32 %v1579, %v1653
    %v1655 = vpop.f32.mrf.mxu0
    %1656 = vdwg.mxu0
    %v1657 = vadd.f32 %v1654, %v295
    %v1658 = vxor.u32 %v1657, 2147483648
    %v1659 = vmul.f32 %v1658, 1.442695
    %v1660 = vpow.pop %v1659
    %v1661 = vadd.f32 %v1660, 1.0
    %v1662 = vrcp.pop %v1661
    %v1663 = vmul.f32 1.0, %v1662
    %v1664 = vtanh.pop %v1657
    %v1665 = vmul.f32 %v1663, %v1403
    %1667 = vrot.lane.b32.xlu0 %v1664, 64
    %v1668 = vpop.permute.xlu0 %1667
    %v1670 = vmul.f32 %v1663, %v1668
    %1672 = vrot.lane.b32.xlu0 %v1670, 32
    %v1673 = vpop.permute.xlu0 %1672
    %v1675 = vadd.f32 %v1665, %v1673
    %v1676 = vtanh.pop %v1675
    %1678 = vrot.lane.b32.xlu0 %v1676, 64
    %v1679 = vpop.permute.xlu0 %1678
    %v1681 = vmul.f32 %v1663, %v1679
    %s1682 = scalar_lea.vmem %s0, 12
    %v1683 = vld [vmem:[%s1682] sm:$0x3]
    %1684 = vmatprep.subr.mxu0 0.0
    %1685 = vmatpush1.msra.mxu0 0.0
    %1686 = vmatprep.subr.mxu0 0.0
    %1687 = vmatpush1.msra.mxu0 0.0
    %1688 = vmatprep.subr.mxu0 0.0
    %1689 = vmatpush1.msra.mxu0 0.0
    %1690 = vmatprep.subr.mxu0 0.0
    %1691 = vmatpush1.msra.mxu0 0.0
    %1692 = vmatprep.subr.mxu0 0.0
    %1693 = vmatpush1.msra.mxu0 0.0
    %1694 = vmatprep.subr.mxu0 0.0
    %1695 = vmatpush1.msra.mxu0 0.0
    %1696 = vmatprep.subr.mxu0 0.0
    %1697 = vmatpush1.msra.mxu0 0.0
    %1698 = vmatprep.subr.mxu0 0.0
    %1699 = vmatpush1.msra.mxu0 0.0
    %1700 = vmatprep.subr.mxu0 0.0
    %1701 = vmatpush1.msra.mxu0 0.0
    %1702 = vmatprep.subr.mxu0 0.0
    %1703 = vmatpush1.msra.mxu0 0.0
    %1704 = vmatprep.subr.mxu0 0.0
    %1705 = vmatpush1.msra.mxu0 0.0
    %1706 = vmatprep.subr.mxu0 0.0
    %1707 = vmatpush1.msra.mxu0 0.0
    %1708 = vmatprep.subr.mxu0 0.0
    %1709 = vmatpush1.msra.mxu0 %v36
    %1710 = vmatprep.subr.mxu0 0.0
    %1711 = vmatpush1.msra.mxu0 %v35
    %1712 = vmatprep.subr.mxu0 0.0
    %1713 = vmatpush1.msra.mxu0 %v34
    %1714 = vmatprep.subr.mxu0 0.0
    %1715 = vmatpush1.msra.mxu0 %v33
    %1716 = vmatprep.subr.mxu0 0.0
    %1717 = vmatpush2.msra.mxu0 0.0
    %1718 = vmatprep.subr.mxu0 0.0
    %1719 = vmatpush2.msra.mxu0 0.0
    %1720 = vmatprep.subr.mxu0 0.0
    %1721 = vmatpush2.msra.mxu0 0.0
    %1722 = vmatprep.subr.mxu0 0.0
    %1723 = vmatpush2.msra.mxu0 0.0
    %1724 = vmatprep.subr.mxu0 0.0
    %1725 = vmatpush2.msra.mxu0 0.0
    %1726 = vmatprep.subr.mxu0 0.0
    %1727 = vmatpush2.msra.mxu0 0.0
    %1728 = vmatprep.subr.mxu0 0.0
    %1729 = vmatpush2.msra.mxu0 0.0
    %1730 = vmatprep.subr.mxu0 0.0
    %1731 = vmatpush2.msra.mxu0 0.0
    %1732 = vmatprep.subr.mxu0 0.0
    %1733 = vmatpush2.msra.mxu0 0.0
    %1734 = vmatprep.subr.mxu0 0.0
    %1735 = vmatpush2.msra.mxu0 0.0
    %1736 = vmatprep.subr.mxu0 0.0
    %1737 = vmatpush2.msra.mxu0 0.0
    %1738 = vmatprep.subr.mxu0 0.0
    %1739 = vmatpush2.msra.mxu0 0.0
    %1740 = vmatprep.subr.mxu0 0.0
    %1741 = vmatpush2.msra.mxu0 0.0
    %1742 = vmatprep.subr.mxu0 0.0
    %1743 = vmatpush2.msra.mxu0 0.0
    %1744 = vmatprep.subr.mxu0 0.0
    %1745 = vmatpush2.msra.mxu0 0.0
    %1746 = vmatprep.subr.mxu0 0.0
    %1747 = vmatpush2.msra.mxu0 0.0
    %1748 = vmatprep.mubr.f32.mxu0 0.0
    %1749 = vmatmul.mubr.f32.gmra.mxu0 %v1585
    %v1750 = vpop.f32.mrf.mxu0
    %v1751 = vadd.f32 0.0, %v1750
    %v1752 = vpop.f32.mrf.mxu0
    %1753 = vdwg.mxu0
    %v1754 = vadd.f32 %v1683, %v1751
    %v1755 = vxor.u32 %v1754, 2147483648
    %v1756 = vmul.f32 %v1755, 1.442695
    %v1757 = vpow.pop %v1756
    %v1758 = vadd.f32 %v1757, 1.0
    %v1759 = vrcp.pop %v1758
    %v1760 = vmul.f32 1.0, %v1759
    %v1761 = vtanh.pop %v1754
    %v1762 = vmul.f32 %v1760, %v1500
    %1764 = vrot.lane.b32.xlu0 %v1761, 64
    %v1765 = vpop.permute.xlu0 %1764
    %v1767 = vmul.f32 %v1760, %v1765
    %1769 = vrot.lane.b32.xlu0 %v1767, 32
    %v1770 = vpop.permute.xlu0 %1769
    %v1772 = vadd.f32 %v1762, %v1770
    %v1773 = vtanh.pop %v1772
    %1775 = vrot.lane.b32.xlu0 %v1773, 64
    %v1776 = vpop.permute.xlu0 %1775
    %v1778 = vmul.f32 %v1760, %v1776
    %1780 = vrot.lane.b32.xlu0 %v1681, 32
    %v1781 = vpop.permute.xlu0 %1780
    %v1782 = vsel %vm47, %v1781, 0
    %1784 = vmatprep.subr.mxu0 0.0
    %1785 = vmatpush1.msra.mxu0 0.0
    %1786 = vmatprep.subr.mxu0 0.0
    %1787 = vmatpush1.msra.mxu0 0.0
    %1788 = vmatprep.subr.mxu0 0.0
    %1789 = vmatpush1.msra.mxu0 0.0
    %1790 = vmatprep.subr.mxu0 0.0
    %1791 = vmatpush1.msra.mxu0 0.0
    %1792 = vmatprep.subr.mxu0 0.0
    %1793 = vmatpush1.msra.mxu0 0.0
    %1794 = vmatprep.subr.mxu0 0.0
    %1795 = vmatpush1.msra.mxu0 0.0
    %1796 = vmatprep.subr.mxu0 0.0
    %1797 = vmatpush1.msra.mxu0 0.0
    %1798 = vmatprep.subr.mxu0 0.0
    %1799 = vmatpush1.msra.mxu0 0.0
    %1800 = vmatprep.subr.mxu0 0.0
    %1801 = vmatpush1.msra.mxu0 0.0
    %1802 = vmatprep.subr.mxu0 0.0
    %1803 = vmatpush1.msra.mxu0 0.0
    %1804 = vmatprep.subr.mxu0 0.0
    %1805 = vmatpush1.msra.mxu0 0.0
    %1806 = vmatprep.subr.mxu0 0.0
    %1807 = vmatpush1.msra.mxu0 0.0
    %1808 = vmatprep.subr.mxu0 0.0
    %1809 = vmatpush1.msra.mxu0 %v44
    %1810 = vmatprep.subr.mxu0 0.0
    %1811 = vmatpush1.msra.mxu0 %v43
    %1812 = vmatprep.subr.mxu0 0.0
    %1813 = vmatpush1.msra.mxu0 %v42
    %1814 = vmatprep.subr.mxu0 0.0
    %1815 = vmatpush1.msra.mxu0 %v41
    %1816 = vmatprep.subr.mxu0 0.0
    %1817 = vmatpush2.msra.mxu0 0.0
    %1818 = vmatprep.subr.mxu0 0.0
    %1819 = vmatpush2.msra.mxu0 0.0
    %1820 = vmatprep.subr.mxu0 0.0
    %1821 = vmatpush2.msra.mxu0 0.0
    %1822 = vmatprep.subr.mxu0 0.0
    %1823 = vmatpush2.msra.mxu0 0.0
    %1824 = vmatprep.subr.mxu0 0.0
    %1825 = vmatpush2.msra.mxu0 0.0
    %1826 = vmatprep.subr.mxu0 0.0
    %1827 = vmatpush2.msra.mxu0 0.0
    %1828 = vmatprep.subr.mxu0 0.0
    %1829 = vmatpush2.msra.mxu0 0.0
    %1830 = vmatprep.subr.mxu0 0.0
    %1831 = vmatpush2.msra.mxu0 0.0
    %1832 = vmatprep.subr.mxu0 0.0
    %1833 = vmatpush2.msra.mxu0 0.0
    %1834 = vmatprep.subr.mxu0 0.0
    %1835 = vmatpush2.msra.mxu0 0.0
    %1836 = vmatprep.subr.mxu0 0.0
    %1837 = vmatpush2.msra.mxu0 0.0
    %1838 = vmatprep.subr.mxu0 0.0
    %1839 = vmatpush2.msra.mxu0 0.0
    %1840 = vmatprep.subr.mxu0 0.0
    %1841 = vmatpush2.msra.mxu0 0.0
    %1842 = vmatprep.subr.mxu0 0.0
    %1843 = vmatpush2.msra.mxu0 0.0
    %1844 = vmatprep.subr.mxu0 0.0
    %1845 = vmatpush2.msra.mxu0 0.0
    %1846 = vmatprep.subr.mxu0 0.0
    %1847 = vmatpush2.msra.mxu0 0.0
    %1848 = vmatprep.mubr.f32.mxu0 0.0
    %1849 = vmatmul.mubr.f32.gmra.mxu0 %v1782
    %v1850 = vpop.f32.mrf.mxu0
    %v1851 = vadd.f32 0.0, %v1850
    %v1852 = vpop.f32.mrf.mxu0
    %1853 = vdwg.mxu0
    %1855 = vrot.lane.b32.xlu0 %v1778, 32
    %v1856 = vpop.permute.xlu0 %1855
    %v1857 = vsel %vm47, %v1856, 0
    %1859 = vmatprep.subr.mxu0 0.0
    %1860 = vmatpush1.msra.mxu0 0.0
    %1861 = vmatprep.subr.mxu0 0.0
    %1862 = vmatpush1.msra.mxu0 0.0
    %1863 = vmatprep.subr.mxu0 0.0
    %1864 = vmatpush1.msra.mxu0 0.0
    %1865 = vmatprep.subr.mxu0 0.0
    %1866 = vmatpush1.msra.mxu0 0.0
    %1867 = vmatprep.subr.mxu0 0.0
    %1868 = vmatpush1.msra.mxu0 0.0
    %1869 = vmatprep.subr.mxu0 0.0
    %1870 = vmatpush1.msra.mxu0 0.0
    %1871 = vmatprep.subr.mxu0 0.0
    %1872 = vmatpush1.msra.mxu0 0.0
    %1873 = vmatprep.subr.mxu0 0.0
    %1874 = vmatpush1.msra.mxu0 0.0
    %1875 = vmatprep.subr.mxu0 0.0
    %1876 = vmatpush1.msra.mxu0 0.0
    %1877 = vmatprep.subr.mxu0 0.0
    %1878 = vmatpush1.msra.mxu0 0.0
    %1879 = vmatprep.subr.mxu0 0.0
    %1880 = vmatpush1.msra.mxu0 0.0
    %1881 = vmatprep.subr.mxu0 0.0
    %1882 = vmatpush1.msra.mxu0 0.0
    %1883 = vmatprep.subr.mxu0 0.0
    %1884 = vmatpush1.msra.mxu0 %v40
    %1885 = vmatprep.subr.mxu0 0.0
    %1886 = vmatpush1.msra.mxu0 %v39
    %1887 = vmatprep.subr.mxu0 0.0
    %1888 = vmatpush1.msra.mxu0 %v38
    %1889 = vmatprep.subr.mxu0 0.0
    %1890 = vmatpush1.msra.mxu0 %v37
    %1891 = vmatprep.subr.mxu0 0.0
    %1892 = vmatpush2.msra.mxu0 0.0
    %1893 = vmatprep.subr.mxu0 0.0
    %1894 = vmatpush2.msra.mxu0 0.0
    %1895 = vmatprep.subr.mxu0 0.0
    %1896 = vmatpush2.msra.mxu0 0.0
    %1897 = vmatprep.subr.mxu0 0.0
    %1898 = vmatpush2.msra.mxu0 0.0
    %1899 = vmatprep.subr.mxu0 0.0
    %1900 = vmatpush2.msra.mxu0 0.0
    %1901 = vmatprep.subr.mxu0 0.0
    %1902 = vmatpush2.msra.mxu0 0.0
    %1903 = vmatprep.subr.mxu0 0.0
    %1904 = vmatpush2.msra.mxu0 0.0
    %1905 = vmatprep.subr.mxu0 0.0
    %1906 = vmatpush2.msra.mxu0 0.0
    %1907 = vmatprep.subr.mxu0 0.0
    %1908 = vmatpush2.msra.mxu0 0.0
    %1909 = vmatprep.subr.mxu0 0.0
    %1910 = vmatpush2.msra.mxu0 0.0
    %1911 = vmatprep.subr.mxu0 0.0
    %1912 = vmatpush2.msra.mxu0 0.0
    %1913 = vmatprep.subr.mxu0 0.0
    %1914 = vmatpush2.msra.mxu0 0.0
    %1915 = vmatprep.subr.mxu0 0.0
    %1916 = vmatpush2.msra.mxu0 0.0
    %1917 = vmatprep.subr.mxu0 0.0
    %1918 = vmatpush2.msra.mxu0 0.0
    %1919 = vmatprep.subr.mxu0 0.0
    %1920 = vmatpush2.msra.mxu0 0.0
    %1921 = vmatprep.subr.mxu0 0.0
    %1922 = vmatpush2.msra.mxu0 0.0
    %1923 = vmatprep.mubr.f32.mxu0 0.0
    %1924 = vmatmul.mubr.f32.gmra.mxu0 %v1857
    %v1925 = vpop.f32.mrf.mxu0
    %v1926 = vadd.f32 %v1851, %v1925
    %v1927 = vpop.f32.mrf.mxu0
    %1928 = vdwg.mxu0
    %v1929 = vadd.f32 %v1926, %v295
    %v1930 = vxor.u32 %v1929, 2147483648
    %v1931 = vmul.f32 %v1930, 1.442695
    %v1932 = vpow.pop %v1931
    %v1933 = vadd.f32 %v1932, 1.0
    %v1934 = vrcp.pop %v1933
    %v1935 = vmul.f32 1.0, %v1934
    %v1936 = vtanh.pop %v1929
    %v1937 = vmul.f32 %v1935, %v1675
    %1939 = vrot.lane.b32.xlu0 %v1936, 64
    %v1940 = vpop.permute.xlu0 %1939
    %v1942 = vmul.f32 %v1935, %v1940
    %1944 = vrot.lane.b32.xlu0 %v1942, 32
    %v1945 = vpop.permute.xlu0 %1944
    %v1947 = vadd.f32 %v1937, %v1945
    %v1948 = vtanh.pop %v1947
    %1950 = vrot.lane.b32.xlu0 %v1948, 64
    %v1951 = vpop.permute.xlu0 %1950
    %v1953 = vmul.f32 %v1935, %v1951
    %s1954 = scalar_lea.vmem %s0, 14
    %v1955 = vld [vmem:[%s1954] sm:$0x3]
    %1956 = vmatprep.subr.mxu0 0.0
    %1957 = vmatpush1.msra.mxu0 0.0
    %1958 = vmatprep.subr.mxu0 0.0
    %1959 = vmatpush1.msra.mxu0 0.0
    %1960 = vmatprep.subr.mxu0 0.0
    %1961 = vmatpush1.msra.mxu0 0.0
    %1962 = vmatprep.subr.mxu0 0.0
    %1963 = vmatpush1.msra.mxu0 0.0
    %1964 = vmatprep.subr.mxu0 0.0
    %1965 = vmatpush1.msra.mxu0 0.0
    %1966 = vmatprep.subr.mxu0 0.0
    %1967 = vmatpush1.msra.mxu0 0.0
    %1968 = vmatprep.subr.mxu0 0.0
    %1969 = vmatpush1.msra.mxu0 0.0
    %1970 = vmatprep.subr.mxu0 0.0
    %1971 = vmatpush1.msra.mxu0 0.0
    %1972 = vmatprep.subr.mxu0 0.0
    %1973 = vmatpush1.msra.mxu0 0.0
    %1974 = vmatprep.subr.mxu0 0.0
    %1975 = vmatpush1.msra.mxu0 0.0
    %1976 = vmatprep.subr.mxu0 0.0
    %1977 = vmatpush1.msra.mxu0 0.0
    %1978 = vmatprep.subr.mxu0 0.0
    %1979 = vmatpush1.msra.mxu0 0.0
    %1980 = vmatprep.subr.mxu0 0.0
    %1981 = vmatpush1.msra.mxu0 %v36
    %1982 = vmatprep.subr.mxu0 0.0
    %1983 = vmatpush1.msra.mxu0 %v35
    %1984 = vmatprep.subr.mxu0 0.0
    %1985 = vmatpush1.msra.mxu0 %v34
    %1986 = vmatprep.subr.mxu0 0.0
    %1987 = vmatpush1.msra.mxu0 %v33
    %1988 = vmatprep.subr.mxu0 0.0
    %1989 = vmatpush2.msra.mxu0 0.0
    %1990 = vmatprep.subr.mxu0 0.0
    %1991 = vmatpush2.msra.mxu0 0.0
    %1992 = vmatprep.subr.mxu0 0.0
    %1993 = vmatpush2.msra.mxu0 0.0
    %1994 = vmatprep.subr.mxu0 0.0
    %1995 = vmatpush2.msra.mxu0 0.0
    %1996 = vmatprep.subr.mxu0 0.0
    %1997 = vmatpush2.msra.mxu0 0.0
    %1998 = vmatprep.subr.mxu0 0.0
    %1999 = vmatpush2.msra.mxu0 0.0
    %2000 = vmatprep.subr.mxu0 0.0
    %2001 = vmatpush2.msra.mxu0 0.0
    %2002 = vmatprep.subr.mxu0 0.0
    %2003 = vmatpush2.msra.mxu0 0.0
    %2004 = vmatprep.subr.mxu0 0.0
    %2005 = vmatpush2.msra.mxu0 0.0
    %2006 = vmatprep.subr.mxu0 0.0
    %2007 = vmatpush2.msra.mxu0 0.0
    %2008 = vmatprep.subr.mxu0 0.0
    %2009 = vmatpush2.msra.mxu0 0.0
    %2010 = vmatprep.subr.mxu0 0.0
    %2011 = vmatpush2.msra.mxu0 0.0
    %2012 = vmatprep.subr.mxu0 0.0
    %2013 = vmatpush2.msra.mxu0 0.0
    %2014 = vmatprep.subr.mxu0 0.0
    %2015 = vmatpush2.msra.mxu0 0.0
    %2016 = vmatprep.subr.mxu0 0.0
    %2017 = vmatpush2.msra.mxu0 0.0
    %2018 = vmatprep.subr.mxu0 0.0
    %2019 = vmatpush2.msra.mxu0 0.0
    %2020 = vmatprep.mubr.f32.mxu0 0.0
    %2021 = vmatmul.mubr.f32.gmra.mxu0 %v1857
    %v2022 = vpop.f32.mrf.mxu0
    %v2023 = vadd.f32 0.0, %v2022
    %v2024 = vpop.f32.mrf.mxu0
    %2025 = vdwg.mxu0
    %v2026 = vadd.f32 %v1955, %v2023
    %v2027 = vxor.u32 %v2026, 2147483648
    %v2028 = vmul.f32 %v2027, 1.442695
    %v2029 = vpow.pop %v2028
    %v2030 = vadd.f32 %v2029, 1.0
    %v2031 = vrcp.pop %v2030
    %v2032 = vmul.f32 1.0, %v2031
    %v2033 = vtanh.pop %v2026
    %v2034 = vmul.f32 %v2032, %v1772
    %2036 = vrot.lane.b32.xlu0 %v2033, 64
    %v2037 = vpop.permute.xlu0 %2036
    %v2039 = vmul.f32 %v2032, %v2037
    %2041 = vrot.lane.b32.xlu0 %v2039, 32
    %v2042 = vpop.permute.xlu0 %2041
    %v2044 = vadd.f32 %v2034, %v2042
    %v2045 = vtanh.pop %v2044
    %2047 = vrot.lane.b32.xlu0 %v2045, 64
    %v2048 = vpop.permute.xlu0 %2047
    %v2050 = vmul.f32 %v2032, %v2048
    %2052 = vrot.lane.b32.xlu0 %v1953, 32
    %v2053 = vpop.permute.xlu0 %2052
    %v2054 = vsel %vm47, %v2053, 0
    %2056 = vmatprep.subr.mxu0 0.0
    %2057 = vmatpush1.msra.mxu0 0.0
    %2058 = vmatprep.subr.mxu0 0.0
    %2059 = vmatpush1.msra.mxu0 0.0
    %2060 = vmatprep.subr.mxu0 0.0
    %2061 = vmatpush1.msra.mxu0 0.0
    %2062 = vmatprep.subr.mxu0 0.0
    %2063 = vmatpush1.msra.mxu0 0.0
    %2064 = vmatprep.subr.mxu0 0.0
    %2065 = vmatpush1.msra.mxu0 0.0
    %2066 = vmatprep.subr.mxu0 0.0
    %2067 = vmatpush1.msra.mxu0 0.0
    %2068 = vmatprep.subr.mxu0 0.0
    %2069 = vmatpush1.msra.mxu0 0.0
    %2070 = vmatprep.subr.mxu0 0.0
    %2071 = vmatpush1.msra.mxu0 0.0
    %2072 = vmatprep.subr.mxu0 0.0
    %2073 = vmatpush1.msra.mxu0 0.0
    %2074 = vmatprep.subr.mxu0 0.0
    %2075 = vmatpush1.msra.mxu0 0.0
    %2076 = vmatprep.subr.mxu0 0.0
    %2077 = vmatpush1.msra.mxu0 0.0
    %2078 = vmatprep.subr.mxu0 0.0
    %2079 = vmatpush1.msra.mxu0 0.0
    %2080 = vmatprep.subr.mxu0 0.0
    %2081 = vmatpush1.msra.mxu0 %v44
    %2082 = vmatprep.subr.mxu0 0.0
    %2083 = vmatpush1.msra.mxu0 %v43
    %2084 = vmatprep.subr.mxu0 0.0
    %2085 = vmatpush1.msra.mxu0 %v42
    %2086 = vmatprep.subr.mxu0 0.0
    %2087 = vmatpush1.msra.mxu0 %v41
    %2088 = vmatprep.subr.mxu0 0.0
    %2089 = vmatpush2.msra.mxu0 0.0
    %2090 = vmatprep.subr.mxu0 0.0
    %2091 = vmatpush2.msra.mxu0 0.0
    %2092 = vmatprep.subr.mxu0 0.0
    %2093 = vmatpush2.msra.mxu0 0.0
    %2094 = vmatprep.subr.mxu0 0.0
    %2095 = vmatpush2.msra.mxu0 0.0
    %2096 = vmatprep.subr.mxu0 0.0
    %2097 = vmatpush2.msra.mxu0 0.0
    %2098 = vmatprep.subr.mxu0 0.0
    %2099 = vmatpush2.msra.mxu0 0.0
    %2100 = vmatprep.subr.mxu0 0.0
    %2101 = vmatpush2.msra.mxu0 0.0
    %2102 = vmatprep.subr.mxu0 0.0
    %2103 = vmatpush2.msra.mxu0 0.0
    %2104 = vmatprep.subr.mxu0 0.0
    %2105 = vmatpush2.msra.mxu0 0.0
    %2106 = vmatprep.subr.mxu0 0.0
    %2107 = vmatpush2.msra.mxu0 0.0
    %2108 = vmatprep.subr.mxu0 0.0
    %2109 = vmatpush2.msra.mxu0 0.0
    %2110 = vmatprep.subr.mxu0 0.0
    %2111 = vmatpush2.msra.mxu0 0.0
    %2112 = vmatprep.subr.mxu0 0.0
    %2113 = vmatpush2.msra.mxu0 0.0
    %2114 = vmatprep.subr.mxu0 0.0
    %2115 = vmatpush2.msra.mxu0 0.0
    %2116 = vmatprep.subr.mxu0 0.0
    %2117 = vmatpush2.msra.mxu0 0.0
    %2118 = vmatprep.subr.mxu0 0.0
    %2119 = vmatpush2.msra.mxu0 0.0
    %2120 = vmatprep.mubr.f32.mxu0 0.0
    %2121 = vmatmul.mubr.f32.gmra.mxu0 %v2054
    %v2122 = vpop.f32.mrf.mxu0
    %v2123 = vadd.f32 0.0, %v2122
    %v2124 = vpop.f32.mrf.mxu0
    %2125 = vdwg.mxu0
    %2127 = vrot.lane.b32.xlu0 %v2050, 32
    %v2128 = vpop.permute.xlu0 %2127
    %v2129 = vsel %vm47, %v2128, 0
    %2131 = vmatprep.subr.mxu0 0.0
    %2132 = vmatpush1.msra.mxu0 0.0
    %2133 = vmatprep.subr.mxu0 0.0
    %2134 = vmatpush1.msra.mxu0 0.0
    %2135 = vmatprep.subr.mxu0 0.0
    %2136 = vmatpush1.msra.mxu0 0.0
    %2137 = vmatprep.subr.mxu0 0.0
    %2138 = vmatpush1.msra.mxu0 0.0
    %2139 = vmatprep.subr.mxu0 0.0
    %2140 = vmatpush1.msra.mxu0 0.0
    %2141 = vmatprep.subr.mxu0 0.0
    %2142 = vmatpush1.msra.mxu0 0.0
    %2143 = vmatprep.subr.mxu0 0.0
    %2144 = vmatpush1.msra.mxu0 0.0
    %2145 = vmatprep.subr.mxu0 0.0
    %2146 = vmatpush1.msra.mxu0 0.0
    %2147 = vmatprep.subr.mxu0 0.0
    %2148 = vmatpush1.msra.mxu0 0.0
    %2149 = vmatprep.subr.mxu0 0.0
    %2150 = vmatpush1.msra.mxu0 0.0
    %2151 = vmatprep.subr.mxu0 0.0
    %2152 = vmatpush1.msra.mxu0 0.0
    %2153 = vmatprep.subr.mxu0 0.0
    %2154 = vmatpush1.msra.mxu0 0.0
    %2155 = vmatprep.subr.mxu0 0.0
    %2156 = vmatpush1.msra.mxu0 %v40
    %2157 = vmatprep.subr.mxu0 0.0
    %2158 = vmatpush1.msra.mxu0 %v39
    %2159 = vmatprep.subr.mxu0 0.0
    %2160 = vmatpush1.msra.mxu0 %v38
    %2161 = vmatprep.subr.mxu0 0.0
    %2162 = vmatpush1.msra.mxu0 %v37
    %2163 = vmatprep.subr.mxu0 0.0
    %2164 = vmatpush2.msra.mxu0 0.0
    %2165 = vmatprep.subr.mxu0 0.0
    %2166 = vmatpush2.msra.mxu0 0.0
    %2167 = vmatprep.subr.mxu0 0.0
    %2168 = vmatpush2.msra.mxu0 0.0
    %2169 = vmatprep.subr.mxu0 0.0
    %2170 = vmatpush2.msra.mxu0 0.0
    %2171 = vmatprep.subr.mxu0 0.0
    %2172 = vmatpush2.msra.mxu0 0.0
    %2173 = vmatprep.subr.mxu0 0.0
    %2174 = vmatpush2.msra.mxu0 0.0
    %2175 = vmatprep.subr.mxu0 0.0
    %2176 = vmatpush2.msra.mxu0 0.0
    %2177 = vmatprep.subr.mxu0 0.0
    %2178 = vmatpush2.msra.mxu0 0.0
    %2179 = vmatprep.subr.mxu0 0.0
    %2180 = vmatpush2.msra.mxu0 0.0
    %2181 = vmatprep.subr.mxu0 0.0
    %2182 = vmatpush2.msra.mxu0 0.0
    %2183 = vmatprep.subr.mxu0 0.0
    %2184 = vmatpush2.msra.mxu0 0.0
    %2185 = vmatprep.subr.mxu0 0.0
    %2186 = vmatpush2.msra.mxu0 0.0
    %2187 = vmatprep.subr.mxu0 0.0
    %2188 = vmatpush2.msra.mxu0 0.0
    %2189 = vmatprep.subr.mxu0 0.0
    %2190 = vmatpush2.msra.mxu0 0.0
    %2191 = vmatprep.subr.mxu0 0.0
    %2192 = vmatpush2.msra.mxu0 0.0
    %2193 = vmatprep.subr.mxu0 0.0
    %2194 = vmatpush2.msra.mxu0 0.0
    %2195 = vmatprep.mubr.f32.mxu0 0.0
    %2196 = vmatmul.mubr.f32.gmra.mxu0 %v2129
    %v2197 = vpop.f32.mrf.mxu0
    %v2198 = vadd.f32 %v2123, %v2197
    %v2199 = vpop.f32.mrf.mxu0
    %2200 = vdwg.mxu0
    %v2201 = vadd.f32 %v2198, %v295
    %v2202 = vxor.u32 %v2201, 2147483648
    %v2203 = vmul.f32 %v2202, 1.442695
    %v2204 = vpow.pop %v2203
    %v2205 = vadd.f32 %v2204, 1.0
    %v2206 = vrcp.pop %v2205
    %v2207 = vmul.f32 1.0, %v2206
    %v2208 = vtanh.pop %v2201
    %v2209 = vmul.f32 %v2207, %v1947
    %2211 = vrot.lane.b32.xlu0 %v2208, 64
    %v2212 = vpop.permute.xlu0 %2211
    %v2214 = vmul.f32 %v2207, %v2212
    %2216 = vrot.lane.b32.xlu0 %v2214, 32
    %v2217 = vpop.permute.xlu0 %2216
    %v2219 = vadd.f32 %v2209, %v2217
    %v2220 = vtanh.pop %v2219
    %2222 = vrot.lane.b32.xlu0 %v2220, 64
    %v2223 = vpop.permute.xlu0 %2222
    %v2225 = vmul.f32 %v2207, %v2223
    %v2226 = vld [vmem:[%s5] sm:$0xf]
    %v2227 = vld [vmem:[%s5 + $0x4] sm:$0xf]
    %vm2228 = vcmask 519168
    %v2229 = vsel %vm2228, %v2226, 0.0
    %v2230 = vrot.slane %v2229, 4
    %v2231 = vadd.f32 %v2229, %v2230
    %v2232 = vrot.slane %v2231, 2
    %v2233 = vadd.f32 %v2231, %v2232
    %v2234 = vrot.slane %v2233, 1
    %v2235 = vadd.f32 %v2233, %v2234
    %v2236 = vsel %vm2228, %v2227, 0.0
    %v2237 = vrot.slane %v2236, 4
    %v2238 = vadd.f32 %v2236, %v2237
    %v2239 = vrot.slane %v2238, 2
    %v2240 = vadd.f32 %v2238, %v2239
    %v2241 = vrot.slane %v2240, 1
    %v2242 = vadd.f32 %v2240, %v2241
    %v2243 = vrcp.pop 4.0
    %v2244 = vmul.f32 %v2235, %v2243
    %v2245 = vmul.f32 %v2242, %v2243
    %v2246 = vld [vmem:[%s6] sm:$0xff]
    %v2247 = vld [vmem:[%s6 + $0x8] sm:$0xff]
    %v2248 = vld [vmem:[%s6 + $0x10] sm:$0xff]
    %v2249 = vld [vmem:[%s6 + $0x18] sm:$0xff]
    %v2250 = vld [vmem:[%s6 + $0x20] sm:$0xff]
    %v2251 = vld [vmem:[%s6 + $0x28] sm:$0xff]
    %v2252 = vld [vmem:[%s6 + $0x30] sm:$0xff]
    %v2253 = vld [vmem:[%s6 + $0x38] sm:$0xff]
    %v2254 = vld [vmem:[%s7] sm:$0xff]
    %v2255 = vld [vmem:[%s7 + $0x8] sm:$0xff]
    %v2256 = vld [vmem:[%s7 + $0x10] sm:$0xff]
    %v2257 = vld [vmem:[%s7 + $0x18] sm:$0xff]
    %2259 = vrot.lane.b32.xlu0 %v2225, 32
    %v2260 = vpop.permute.xlu0 %2259
    %v2261 = vsel %vm47, %v2260, 0
    %2263 = vmatprep.subr.mxu0 0.0
    %2264 = vmatpush1.msra.mxu0 0.0
    %2265 = vmatprep.subr.mxu0 0.0
    %2266 = vmatpush1.msra.mxu0 0.0
    %2267 = vmatprep.subr.mxu0 0.0
    %2268 = vmatpush1.msra.mxu0 0.0
    %2269 = vmatprep.subr.mxu0 0.0
    %2270 = vmatpush1.msra.mxu0 0.0
    %2271 = vmatprep.subr.mxu0 0.0
    %2272 = vmatpush1.msra.mxu0 0.0
    %2273 = vmatprep.subr.mxu0 0.0
    %2274 = vmatpush1.msra.mxu0 0.0
    %2275 = vmatprep.subr.mxu0 0.0
    %2276 = vmatpush1.msra.mxu0 0.0
    %2277 = vmatprep.subr.mxu0 0.0
    %2278 = vmatpush1.msra.mxu0 0.0
    %2279 = vmatprep.subr.mxu0 0.0
    %2280 = vmatpush1.msra.mxu0 0.0
    %2281 = vmatprep.subr.mxu0 0.0
    %2282 = vmatpush1.msra.mxu0 0.0
    %2283 = vmatprep.subr.mxu0 0.0
    %2284 = vmatpush1.msra.mxu0 0.0
    %2285 = vmatprep.subr.mxu0 0.0
    %2286 = vmatpush1.msra.mxu0 0.0
    %2287 = vmatprep.subr.mxu0 0.0
    %2288 = vmatpush1.msra.mxu0 %v2257
    %2289 = vmatprep.subr.mxu0 0.0
    %2290 = vmatpush1.msra.mxu0 %v2256
    %2291 = vmatprep.subr.mxu0 0.0
    %2292 = vmatpush1.msra.mxu0 %v2255
    %2293 = vmatprep.subr.mxu0 0.0
    %2294 = vmatpush1.msra.mxu0 %v2254
    %2295 = vmatprep.subr.mxu0 0.0
    %2296 = vmatpush2.msra.mxu0 0.0
    %2297 = vmatprep.subr.mxu0 0.0
    %2298 = vmatpush2.msra.mxu0 0.0
    %2299 = vmatprep.subr.mxu0 0.0
    %2300 = vmatpush2.msra.mxu0 0.0
    %2301 = vmatprep.subr.mxu0 0.0
    %2302 = vmatpush2.msra.mxu0 0.0
    %2303 = vmatprep.subr.mxu0 0.0
    %2304 = vmatpush2.msra.mxu0 0.0
    %2305 = vmatprep.subr.mxu0 0.0
    %2306 = vmatpush2.msra.mxu0 0.0
    %2307 = vmatprep.subr.mxu0 0.0
    %2308 = vmatpush2.msra.mxu0 0.0
    %2309 = vmatprep.subr.mxu0 0.0
    %2310 = vmatpush2.msra.mxu0 0.0
    %2311 = vmatprep.subr.mxu0 0.0
    %2312 = vmatpush2.msra.mxu0 0.0
    %2313 = vmatprep.subr.mxu0 0.0
    %2314 = vmatpush2.msra.mxu0 0.0
    %2315 = vmatprep.subr.mxu0 0.0
    %2316 = vmatpush2.msra.mxu0 0.0
    %2317 = vmatprep.subr.mxu0 0.0
    %2318 = vmatpush2.msra.mxu0 0.0
    %2319 = vmatprep.subr.mxu0 0.0
    %2320 = vmatpush2.msra.mxu0 0.0
    %2321 = vmatprep.subr.mxu0 0.0
    %2322 = vmatpush2.msra.mxu0 0.0
    %2323 = vmatprep.subr.mxu0 0.0
    %2324 = vmatpush2.msra.mxu0 0.0
    %2325 = vmatprep.subr.mxu0 0.0
    %2326 = vmatpush2.msra.mxu0 0.0
    %2327 = vmatprep.mubr.f32.mxu0 0.0
    %2328 = vmatmul.mubr.f32.gmra.mxu0 %v2261
    %v2329 = vpop.f32.mrf.mxu0
    %v2330 = vadd.f32 0.0, %v2329
    %v2331 = vpop.f32.mrf.mxu0
    %2332 = vdwg.mxu0
    %vm2335 = vcmask 1041409
    %v2336 = vsel %vm2335, %v2245, %v2244
    %vm2337 = vcmask 523264
    %v2338 = vsel %vm2337, %v2336, 0
    %2340 = vmatprep.subr.mxu0 0.0
    %2341 = vmatpush1.msra.mxu0 0.0
    %2342 = vmatprep.subr.mxu0 0.0
    %2343 = vmatpush1.msra.mxu0 0.0
    %2344 = vmatprep.subr.mxu0 0.0
    %2345 = vmatpush1.msra.mxu0 0.0
    %2346 = vmatprep.subr.mxu0 0.0
    %2347 = vmatpush1.msra.mxu0 0.0
    %2348 = vmatprep.subr.mxu0 0.0
    %2349 = vmatpush1.msra.mxu0 0.0
    %2350 = vmatprep.subr.mxu0 0.0
    %2351 = vmatpush1.msra.mxu0 0.0
    %2352 = vmatprep.subr.mxu0 0.0
    %2353 = vmatpush1.msra.mxu0 0.0
    %2354 = vmatprep.subr.mxu0 0.0
    %2355 = vmatpush1.msra.mxu0 0.0
    %2356 = vmatprep.subr.mxu0 0.0
    %2357 = vmatpush1.msra.mxu0 %v2253
    %2358 = vmatprep.subr.mxu0 0.0
    %2359 = vmatpush1.msra.mxu0 %v2252
    %2360 = vmatprep.subr.mxu0 0.0
    %2361 = vmatpush1.msra.mxu0 %v2251
    %2362 = vmatprep.subr.mxu0 0.0
    %2363 = vmatpush1.msra.mxu0 %v2250
    %2364 = vmatprep.subr.mxu0 0.0
    %2365 = vmatpush1.msra.mxu0 %v2249
    %2366 = vmatprep.subr.mxu0 0.0
    %2367 = vmatpush1.msra.mxu0 %v2248
    %2368 = vmatprep.subr.mxu0 0.0
    %2369 = vmatpush1.msra.mxu0 %v2247
    %2370 = vmatprep.subr.mxu0 0.0
    %2371 = vmatpush1.msra.mxu0 %v2246
    %2372 = vmatprep.subr.mxu0 0.0
    %2373 = vmatpush2.msra.mxu0 0.0
    %2374 = vmatprep.subr.mxu0 0.0
    %2375 = vmatpush2.msra.mxu0 0.0
    %2376 = vmatprep.subr.mxu0 0.0
    %2377 = vmatpush2.msra.mxu0 0.0
    %2378 = vmatprep.subr.mxu0 0.0
    %2379 = vmatpush2.msra.mxu0 0.0
    %2380 = vmatprep.subr.mxu0 0.0
    %2381 = vmatpush2.msra.mxu0 0.0
    %2382 = vmatprep.subr.mxu0 0.0
    %2383 = vmatpush2.msra.mxu0 0.0
    %2384 = vmatprep.subr.mxu0 0.0
    %2385 = vmatpush2.msra.mxu0 0.0
    %2386 = vmatprep.subr.mxu0 0.0
    %2387 = vmatpush2.msra.mxu0 0.0
    %2388 = vmatprep.subr.mxu0 0.0
    %2389 = vmatpush2.msra.mxu0 0.0
    %2390 = vmatprep.subr.mxu0 0.0
    %2391 = vmatpush2.msra.mxu0 0.0
    %2392 = vmatprep.subr.mxu0 0.0
    %2393 = vmatpush2.msra.mxu0 0.0
    %2394 = vmatprep.subr.mxu0 0.0
    %2395 = vmatpush2.msra.mxu0 0.0
    %2396 = vmatprep.subr.mxu0 0.0
    %2397 = vmatpush2.msra.mxu0 0.0
    %2398 = vmatprep.subr.mxu0 0.0
    %2399 = vmatpush2.msra.mxu0 0.0
    %2400 = vmatprep.subr.mxu0 0.0
    %2401 = vmatpush2.msra.mxu0 0.0
    %2402 = vmatprep.subr.mxu0 0.0
    %2403 = vmatpush2.msra.mxu0 0.0
    %2404 = vmatprep.mubr.f32.mxu0 0.0
    %2405 = vmatmul.mubr.f32.gmra.mxu0 %v2338
    %v2406 = vpop.f32.mrf.mxu0
    %v2407 = vadd.f32 %v2330, %v2406
    %v2408 = vpop.f32.mrf.mxu0
    %2409 = vdwg.mxu0
    %v2410 = vld [vmem:[%s8] sm:$0x1]
    %v2412 = vlaneseq
    %v2413 = vshrl.u32 %v2412, 7
    %v2414 = vsub.s32 0, %v2413
    %v2415 = vrot.slane %v2410, %v2414
    %v2417 = vadd.f32 %v2407, %v2415
    %v2418 = vmax.f32 %v2417, 0.0
    %vm2419 = vcmask 50176
    %2420 = vst.msk [vmem:[#allocation2] sm:$0x3] %vm2419, %v2418
    // Predicated region
    $region38: #{cnn_lstm_forward.7} parent=1 // pred_check
      _
    $region39: #{cnn_lstm_forward.7} parent=1 // pred_check_branch
      %2422 = sbr.rel (0) target = $region41
    $region40: #{cnn_lstm_forward.7} parent=1 // pred_region
      %s2424 = ssub.s32 32, 32
      %2425 = vsyncadd [#allocation3], %s2424
      %s2427 = sshll.u32 [#allocation2], 4
      %s2428 = int_to_ptr.vmem [resolvable:$true] %s2427
      %2430 = dma.vmem_to_hbm [thread:$0]  %s2428, 32, %s9, [#allocation3]
    $region41: #{cnn_lstm_forward.7} parent=1 // pred_fallthru
      _
    // Predicated region
    $region42: #{cnn_lstm_forward.7} parent=1 // pred_check
      _
    $region43: #{cnn_lstm_forward.7} parent=1 // pred_check_branch
      %2432 = sbr.rel (0) target = $region45
    $region44: #{cnn_lstm_forward.7} parent=1 // pred_region
      %2433 = dma.done [#allocation3], 32
    $region45: #{cnn_lstm_forward.7} parent=1 // pred_fallthru
      _
    %2434 = vsyncpa [#allocation3], 1

</llo_original>
